<compile_context>
chip_gen: v7x
topology: tpu7x:2x2x1
jax: 0.10.0
libtpu: 0.0.40
codegen_flags: <defaults>
</compile_context>

<pallas_src>
import functools
import math

import jax
import jax.numpy as jnp
from jax import lax
from jax.experimental import pallas as pl
from jax.experimental.pallas import tpu as pltpu


def _cgaan_kernel(num_heads, out_dim, row_tile, gate_blk,
                  adj_ref, adjt_ref, zbf_ref, zdst_ref, gproj_ref,
                  el_ref, er_ref, fl_ref, frt_ref, gm_ref,
                  out_ref, gbias_sc):
    """One grid step == one tile of `row_tile` destination rows (all heads)."""
    H, D = num_heads, out_dim
    HD = H * D
    n_src = adj_ref.shape[1]                                    # padded node count (static)

    # ---- adjacency-derived terms: one int8 HBM read per orientation, cast once -----------
    adj_f = adj_ref[...].astype(jnp.float32)                    # (TR, N)  {0,1}
    bias = (adj_f - 1.0) * 1e9                                  # 0 on edge, -1e9 off edge
    deg = jnp.sum(adj_f, axis=-1, keepdims=True)                # (TR, 1) in-degree
    inv_deg = 1.0 / jnp.maximum(deg, 1.0)

    # Transposed gate bias, written once per tile so the gate loop below only does aligned
    # 8-row f32 ref slices (avoids dynamic sub-packing slices of the int8 ref).
    gbias_sc[...] = (adjt_ref[...].astype(jnp.float32) - 1.0) * 1e30    # (N, TR) 0 / -1e30

    el = el_ref[...]                                            # (H, N)  att_l . z[src]
    er = er_ref[...]                                            # (TR, H) att_r . z[dst]
    fl = fl_ref[...]                                            # (TR, H) gate_l . feat[dst]
    frt = frt_ref[...]                                          # (H, N)  gate_r . feat[src]

    # ---- gate: masked running max of Wgm(feat)[src] over incoming edges ------------------
    # Hoisted out of the per-head loop (full H*D width per step); small src blocks keep the
    # (gate_blk, TR, HD) temp modest.
    def gate_step(s, acc):
        base = pl.multiple_of(s * gate_blk, gate_blk)
        g_blk = gproj_ref[pl.ds(base, gate_blk), :]             # (GB, HD)
        b_blk = gbias_sc[pl.ds(base, gate_blk), :]              # (GB, TR)  0 / -1e30
        cand = jnp.max(g_blk[:, None, :] + b_blk[:, :, None], axis=0)    # (TR, HD)
        return jnp.maximum(acc, cand)

    max_feat = lax.fori_loop(0, n_src // gate_blk, gate_step,
                             jnp.full((row_tile, HD), -1e30, jnp.float32))

    weighted = max_feat * gm_ref[...]                           # (TR, HD) * (1, HD)

    gfc_cols = []
    for h in range(H):                                          # H is small & static
        max_dot = jnp.sum(weighted[:, h * D:(h + 1) * D], axis=-1, keepdims=True)
        mean_dot = jnp.sum(adj_f * frt[h:h + 1, :], axis=-1, keepdims=True) * inv_deg
        gfc_cols.append(fl[:, h:h + 1] + max_dot + mean_dot)    # (TR, 1)
    gval = jax.nn.sigmoid(jnp.concatenate(gfc_cols, axis=-1))   # (TR, H)

    # ---- attention softmax + aggregation, per head ----------------------------------------
    outs = []
    for h in range(H):
        e = er[:, h:h + 1] + el[h:h + 1, :]                     # (TR, N)
        e = jnp.where(e >= 0, e, 0.01 * e) + bias               # leaky_relu then additive mask
        m = jnp.max(e, axis=-1, keepdims=True)
        p = jnp.exp(e - m)                                      # non-edges underflow to 0
        denom = jnp.sum(p, axis=-1, keepdims=True)
        alpha = (p / denom).astype(jnp.bfloat16)                # (TR, N)
        # TODO(synk): F.dropout(alpha, 0.1) omitted (stochastic).
        h_agg = jnp.dot(alpha, zbf_ref[h],                      # (TR, N) @ (N, D) bf16 MXU
                        preferred_element_type=jnp.float32)
        outs.append(gval[:, h:h + 1] * h_agg)                   # (TR, D)

    # res = proj_z + gval * h, stored directly in 'cat' layout for this dst tile.
    out_ref[...] = (zdst_ref[...] + jnp.concatenate(outs, axis=-1)).astype(out_ref.dtype)


def multi_head_cgaan_forward(feat, adj, params, merge="cat"):
    """params: dict of stacked per-head weights (leading dim = num_heads)."""
    N, Din = feat.shape
    H, _, Dout = params["wa"].shape
    HD = H * Dout

    row_tile = 128
    gate_blk = 8
    n_pad = (-N) % row_tile
    Np = N + n_pad
    feat_p = jnp.pad(feat, ((0, n_pad), (0, 0))) if n_pad else feat
    adj_p = jnp.pad(adj, ((0, n_pad), (0, n_pad))) if n_pad else adj

    # ---- head-fused weight layouts ('cat' column order: head-major) -----------------------
    wa_all = jnp.transpose(params["wa"], (1, 0, 2)).reshape(Din, HD)     # (Din, H*Dout)
    wgm_all = jnp.transpose(params["wgm"], (1, 0, 2)).reshape(Din, HD)
    att_l = params["att_l"][:, :, 0]                                     # (H, Dout)
    att_r = params["att_r"][:, :, 0]
    gate_l = params["gate_l"][:, :, 0]                                   # (H, Din)
    gate_m = params["gate_m"][:, :, 0]                                   # (H, Dout)
    gate_r = params["gate_r"][:, :, 0]

    # ---- projections + tile-invariant dots, computed ONCE by XLA --------------------------
    z = feat_p @ wa_all                                                  # (Np, HD) f32
    gproj = feat_p @ wgm_all                                             # (Np, HD) f32
    z3 = z.reshape(Np, H, Dout)
    el = jnp.einsum("nhd,hd->hn", z3, att_l)                             # (H, Np)  src logits
    er = jnp.einsum("nhd,hd->nh", z3, att_r)                             # (Np, H)  dst logits
    fl = feat_p @ gate_l.T                                               # (Np, H)
    frt = gate_r @ feat_p.T                                              # (H, Np)
    gm_cat = gate_m.reshape(1, HD)                                       # (1, HD)
    z_bf = jnp.transpose(z3, (1, 0, 2)).astype(jnp.bfloat16)             # (H, Np, Dout)

    adj_i8 = adj_p.astype(jnp.int8)         # {0,1} exact; minimal HBM adjacency stream
    adjt_i8 = jnp.transpose(adj_i8)         # (src, dst) orientation for the gate loop

    # Explicit VMEM budget with headroom; works on v5e/v6e (128 MiB) and v7x (64 MiB).
    try:
        cap = pltpu.get_tpu_info().vmem_capacity_bytes
        vmem_limit = min(int(cap * 3 // 4), 100 * 1024 * 1024)
    except Exception:
        vmem_limit = None

    kernel = functools.partial(_cgaan_kernel, H, Dout, row_tile, gate_blk)

    out_p = pl.pallas_call(
        kernel,
        out_shape=jax.ShapeDtypeStruct((Np, HD), jnp.float32),
        grid=(Np // row_tile,),
        in_specs=[
            pl.BlockSpec((row_tile, Np), lambda i: (i, 0)),      # adj rows (dst tile), int8
            pl.BlockSpec((Np, row_tile), lambda i: (0, i)),      # adj^T cols (gate loop), int8
            pl.BlockSpec((H, Np, Dout), lambda i: (0, 0, 0)),    # z bf16, resident (all heads)
            pl.BlockSpec((row_tile, HD), lambda i: (i, 0)),      # z f32 dst tile (residual)
            pl.BlockSpec((Np, HD), lambda i: (0, 0)),            # Wgm(feat), resident
            pl.BlockSpec((H, Np), lambda i: (0, 0)),             # att_l . z per src
            pl.BlockSpec((row_tile, H), lambda i: (i, 0)),       # att_r . z per dst tile
            pl.BlockSpec((row_tile, H), lambda i: (i, 0)),       # gate_l . feat per dst tile
            pl.BlockSpec((H, Np), lambda i: (0, 0)),             # gate_r . feat per src
            pl.BlockSpec((1, HD), lambda i: (0, 0)),             # gate_m (cat layout)
        ],
        out_specs=pl.BlockSpec((row_tile, HD), lambda i: (i, 0)),
        scratch_shapes=[pltpu.VMEM((Np, row_tile), jnp.float32)],  # transposed gate bias
        compiler_params=pltpu.CompilerParams(
            dimension_semantics=("parallel",),     # no cross-step deps -> both TCs on v7x
            vmem_limit_bytes=vmem_limit),
    )(adj_i8, adjt_i8, z_bf, z, gproj, el, er, fl, frt, gm_cat)

    out = out_p[:N]
    if merge == "mean":
        return jnp.mean(out.reshape(N, H, Dout), axis=1)
    return out                                                   # 'cat' (and default)


# ---------------- pure-JAX f32 reference (same math, per-head) for a correctness check ----
def _reference_forward(feat, adj, params, merge="cat"):
    H = params["wa"].shape[0]
    N = feat.shape[0]
    neg = -1e30
    mask = adj > 0
    deg = jnp.sum(adj, axis=1, keepdims=True)
    outs = []
    for h_idx in range(H):
        wa = params["wa"][h_idx]
        al = params["att_l"][h_idx]
        ar = params["att_r"][h_idx]
        wgm = params["wgm"][h_idx]
        gl = params["gate_l"][h_idx]
        gm = params["gate_m"][h_idx]
        gr = params["gate_r"][h_idx]
        z = feat @ wa
        e = (z @ ar) + (z @ al).T
        e = jnp.where(e >= 0, e, 0.01 * e)
        e_m = jnp.where(mask, e, neg)
        p = jnp.where(mask, jnp.exp(e_m - jnp.max(e_m, axis=1, keepdims=True)), 0.0)
        alpha = p / jnp.sum(p, axis=1, keepdims=True)
        h = alpha @ z
        gproj = feat @ wgm
        max_feat = jnp.max(jnp.where(mask[:, :, None], gproj[None, :, :], neg), axis=1)
        mean_feat = (adj @ feat) / deg
        gval = jax.nn.sigmoid(feat @ gl + max_feat @ gm + mean_feat @ gr)
        outs.append(z + gval * h)
    head_outs = jnp.stack(outs)
    if merge == "mean":
        return jnp.mean(head_outs, axis=0)
    return jnp.transpose(head_outs, (1, 0, 2)).reshape(N, -1)


# ---------------- deterministic parameter init (xavier_normal, PyTorch-style gains) -------
def _xavier_normal(key, fan_out, fan_in, gain):
    std = gain * math.sqrt(2.0 / (fan_in + fan_out))
    # PyTorch Linear weight is (out, in); kernel consumes (in, out).
    w = std * jax.random.normal(key, (fan_out, fan_in), jnp.float32)
    return jnp.transpose(w)


def init_params(key, num_heads, in_dim, out_dim):
    gain_lrelu = math.sqrt(2.0 / (1.0 + 0.01 ** 2))   # calculate_gain('leaky_relu')
    gain_sigm = 1.0                                   # calculate_gain('sigmoid')
    keys = jax.random.split(key, num_heads * 7).reshape(num_heads, 7, 2)
    wa, al, ar, wgm, gl, gm, gr = [], [], [], [], [], [], []
    for h in range(num_heads):
        k = keys[h]
        wa.append(_xavier_normal(k[0], out_dim, in_dim, gain_lrelu))
        al.append(_xavier_normal(k[1], 1, out_dim, gain_lrelu))
        ar.append(_xavier_normal(k[2], 1, out_dim, gain_lrelu))
        gl.append(_xavier_normal(k[3], 1, in_dim, gain_sigm))
        gm.append(_xavier_normal(k[4], 1, out_dim, gain_sigm))
        gr.append(_xavier_normal(k[5], 1, in_dim, gain_sigm))
        wgm.append(_xavier_normal(k[6], out_dim, in_dim, gain_sigm))
    return {
        "wa": jnp.stack(wa),        # (H, Din, Dout)
        "att_l": jnp.stack(al),     # (H, Dout, 1)
        "att_r": jnp.stack(ar),     # (H, Dout, 1)
        "wgm": jnp.stack(wgm),      # (H, Din, Dout)
        "gate_l": jnp.stack(gl),    # (H, Din, 1)
        "gate_m": jnp.stack(gm),    # (H, Dout, 1)
        "gate_r": jnp.stack(gr),    # (H, Din, 1)
    }


if __name__ == "__main__":
    # Small but non-trivial: 2 dst-row tiles of 128 and 32 gate src blocks of 8.
    N, IN_DIM, OUT_DIM, NUM_HEADS = 256, 16, 32, 2
    MERGE = "cat"

    root = jax.random.PRNGKey(0)
    k_feat, k_adj, k_params = jax.random.split(root, 3)

    feat = jax.random.normal(k_feat, (N, IN_DIM), jnp.float32)
    # Sparse-ish adjacency with self-loops so every node has >= 1 incoming edge
    # (guards the softmax denominator / mean degree, matching DGL-graph assumptions).
    adj = (jax.random.uniform(k_adj, (N, N)) < 0.1).astype(jnp.float32)
    adj = jnp.maximum(adj, jnp.eye(N, dtype=jnp.float32))

    params = init_params(k_params, NUM_HEADS, IN_DIM, OUT_DIM)

    out = multi_head_cgaan_forward(feat, adj, params, merge=MERGE)
    out = jax.block_until_ready(out)

    ref = _reference_forward(feat, adj, params, merge=MERGE)
    assert out.shape == (N, NUM_HEADS * OUT_DIM), out.shape
    # bf16 alpha/z on the aggregation MXU matmul introduces ~1e-3..1e-2 abs error vs f32.
    assert jnp.allclose(out, ref, atol=3e-2, rtol=2e-2), float(jnp.max(jnp.abs(out - ref)))

    print("KERNEL_OK")
</pallas_src>

<mosaic_0001>
module attributes {stable_mosaic.version = 11 : i64} {
  func.func @_cgaan_kernel(%arg0: i32, %arg1: memref<128x256xi8, #tpu.memory_space<vmem>>, %arg2: memref<256x128xi8, #tpu.memory_space<vmem>>, %arg3: memref<2x256x32xbf16, #tpu.memory_space<vmem>>, %arg4: memref<128x64xf32, #tpu.memory_space<vmem>>, %arg5: memref<256x64xf32, #tpu.memory_space<vmem>>, %arg6: memref<2x256xf32, #tpu.memory_space<vmem>>, %arg7: memref<128x2xf32, #tpu.memory_space<vmem>>, %arg8: memref<128x2xf32, #tpu.memory_space<vmem>>, %arg9: memref<2x256xf32, #tpu.memory_space<vmem>>, %arg10: memref<1x64xf32, #tpu.memory_space<vmem>>, %arg11: memref<128x64xf32, #tpu.memory_space<vmem>>, %arg12: memref<256x128xf32, #tpu.memory_space<vmem>>) attributes {dimension_semantics = [#tpu.dimension_semantics<parallel>], iteration_bounds = array<i64: 2>, scalar_prefetch = 0 : i64, scratch_operands = 1 : i64, tpu.core_type = #tpu.core_type<tc>, window_params = [{transform_indices = @transform_0, window_bounds = array<i64: 128, 256>}, {transform_indices = @transform_1, window_bounds = array<i64: 256, 128>}, {pipeline_mode = #tpu.pipeline_mode<synchronous>, transform_indices = @transform_2, window_bounds = array<i64: 2, 256, 32>}, {transform_indices = @transform_3, window_bounds = array<i64: 128, 64>}, {pipeline_mode = #tpu.pipeline_mode<synchronous>, transform_indices = @transform_4, window_bounds = array<i64: 256, 64>}, {pipeline_mode = #tpu.pipeline_mode<synchronous>, transform_indices = @transform_5, window_bounds = array<i64: 2, 256>}, {transform_indices = @transform_6, window_bounds = array<i64: 128, 2>}, {transform_indices = @transform_7, window_bounds = array<i64: 128, 2>}, {pipeline_mode = #tpu.pipeline_mode<synchronous>, transform_indices = @transform_8, window_bounds = array<i64: 2, 256>}, {pipeline_mode = #tpu.pipeline_mode<synchronous>, transform_indices = @transform_9, window_bounds = array<i64: 1, 64>}, {transform_indices = @transform_10, window_bounds = array<i64: 128, 64>}]} {
    %c0 = arith.constant 0 : index
    %c0_0 = arith.constant 0 : index
    %0 = vector.load %arg1[%c0, %c0_0] : memref<128x256xi8, #tpu.memory_space<vmem>>, vector<128x256xi8>
    %1 = arith.sitofp %0 : vector<128x256xi8> to vector<128x256xf32>
    %cst = arith.constant 1.000000e+00 : f32
    %2 = vector.broadcast %cst : f32 to vector<128x256xf32>
    %3 = arith.subf %1, %2 : vector<128x256xf32>
    %cst_1 = arith.constant 1.000000e+09 : f32
    %4 = vector.broadcast %cst_1 : f32 to vector<128x256xf32>
    %5 = arith.mulf %3, %4 : vector<128x256xf32>
    %cst_2 = arith.constant dense<0.000000e+00> : vector<128xf32>
    %6 = vector.multi_reduction <add>, %1, %cst_2 [1] : vector<128x256xf32> to vector<128xf32>
    %7 = vector.shape_cast %6 : vector<128xf32> to vector<128x1xf32>
    %cst_3 = arith.constant 1.000000e+00 : f32
    %8 = vector.broadcast %cst_3 : f32 to vector<128x1xf32>
    %9 = arith.maximumf %7, %8 : vector<128x1xf32>
    %cst_4 = arith.constant 1.000000e+00 : f32
    %10 = vector.broadcast %cst_4 : f32 to vector<128x1xf32>
    %11 = arith.divf %10, %9 : vector<128x1xf32>
    %c0_5 = arith.constant 0 : index
    %c0_6 = arith.constant 0 : index
    %12 = vector.load %arg2[%c0_5, %c0_6] : memref<256x128xi8, #tpu.memory_space<vmem>>, vector<256x128xi8>
    %13 = arith.sitofp %12 : vector<256x128xi8> to vector<256x128xf32>
    %cst_7 = arith.constant 1.000000e+00 : f32
    %14 = vector.broadcast %cst_7 : f32 to vector<256x128xf32>
    %15 = arith.subf %13, %14 : vector<256x128xf32>
    %cst_8 = arith.constant 1.000000e+30 : f32
    %16 = vector.broadcast %cst_8 : f32 to vector<256x128xf32>
    %17 = arith.mulf %15, %16 : vector<256x128xf32>
    %c0_9 = arith.constant 0 : index
    %c0_10 = arith.constant 0 : index
    %18 = vector.load %arg12[%c0_9, %c0_10] : memref<256x128xf32, #tpu.memory_space<vmem>>, vector<256x128xf32>
    tpu.vector_store %arg12[%c0_9, %c0_10], %17 {strides = array<i32>} : memref<256x128xf32, #tpu.memory_space<vmem>>, vector<256x128xf32>,
    %c0_11 = arith.constant 0 : index
    %c0_12 = arith.constant 0 : index
    %19 = vector.load %arg6[%c0_11, %c0_12] : memref<2x256xf32, #tpu.memory_space<vmem>>, vector<2x256xf32>
    %c0_13 = arith.constant 0 : index
    %c0_14 = arith.constant 0 : index
    %20 = vector.load %arg7[%c0_13, %c0_14] : memref<128x2xf32, #tpu.memory_space<vmem>>, vector<128x2xf32>
    %c0_15 = arith.constant 0 : index
    %c0_16 = arith.constant 0 : index
    %21 = vector.load %arg8[%c0_15, %c0_16] : memref<128x2xf32, #tpu.memory_space<vmem>>, vector<128x2xf32>
    %c0_17 = arith.constant 0 : index
    %c0_18 = arith.constant 0 : index
    %22 = vector.load %arg9[%c0_17, %c0_18] : memref<2x256xf32, #tpu.memory_space<vmem>>, vector<2x256xf32>
    %cst_19 = arith.constant -1.000000e+30 : f32
    %23 = vector.broadcast %cst_19 : f32 to vector<128x64xf32>
    %c0_i32 = arith.constant 0 : i32
    %c32_i32 = arith.constant 32 : i32
    %24 = arith.addi %c0_i32, %c32_i32 : i32
    %c1_i32 = arith.constant 1 : i32
    %25 = scf.for %arg13 = %c0_i32 to %24 step %c1_i32 iter_args(%arg14 = %23) -> (vector<128x64xf32>)  : i32 {
      %c8_i32 = arith.constant 8 : i32
      %117 = arith.muli %arg13, %c8_i32 : i32
      %118 = tpu.assume_multiple %117, 8 : i32
      %119 = arith.index_cast %118 : i32 to index
      %c0_47 = arith.constant 0 : index
      %120 = vector.load %arg5[%119, %c0_47] : memref<256x64xf32, #tpu.memory_space<vmem>>, vector<8x64xf32>
      %121 = arith.index_cast %118 : i32 to index
      %c0_48 = arith.constant 0 : index
      %122 = vector.load %arg12[%121, %c0_48] : memref<256x128xf32, #tpu.memory_space<vmem>>, vector<8x128xf32>
      %123 = vector.shape_cast %120 : vector<8x64xf32> to vector<8x1x64xf32>
      %124 = vector.shape_cast %122 : vector<8x128xf32> to vector<8x128x1xf32>
      %125 = vector.broadcast %123 : vector<8x1x64xf32> to vector<8x128x64xf32>
      %126 = vector.broadcast %124 : vector<8x128x1xf32> to vector<8x128x64xf32>
      %127 = arith.addf %125, %126 : vector<8x128x64xf32>
      %cst_49 = arith.constant dense<0xFF800000> : vector<128x64xf32>
      %128 = vector.multi_reduction <maximumf>, %127, %cst_49 [0] : vector<8x128x64xf32> to vector<128x64xf32>
      %129 = arith.maximumf %arg14, %128 : vector<128x64xf32>
      scf.yield %129 : vector<128x64xf32>
    }
    %c32_i32_20 = arith.constant 32 : i32
    %c0_21 = arith.constant 0 : index
    %c0_22 = arith.constant 0 : index
    %26 = vector.load %arg10[%c0_21, %c0_22] : memref<1x64xf32, #tpu.memory_space<vmem>>, vector<1x64xf32>
    %27 = vector.broadcast %26 : vector<1x64xf32> to vector<128x64xf32>
    %28 = arith.mulf %25, %27 : vector<128x64xf32>
    %29 = vector.extract_strided_slice %28 {offsets = [0, 0], sizes = [128, 32], strides = [1, 1]} : vector<128x64xf32> to vector<128x32xf32>
    %cst_23 = arith.constant dense<0.000000e+00> : vector<128xf32>
    %30 = vector.multi_reduction <add>, %29, %cst_23 [1] : vector<128x32xf32> to vector<128xf32>
    %31 = vector.shape_cast %30 : vector<128xf32> to vector<128x1xf32>
    %32 = vector.extract_strided_slice %22 {offsets = [0, 0], sizes = [1, 256], strides = [1, 1]} : vector<2x256xf32> to vector<1x256xf32>
    %33 = vector.broadcast %32 : vector<1x256xf32> to vector<128x256xf32>
    %34 = arith.mulf %1, %33 : vector<128x256xf32>
    %cst_24 = arith.constant dense<0.000000e+00> : vector<128xf32>
    %35 = vector.multi_reduction <add>, %34, %cst_24 [1] : vector<128x256xf32> to vector<128xf32>
    %36 = vector.shape_cast %35 : vector<128xf32> to vector<128x1xf32>
    %37 = arith.mulf %36, %11 : vector<128x1xf32>
    %38 = vector.extract_strided_slice %21 {offsets = [0, 0], sizes = [128, 1], strides = [1, 1]} : vector<128x2xf32> to vector<128x1xf32>
    %39 = arith.addf %38, %31 : vector<128x1xf32>
    %40 = arith.addf %39, %37 : vector<128x1xf32>
    %41 = vector.extract_strided_slice %28 {offsets = [0, 32], sizes = [128, 32], strides = [1, 1]} : vector<128x64xf32> to vector<128x32xf32>
    %cst_25 = arith.constant dense<0.000000e+00> : vector<128xf32>
    %42 = vector.multi_reduction <add>, %41, %cst_25 [1] : vector<128x32xf32> to vector<128xf32>
    %43 = vector.shape_cast %42 : vector<128xf32> to vector<128x1xf32>
    %44 = vector.extract_strided_slice %22 {offsets = [1, 0], sizes = [1, 256], strides = [1, 1]} : vector<2x256xf32> to vector<1x256xf32>
    %45 = vector.broadcast %44 : vector<1x256xf32> to vector<128x256xf32>
    %46 = arith.mulf %1, %45 : vector<128x256xf32>
    %cst_26 = arith.constant dense<0.000000e+00> : vector<128xf32>
    %47 = vector.multi_reduction <add>, %46, %cst_26 [1] : vector<128x256xf32> to vector<128xf32>
    %48 = vector.shape_cast %47 : vector<128xf32> to vector<128x1xf32>
    %49 = arith.mulf %48, %11 : vector<128x1xf32>
    %50 = vector.extract_strided_slice %21 {offsets = [0, 1], sizes = [128, 1], strides = [1, 1]} : vector<128x2xf32> to vector<128x1xf32>
    %51 = arith.addf %50, %43 : vector<128x1xf32>
    %52 = arith.addf %51, %49 : vector<128x1xf32>
    %53 = tpu.concatenate %40, %52 in 1 : vector<128x1xf32>, vector<128x1xf32> -> vector<128x2xf32>
    %54 = arith.negf %53 : vector<128x2xf32>
    %55 = math.exp %54 : vector<128x2xf32>
    %cst_27 = arith.constant 1.000000e+00 : f32
    %56 = vector.broadcast %cst_27 : f32 to vector<128x2xf32>
    %57 = arith.addf %56, %55 : vector<128x2xf32>
    %58 = arith.divf %56, %57 : vector<128x2xf32>
    %59 = vector.extract_strided_slice %20 {offsets = [0, 0], sizes = [128, 1], strides = [1, 1]} : vector<128x2xf32> to vector<128x1xf32>
    %60 = vector.extract_strided_slice %19 {offsets = [0, 0], sizes = [1, 256], strides = [1, 1]} : vector<2x256xf32> to vector<1x256xf32>
    %61 = vector.broadcast %59 : vector<128x1xf32> to vector<128x256xf32>
    %62 = vector.broadcast %60 : vector<1x256xf32> to vector<128x256xf32>
    %63 = arith.addf %61, %62 : vector<128x256xf32>
    %cst_28 = arith.constant 0.000000e+00 : f32
    %64 = vector.broadcast %cst_28 : f32 to vector<128x256xf32>
    %65 = arith.cmpf oge, %63, %64 : vector<128x256xf32>
    %cst_29 = arith.constant 0.00999999977 : f32
    %66 = vector.broadcast %cst_29 : f32 to vector<128x256xf32>
    %67 = arith.mulf %66, %63 : vector<128x256xf32>
    %68 = arith.select %65, %63, %67 : vector<128x256xi1>, vector<128x256xf32>
    %69 = arith.addf %68, %5 : vector<128x256xf32>
    %cst_30 = arith.constant dense<0xFF800000> : vector<128xf32>
    %70 = vector.multi_reduction <maximumf>, %69, %cst_30 [1] : vector<128x256xf32> to vector<128xf32>
    %71 = vector.shape_cast %70 : vector<128xf32> to vector<128x1xf32>
    %72 = vector.broadcast %71 : vector<128x1xf32> to vector<128x256xf32>
    %73 = arith.subf %69, %72 : vector<128x256xf32>
    %74 = math.exp %73 : vector<128x256xf32>
    %cst_31 = arith.constant dense<0.000000e+00> : vector<128xf32>
    %75 = vector.multi_reduction <add>, %74, %cst_31 [1] : vector<128x256xf32> to vector<128xf32>
    %76 = vector.shape_cast %75 : vector<128xf32> to vector<128x1xf32>
    %77 = vector.broadcast %76 : vector<128x1xf32> to vector<128x256xf32>
    %78 = arith.divf %74, %77 : vector<128x256xf32>
    %79 = arith.truncf %78 : vector<128x256xf32> to vector<128x256xbf16>
    %c0_32 = arith.constant 0 : index
    %c0_33 = arith.constant 0 : index
    %c0_34 = arith.constant 0 : index
    %80 = vector.load %arg3[%c0_32, %c0_33, %c0_34] : memref<2x256x32xbf16, #tpu.memory_space<vmem>>, vector<1x256x32xbf16>
    %81 = vector.shape_cast %80 : vector<1x256x32xbf16> to vector<256x32xbf16>
    %cst_35 = arith.constant dense<0.000000e+00> : vector<128x32xf32>
    %82 = tpu.matmul %79, %81, %cst_35 {dimension_numbers = #tpu.dot_dimension_numbers<[1], [0], [0], [1], [0, 0, 1, 1], [], []>} : vector<128x256xbf16>, vector<256x32xbf16>, vector<128x32xf32> -> vector<128x32xf32>
    %83 = vector.extract_strided_slice %58 {offsets = [0, 0], sizes = [128, 1], strides = [1, 1]} : vector<128x2xf32> to vector<128x1xf32>
    %84 = vector.broadcast %83 : vector<128x1xf32> to vector<128x32xf32>
    %85 = arith.mulf %84, %82 : vector<128x32xf32>
    %86 = vector.extract_strided_slice %20 {offsets = [0, 1], sizes = [128, 1], strides = [1, 1]} : vector<128x2xf32> to vector<128x1xf32>
    %87 = vector.extract_strided_slice %19 {offsets = [1, 0], sizes = [1, 256], strides = [1, 1]} : vector<2x256xf32> to vector<1x256xf32>
    %88 = vector.broadcast %86 : vector<128x1xf32> to vector<128x256xf32>
    %89 = vector.broadcast %87 : vector<1x256xf32> to vector<128x256xf32>
    %90 = arith.addf %88, %89 : vector<128x256xf32>
    %cst_36 = arith.constant 0.000000e+00 : f32
    %91 = vector.broadcast %cst_36 : f32 to vector<128x256xf32>
    %92 = arith.cmpf oge, %90, %91 : vector<128x256xf32>
    %cst_37 = arith.constant 0.00999999977 : f32
    %93 = vector.broadcast %cst_37 : f32 to vector<128x256xf32>
    %94 = arith.mulf %93, %90 : vector<128x256xf32>
    %95 = arith.select %92, %90, %94 : vector<128x256xi1>, vector<128x256xf32>
    %96 = arith.addf %95, %5 : vector<128x256xf32>
    %cst_38 = arith.constant dense<0xFF800000> : vector<128xf32>
    %97 = vector.multi_reduction <maximumf>, %96, %cst_38 [1] : vector<128x256xf32> to vector<128xf32>
    %98 = vector.shape_cast %97 : vector<128xf32> to vector<128x1xf32>
    %99 = vector.broadcast %98 : vector<128x1xf32> to vector<128x256xf32>
    %100 = arith.subf %96, %99 : vector<128x256xf32>
    %101 = math.exp %100 : vector<128x256xf32>
    %cst_39 = arith.constant dense<0.000000e+00> : vector<128xf32>
    %102 = vector.multi_reduction <add>, %101, %cst_39 [1] : vector<128x256xf32> to vector<128xf32>
    %103 = vector.shape_cast %102 : vector<128xf32> to vector<128x1xf32>
    %104 = vector.broadcast %103 : vector<128x1xf32> to vector<128x256xf32>
    %105 = arith.divf %101, %104 : vector<128x256xf32>
    %106 = arith.truncf %105 : vector<128x256xf32> to vector<128x256xbf16>
    %c1 = arith.constant 1 : index
    %c0_40 = arith.constant 0 : index
    %c0_41 = arith.constant 0 : index
    %107 = vector.load %arg3[%c1, %c0_40, %c0_41] : memref<2x256x32xbf16, #tpu.memory_space<vmem>>, vector<1x256x32xbf16>
    %108 = vector.shape_cast %107 : vector<1x256x32xbf16> to vector<256x32xbf16>
    %cst_42 = arith.constant dense<0.000000e+00> : vector<128x32xf32>
    %109 = tpu.matmul %106, %108, %cst_42 {dimension_numbers = #tpu.dot_dimension_numbers<[1], [0], [0], [1], [0, 0, 1, 1], [], []>} : vector<128x256xbf16>, vector<256x32xbf16>, vector<128x32xf32> -> vector<128x32xf32>
    %110 = vector.extract_strided_slice %58 {offsets = [0, 1], sizes = [128, 1], strides = [1, 1]} : vector<128x2xf32> to vector<128x1xf32>
    %111 = vector.broadcast %110 : vector<128x1xf32> to vector<128x32xf32>
    %112 = arith.mulf %111, %109 : vector<128x32xf32>
    %c0_43 = arith.constant 0 : index
    %c0_44 = arith.constant 0 : index
    %113 = vector.load %arg4[%c0_43, %c0_44] : memref<128x64xf32, #tpu.memory_space<vmem>>, vector<128x64xf32>
    %114 = tpu.concatenate %85, %112 in 1 : vector<128x32xf32>, vector<128x32xf32> -> vector<128x64xf32>
    %115 = arith.addf %113, %114 : vector<128x64xf32>
    %c0_45 = arith.constant 0 : index
    %c0_46 = arith.constant 0 : index
    %116 = vector.load %arg11[%c0_45, %c0_46] : memref<128x64xf32, #tpu.memory_space<vmem>>, vector<128x64xf32>
    tpu.vector_store %arg11[%c0_45, %c0_46], %115 {strides = array<i32>} : memref<128x64xf32, #tpu.memory_space<vmem>>, vector<128x64xf32>,
    return
  }
  func.func @transform_0(%arg0: i32) -> (i32, i32) {
    %c0_i32 = arith.constant 0 : i32
    %c0_i32_0 = arith.constant 0 : i32
    return %arg0, %c0_i32 : i32, i32
  }
  func.func @transform_1(%arg0: i32) -> (i32, i32) {
    %c0_i32 = arith.constant 0 : i32
    %c0_i32_0 = arith.constant 0 : i32
    return %c0_i32, %arg0 : i32, i32
  }
  func.func @transform_2(%arg0: i32) -> (i32, i32, i32) {
    %c0_i32 = arith.constant 0 : i32
    %c0_i32_0 = arith.constant 0 : i32
    %c0_i32_1 = arith.constant 0 : i32
    %c0_i32_2 = arith.constant 0 : i32
    return %c0_i32, %c0_i32_0, %c0_i32_1 : i32, i32, i32
  }
  func.func @transform_3(%arg0: i32) -> (i32, i32) {
    %c0_i32 = arith.constant 0 : i32
    %c0_i32_0 = arith.constant 0 : i32
    return %arg0, %c0_i32 : i32, i32
  }
  func.func @transform_4(%arg0: i32) -> (i32, i32) {
    %c0_i32 = arith.constant 0 : i32
    %c0_i32_0 = arith.constant 0 : i32
    %c0_i32_1 = arith.constant 0 : i32
    return %c0_i32, %c0_i32_0 : i32, i32
  }
  func.func @transform_5(%arg0: i32) -> (i32, i32) {
    %c0_i32 = arith.constant 0 : i32
    %c0_i32_0 = arith.constant 0 : i32
    %c0_i32_1 = arith.constant 0 : i32
    return %c0_i32, %c0_i32_0 : i32, i32
  }
  func.func @transform_6(%arg0: i32) -> (i32, i32) {
    %c0_i32 = arith.constant 0 : i32
    %c0_i32_0 = arith.constant 0 : i32
    return %arg0, %c0_i32 : i32, i32
  }
  func.func @transform_7(%arg0: i32) -> (i32, i32) {
    %c0_i32 = arith.constant 0 : i32
    %c0_i32_0 = arith.constant 0 : i32
    return %arg0, %c0_i32 : i32, i32
  }
  func.func @transform_8(%arg0: i32) -> (i32, i32) {
    %c0_i32 = arith.constant 0 : i32
    %c0_i32_0 = arith.constant 0 : i32
    %c0_i32_1 = arith.constant 0 : i32
    return %c0_i32, %c0_i32_0 : i32, i32
  }
  func.func @transform_9(%arg0: i32) -> (i32, i32) {
    %c0_i32 = arith.constant 0 : i32
    %c0_i32_0 = arith.constant 0 : i32
    %c0_i32_1 = arith.constant 0 : i32
    return %c0_i32, %c0_i32_0 : i32, i32
  }
  func.func @transform_10(%arg0: i32) -> (i32, i32) {
    %c0_i32 = arith.constant 0 : i32
    %c0_i32_0 = arith.constant 0 : i32
    return %arg0, %c0_i32 : i32, i32
  }
}

</mosaic_0001>

<llo_original>
// kernel: tpu_custom_call.1
$region0: #{tpu_custom_call.1}
  #allocation0 [shape = 'u32[]', space=smem, size = 0x4, offset = 0x4, fixed_abs, tag = 'smem constant byte address 0x4 - core index']
  #allocation1 [shape = 'u32[144,128]{1,0:T(1,128)}', space=vmem, size = 0x12000, scoped, tag = 'internal scratch']
  #allocation2 [shape = 'f32[256,128]{1,0:T(8,128)}', space=vmem, size = 0x20000, scoped, tag = 'scratch operand']
  %s0 = inlined_call_operand.vmem [shape: s8[256,256], index: 0, kind: input, shape index: {}]
  %s1 = inlined_call_operand.vmem [shape: s8[256,256], index: 1, kind: input, shape index: {}]
  %s2 = inlined_call_operand.vmem [shape: bf16[2,256,32], index: 2, kind: input, shape index: {}]
  %s3 = inlined_call_operand.vmem [shape: f32[256,64], index: 3, kind: input, shape index: {}]
  %s4 = inlined_call_operand.vmem [shape: f32[256,64], index: 4, kind: input, shape index: {}]
  %s5 = inlined_call_operand.vmem [shape: f32[2,256], index: 5, kind: input, shape index: {}]
  %s6 = inlined_call_operand.vmem [shape: f32[256,2], index: 6, kind: input, shape index: {}]
  %s7 = inlined_call_operand.vmem [shape: f32[256,2], index: 7, kind: input, shape index: {}]
  %s8 = inlined_call_operand.vmem [shape: f32[2,256], index: 8, kind: input, shape index: {}]
  %s9 = inlined_call_operand.vmem [shape: f32[1,64], index: 9, kind: input, shape index: {}]
  %s10 = inlined_call_operand.vmem [shape: f32[256,64], index: 10, kind: output, shape index: {}]
  %s11 = sld [smem:[#allocation0]]
  $region118: #{tpu_custom_call.1} parent=0
    _
  %s13 = ssub.s32 1, %s11
  %s14 = scalar_select 0, %s13, %s11
  $region1: #{tpu_custom_call.1} parent=0
    #allocation3 [shape = 'u8[65536]{0}', space=vmem, size = 0x10000, scoped, tag = 'input window, operand 1']
    loop: start=0, step=1, limit=4
    $region2: #{tpu_custom_call.1} parent=1 // loop_pre_header
      _
    $region3: #{tpu_custom_call.1} parent=1 // loop_header
      %s16 = sphi 0, %s20
      %p17 = scmp.ge.s32.totalorder %s16, 4
      %s26 = sphi 0, %s28
      %s29 = sphi 0, %s26
      %s30 = sphi 0, %s29
      %s46 = sphi 0, %s30
      %s52 = sphi 0, %s54
      %s55 = sphi 0, %s52
      %s56 = sphi 0, %s55
      %s72 = sphi 0, %s56
      %s76 = sphi 0, %s76
      %s78 = sphi 0, %s76
      %s79 = sphi 0, %s78
      %s93 = sphi 0, %s79
      %s99 = sphi 0, %s101
      %s102 = sphi 0, %s99
      %s103 = sphi 0, %s102
      %s119 = sphi 0, %s103
      %s123 = sphi 0, %s123
      %s125 = sphi 0, %s123
      %s126 = sphi 0, %s125
      %s140 = sphi 0, %s126
      %s144 = sphi 0, %s144
      %s146 = sphi 0, %s144
      %s147 = sphi 0, %s146
      %s161 = sphi 0, %s147
      %s167 = sphi 0, %s169
      %s170 = sphi 0, %s167
      %s171 = sphi 0, %s170
      %s187 = sphi 0, %s171
      %s193 = sphi 0, %s195
      %s196 = sphi 0, %s193
      %s197 = sphi 0, %s196
      %s213 = sphi 0, %s197
      %s217 = sphi 0, %s217
      %s219 = sphi 0, %s217
      %s220 = sphi 0, %s219
      %s234 = sphi 0, %s220
      %s238 = sphi 0, %s238
      %s240 = sphi 0, %s238
      %s241 = sphi 0, %s240
      %s255 = sphi 0, %s241
      %s261 = sphi 0, %s263
      %s264 = sphi 0, %s261
      %s265 = sphi 0, %s264
      %s281 = sphi 0, %s265
    $region4: #{tpu_custom_call.1} parent=1 // loop_header_branch
      %19 = sbr.rel (%p17) target = $region8
    $region5: #{tpu_custom_call.1} parent=1 // loop_body
      %s21 = ssub.s32 %s16, 1
      %s22 = ssub.s32 %s16, 2
      %s23 = sadd.s32 %s16, 1
      %s24 = ssub.s32 %s16, %s23
      %p25 = scmp.eq.s32.totalorder %s24, 0
      %s27 = sadd.s32 %s26, 1
      %s28 = scalar_select %p25, %s26, %s27
      %p31 = pneg %p25
      %p32 = scmp.eq.s32.totalorder %s16, 1
      %p33 = por %p31, %p32
      %p34 = scmp.ne.s32.totalorder %s26, %s29
      %p35 = scmp.eq.s32.totalorder %s16, 0
      %p36 = por %p34, %p35
      %p37 = scmp.ne.s32.totalorder %s26, %s29
      %p38 = scmp.eq.s32.totalorder %s21, 1
      %p39 = por %p37, %p38
      %p40 = scmp.ne.s32.totalorder %s29, %s30
      %p41 = scmp.eq.s32.totalorder %s21, 0
      %p42 = por %p40, %p41
      %p43 = scmp.ne.s32.totalorder %s29, %s30
      %p44 = scmp.eq.s32.totalorder %s22, 1
      %p45 = por %p43, %p44
      %p47 = scmp.ne.s32.totalorder %s30, %s46
      %p48 = scmp.eq.s32.totalorder %s22, 0
      %p49 = por %p47, %p48
      %s50 = ssub.s32 %s16, %s23
      %p51 = scmp.eq.s32.totalorder %s50, 0
      %s53 = sadd.s32 %s52, 1
      %s54 = scalar_select %p51, %s52, %s53
      %p57 = pneg %p51
      %p58 = scmp.eq.s32.totalorder %s16, 1
      %p59 = por %p57, %p58
      %p60 = scmp.ne.s32.totalorder %s52, %s55
      %p61 = scmp.eq.s32.totalorder %s16, 0
      %p62 = por %p60, %p61
      %p63 = scmp.ne.s32.totalorder %s52, %s55
      %p64 = scmp.eq.s32.totalorder %s21, 1
      %p65 = por %p63, %p64
      %p66 = scmp.ne.s32.totalorder %s55, %s56
      %p67 = scmp.eq.s32.totalorder %s21, 0
      %p68 = por %p66, %p67
      %p69 = scmp.ne.s32.totalorder %s55, %s56
      %p70 = scmp.eq.s32.totalorder %s22, 1
      %p71 = por %p69, %p70
      %p73 = scmp.ne.s32.totalorder %s56, %s72
      %p74 = scmp.eq.s32.totalorder %s22, 0
      %p75 = por %p73, %p74
      %s77 = sadd.s32 %s76, 1
      %p80 = scmp.eq.s32.totalorder %s16, 1
      %p81 = scmp.ne.s32.totalorder %s76, %s78
      %p82 = scmp.eq.s32.totalorder %s16, 0
      %p83 = por %p81, %p82
      %p84 = scmp.ne.s32.totalorder %s76, %s78
      %p85 = scmp.eq.s32.totalorder %s21, 1
      %p86 = por %p84, %p85
      %p87 = scmp.ne.s32.totalorder %s78, %s79
      %p88 = scmp.eq.s32.totalorder %s21, 0
      %p89 = por %p87, %p88
      %p90 = scmp.ne.s32.totalorder %s78, %s79
      %p91 = scmp.eq.s32.totalorder %s22, 1
      %p92 = por %p90, %p91
      %p94 = scmp.ne.s32.totalorder %s79, %s93
      %p95 = scmp.eq.s32.totalorder %s22, 0
      %p96 = por %p94, %p95
      %s97 = ssub.s32 %s16, %s23
      %p98 = scmp.eq.s32.totalorder %s97, 0
      %s100 = sadd.s32 %s99, 1
      %s101 = scalar_select %p98, %s99, %s100
      %p104 = pneg %p98
      %p105 = scmp.eq.s32.totalorder %s16, 1
      %p106 = por %p104, %p105
      %p107 = scmp.ne.s32.totalorder %s99, %s102
      %p108 = scmp.eq.s32.totalorder %s16, 0
      %p109 = por %p107, %p108
      %p110 = scmp.ne.s32.totalorder %s99, %s102
      %p111 = scmp.eq.s32.totalorder %s21, 1
      %p112 = por %p110, %p111
      %p113 = scmp.ne.s32.totalorder %s102, %s103
      %p114 = scmp.eq.s32.totalorder %s21, 0
      %p115 = por %p113, %p114
      %p116 = scmp.ne.s32.totalorder %s102, %s103
      %p117 = scmp.eq.s32.totalorder %s22, 1
      %p118 = por %p116, %p117
      %p120 = scmp.ne.s32.totalorder %s103, %s119
      %p121 = scmp.eq.s32.totalorder %s22, 0
      %p122 = por %p120, %p121
      %s124 = sadd.s32 %s123, 1
      %p127 = scmp.eq.s32.totalorder %s16, 1
      %p128 = scmp.ne.s32.totalorder %s123, %s125
      %p129 = scmp.eq.s32.totalorder %s16, 0
      %p130 = por %p128, %p129
      %p131 = scmp.ne.s32.totalorder %s123, %s125
      %p132 = scmp.eq.s32.totalorder %s21, 1
      %p133 = por %p131, %p132
      %p134 = scmp.ne.s32.totalorder %s125, %s126
      %p135 = scmp.eq.s32.totalorder %s21, 0
      %p136 = por %p134, %p135
      %p137 = scmp.ne.s32.totalorder %s125, %s126
      %p138 = scmp.eq.s32.totalorder %s22, 1
      %p139 = por %p137, %p138
      %p141 = scmp.ne.s32.totalorder %s126, %s140
      %p142 = scmp.eq.s32.totalorder %s22, 0
      %p143 = por %p141, %p142
      %s145 = sadd.s32 %s144, 1
      %p148 = scmp.eq.s32.totalorder %s16, 1
      %p149 = scmp.ne.s32.totalorder %s144, %s146
      %p150 = scmp.eq.s32.totalorder %s16, 0
      %p151 = por %p149, %p150
      %p152 = scmp.ne.s32.totalorder %s144, %s146
      %p153 = scmp.eq.s32.totalorder %s21, 1
      %p154 = por %p152, %p153
      %p155 = scmp.ne.s32.totalorder %s146, %s147
      %p156 = scmp.eq.s32.totalorder %s21, 0
      %p157 = por %p155, %p156
      %p158 = scmp.ne.s32.totalorder %s146, %s147
      %p159 = scmp.eq.s32.totalorder %s22, 1
      %p160 = por %p158, %p159
      %p162 = scmp.ne.s32.totalorder %s147, %s161
      %p163 = scmp.eq.s32.totalorder %s22, 0
      %p164 = por %p162, %p163
      %s165 = ssub.s32 %s16, %s23
      %p166 = scmp.eq.s32.totalorder %s165, 0
      %s168 = sadd.s32 %s167, 1
      %s169 = scalar_select %p166, %s167, %s168
      %p172 = pneg %p166
      %p173 = scmp.eq.s32.totalorder %s16, 1
      %p174 = por %p172, %p173
      %p175 = scmp.ne.s32.totalorder %s167, %s170
      %p176 = scmp.eq.s32.totalorder %s16, 0
      %p177 = por %p175, %p176
      %p178 = scmp.ne.s32.totalorder %s167, %s170
      %p179 = scmp.eq.s32.totalorder %s21, 1
      %p180 = por %p178, %p179
      %p181 = scmp.ne.s32.totalorder %s170, %s171
      %p182 = scmp.eq.s32.totalorder %s21, 0
      %p183 = por %p181, %p182
      %p184 = scmp.ne.s32.totalorder %s170, %s171
      %p185 = scmp.eq.s32.totalorder %s22, 1
      %p186 = por %p184, %p185
      %p188 = scmp.ne.s32.totalorder %s171, %s187
      %p189 = scmp.eq.s32.totalorder %s22, 0
      %p190 = por %p188, %p189
      %s191 = ssub.s32 %s16, %s23
      %p192 = scmp.eq.s32.totalorder %s191, 0
      %s194 = sadd.s32 %s193, 1
      %s195 = scalar_select %p192, %s193, %s194
      %p198 = pneg %p192
      %p199 = scmp.eq.s32.totalorder %s16, 1
      %p200 = por %p198, %p199
      %p201 = scmp.ne.s32.totalorder %s193, %s196
      %p202 = scmp.eq.s32.totalorder %s16, 0
      %p203 = por %p201, %p202
      %p204 = scmp.ne.s32.totalorder %s193, %s196
      %p205 = scmp.eq.s32.totalorder %s21, 1
      %p206 = por %p204, %p205
      %p207 = scmp.ne.s32.totalorder %s196, %s197
      %p208 = scmp.eq.s32.totalorder %s21, 0
      %p209 = por %p207, %p208
      %p210 = scmp.ne.s32.totalorder %s196, %s197
      %p211 = scmp.eq.s32.totalorder %s22, 1
      %p212 = por %p210, %p211
      %p214 = scmp.ne.s32.totalorder %s197, %s213
      %p215 = scmp.eq.s32.totalorder %s22, 0
      %p216 = por %p214, %p215
      %s218 = sadd.s32 %s217, 1
      %p221 = scmp.eq.s32.totalorder %s16, 1
      %p222 = scmp.ne.s32.totalorder %s217, %s219
      %p223 = scmp.eq.s32.totalorder %s16, 0
      %p224 = por %p222, %p223
      %p225 = scmp.ne.s32.totalorder %s217, %s219
      %p226 = scmp.eq.s32.totalorder %s21, 1
      %p227 = por %p225, %p226
      %p228 = scmp.ne.s32.totalorder %s219, %s220
      %p229 = scmp.eq.s32.totalorder %s21, 0
      %p230 = por %p228, %p229
      %p231 = scmp.ne.s32.totalorder %s219, %s220
      %p232 = scmp.eq.s32.totalorder %s22, 1
      %p233 = por %p231, %p232
      %p235 = scmp.ne.s32.totalorder %s220, %s234
      %p236 = scmp.eq.s32.totalorder %s22, 0
      %p237 = por %p235, %p236
      %s239 = sadd.s32 %s238, 1
      %p242 = scmp.eq.s32.totalorder %s16, 1
      %p243 = scmp.ne.s32.totalorder %s238, %s240
      %p244 = scmp.eq.s32.totalorder %s16, 0
      %p245 = por %p243, %p244
      %p246 = scmp.ne.s32.totalorder %s238, %s240
      %p247 = scmp.eq.s32.totalorder %s21, 1
      %p248 = por %p246, %p247
      %p249 = scmp.ne.s32.totalorder %s240, %s241
      %p250 = scmp.eq.s32.totalorder %s21, 0
      %p251 = por %p249, %p250
      %p252 = scmp.ne.s32.totalorder %s240, %s241
      %p253 = scmp.eq.s32.totalorder %s22, 1
      %p254 = por %p252, %p253
      %p256 = scmp.ne.s32.totalorder %s241, %s255
      %p257 = scmp.eq.s32.totalorder %s22, 0
      %p258 = por %p256, %p257
      %s259 = ssub.s32 %s16, %s23
      %p260 = scmp.eq.s32.totalorder %s259, 0
      %s262 = sadd.s32 %s261, 1
      %s263 = scalar_select %p260, %s261, %s262
      %p266 = pneg %p260
      %p267 = scmp.eq.s32.totalorder %s16, 1
      %p268 = por %p266, %p267
      %p269 = scmp.ne.s32.totalorder %s261, %s264
      %p270 = scmp.eq.s32.totalorder %s16, 0
      %p271 = por %p269, %p270
      %p272 = scmp.ne.s32.totalorder %s261, %s264
      %p273 = scmp.eq.s32.totalorder %s21, 1
      %p274 = por %p272, %p273
      %p275 = scmp.ne.s32.totalorder %s264, %s265
      %p276 = scmp.eq.s32.totalorder %s21, 0
      %p277 = por %p275, %p276
      %p278 = scmp.ne.s32.totalorder %s264, %s265
      %p279 = scmp.eq.s32.totalorder %s22, 1
      %p280 = por %p278, %p279
      %p282 = scmp.ne.s32.totalorder %s265, %s281
      %p283 = scmp.eq.s32.totalorder %s22, 0
      %p284 = por %p282, %p283
      %p285 = scmp.le.s32.totalorder 1, %s16
      %p286 = scmp.lt.s32.totalorder %s16, 3
      %p287 = pnand %p285, %p286
      %p288 = pneg %p287
      // Predicated region
      $region9: #{tpu_custom_call.1} parent=5 // pred_check
        _
      $region10: #{tpu_custom_call.1} parent=5 // pred_check_branch
        %290 = sbr.rel (%p287) target = $region12
      $region11: #{tpu_custom_call.1} parent=5 // pred_region
        %s291 = ssub.s32 %s16, 1
        // Predicated region
        $region13: #{tpu_custom_call.1} parent=11 // pred_check
          %p292 = pneg %p89
        $region14: #{tpu_custom_call.1} parent=11 // pred_check_branch
          %294 = sbr.rel (%p292) target = $region16
        $region15: #{tpu_custom_call.1} parent=11 // pred_region
          _
        $region16: #{tpu_custom_call.1} parent=11 // pred_fallthru
          _
        // Predicated region
        $region17: #{tpu_custom_call.1} parent=11 // pred_check
          %p295 = pneg %p136
        $region18: #{tpu_custom_call.1} parent=11 // pred_check_branch
          %297 = sbr.rel (%p295) target = $region20
        $region19: #{tpu_custom_call.1} parent=11 // pred_region
          _
        $region20: #{tpu_custom_call.1} parent=11 // pred_fallthru
          _
        // Predicated region
        $region21: #{tpu_custom_call.1} parent=11 // pred_check
          %p298 = pneg %p157
        $region22: #{tpu_custom_call.1} parent=11 // pred_check_branch
          %300 = sbr.rel (%p298) target = $region24
        $region23: #{tpu_custom_call.1} parent=11 // pred_region
          _
        $region24: #{tpu_custom_call.1} parent=11 // pred_fallthru
          _
        // Predicated region
        $region25: #{tpu_custom_call.1} parent=11 // pred_check
          %p301 = pneg %p230
        $region26: #{tpu_custom_call.1} parent=11 // pred_check_branch
          %303 = sbr.rel (%p301) target = $region28
        $region27: #{tpu_custom_call.1} parent=11 // pred_region
          _
        $region28: #{tpu_custom_call.1} parent=11 // pred_fallthru
          _
        // Predicated region
        $region29: #{tpu_custom_call.1} parent=11 // pred_check
          %p304 = pneg %p251
        $region30: #{tpu_custom_call.1} parent=11 // pred_check_branch
          %306 = sbr.rel (%p304) target = $region32
        $region31: #{tpu_custom_call.1} parent=11 // pred_region
          _
        $region32: #{tpu_custom_call.1} parent=11 // pred_fallthru
          _
      $region12: #{tpu_custom_call.1} parent=5 // pred_fallthru
        _
      %p307 = scmp.lt.s32.totalorder %s16, 2
      // Predicated region
      $region33: #{tpu_custom_call.1} parent=5 // pred_check
        %p308 = pneg %p307
      $region34: #{tpu_custom_call.1} parent=5 // pred_check_branch
        %310 = sbr.rel (%p308) target = $region36
      $region35: #{tpu_custom_call.1} parent=5 // pred_region
        // Predicated region
        $region37: #{tpu_custom_call.1} parent=35 // pred_check
          %p311 = pneg %p36
        $region38: #{tpu_custom_call.1} parent=35 // pred_check_branch
          %313 = sbr.rel (%p311) target = $region40
        $region39: #{tpu_custom_call.1} parent=35 // pred_region
          %s314 = smul.u32 4, %s16
          %p315 = scmp.lt.s32.totalorder %s314, 7
          %s316 = scalar_select %p315, %s314, 7
          %s317 = smul.addr %s316, 2
          %s318 = smul.addr %s317, 8
          %s319 = scalar_lea.vmem %s0, %s318
          %s320 = smul.u32 4, %s16
        $region40: #{tpu_custom_call.1} parent=35 // pred_fallthru
          _
        // Predicated region
        $region41: #{tpu_custom_call.1} parent=35 // pred_check
          %p321 = pneg %p62
        $region42: #{tpu_custom_call.1} parent=35 // pred_check_branch
          %323 = sbr.rel (%p321) target = $region44
        $region43: #{tpu_custom_call.1} parent=35 // pred_region
          %s324 = sand.u32 %s52, 1
          %s325 = sand.u32 %s52, 1
          %s326 = smul.addr %s325, 64
          %s327 = scalar_lea.vmem [#allocation3], %s326
          %s328 = smul.addr %s16, 8
          %s329 = scalar_lea.vmem %s1, %s328
          // Predicated region
          $region45: #{tpu_custom_call.1} parent=43 // pred_check
            _
          $region46: #{tpu_custom_call.1} parent=43 // pred_check_branch
            %331 = sbr.rel (0) target = $region48
          $region47: #{tpu_custom_call.1} parent=43 // pred_region
            // Predicated region
            $region49: #{tpu_custom_call.1} parent=47 // pred_check
              _
            $region50: #{tpu_custom_call.1} parent=47 // pred_check_branch
              %333 = sbr.rel (0) target = $region52
            $region51: #{tpu_custom_call.1} parent=47 // pred_region
              // Predicated region
              $region64: #{tpu_custom_call.1} parent=51 // pred_check
                _
              $region65: #{tpu_custom_call.1} parent=51 // pred_check_branch
                %362 = sbr.rel (0) target = $region67
              $region66: #{tpu_custom_call.1} parent=51 // pred_region
                loop: start=0, step=1, limit=1
                $region68: #{tpu_custom_call.1} parent=66 // loop_pre_header
                  _
                $region69: #{tpu_custom_call.1} parent=66 // loop_header
                  %s364 = sphi 0, %s368
                  %p365 = scmp.ge.s32.totalorder %s364, 1
                  %s369 = sphi %s329, %s329
                  %s370 = sphi %s327, %s327
                $region70: #{tpu_custom_call.1} parent=66 // loop_header_branch
                  %367 = sbr.rel (%p365) target = $region74
                $region71: #{tpu_custom_call.1} parent=66 // loop_body
                  %v371 = vld [vmem:[%s369] sm:$0xff]
                  %372 = vst [vmem:[%s370] sm:$0xff] %v371
                  %v373 = vld [vmem:[%s369 + $0x10] sm:$0xff]
                  %374 = vst [vmem:[%s370 + $0x8] sm:$0xff] %v373
                  %v375 = vld [vmem:[%s369 + $0x20] sm:$0xff]
                  %376 = vst [vmem:[%s370 + $0x10] sm:$0xff] %v375
                  %v377 = vld [vmem:[%s369 + $0x30] sm:$0xff]
                  %378 = vst [vmem:[%s370 + $0x18] sm:$0xff] %v377
                  %v379 = vld [vmem:[%s369 + $0x40] sm:$0xff]
                  %380 = vst [vmem:[%s370 + $0x20] sm:$0xff] %v379
                  %v381 = vld [vmem:[%s369 + $0x50] sm:$0xff]
                  %382 = vst [vmem:[%s370 + $0x28] sm:$0xff] %v381
                  %v383 = vld [vmem:[%s369 + $0x60] sm:$0xff]
                  %384 = vst [vmem:[%s370 + $0x30] sm:$0xff] %v383
                  %v385 = vld [vmem:[%s369 + $0x70] sm:$0xff]
                  %386 = vst [vmem:[%s370 + $0x38] sm:$0xff] %v385
                $region72: #{tpu_custom_call.1} parent=66 // loop_footer
                  %s368 = sadd.s32 1, %s364
                $region73: #{tpu_custom_call.1} parent=66 // loop_footer_branch
                  %363 = sbr.rel target = $region69
                $region74: #{tpu_custom_call.1} parent=66 // loop_exit
                  _
              $region67: #{tpu_custom_call.1} parent=51 // pred_fallthru
                _
              // Predicated region
              $region75: #{tpu_custom_call.1} parent=51 // pred_check
                _
              $region76: #{tpu_custom_call.1} parent=51 // pred_check_branch
                %388 = sbr.rel target = $region78
              $region77: #{tpu_custom_call.1} parent=51 // pred_region
                _
              $region78: #{tpu_custom_call.1} parent=51 // pred_fallthru
                _
            $region52: #{tpu_custom_call.1} parent=47 // pred_fallthru
              _
            // Predicated region
            $region53: #{tpu_custom_call.1} parent=47 // pred_check
              _
            $region54: #{tpu_custom_call.1} parent=47 // pred_check_branch
              %335 = sbr.rel target = $region56
            $region55: #{tpu_custom_call.1} parent=47 // pred_region
              loop: start=0, step=1, limit=1
              $region57: #{tpu_custom_call.1} parent=55 // loop_pre_header
                _
              $region58: #{tpu_custom_call.1} parent=55 // loop_header
                %s338 = sphi 0, %s342
                %p339 = scmp.ge.s32.totalorder %s338, 1
                %s343 = sphi %s329, %s329
                %s344 = sphi %s327, %s327
              $region59: #{tpu_custom_call.1} parent=55 // loop_header_branch
                %341 = sbr.rel (%p339) target = $region63
              $region60: #{tpu_custom_call.1} parent=55 // loop_body
                %v345 = vld [vmem:[%s343] sm:$0xff]
                %346 = vst [vmem:[%s344] sm:$0xff] %v345
                %v347 = vld [vmem:[%s343 + $0x10] sm:$0xff]
                %348 = vst [vmem:[%s344 + $0x8] sm:$0xff] %v347
                %v349 = vld [vmem:[%s343 + $0x20] sm:$0xff]
                %350 = vst [vmem:[%s344 + $0x10] sm:$0xff] %v349
                %v351 = vld [vmem:[%s343 + $0x30] sm:$0xff]
                %352 = vst [vmem:[%s344 + $0x18] sm:$0xff] %v351
                %v353 = vld [vmem:[%s343 + $0x40] sm:$0xff]
                %354 = vst [vmem:[%s344 + $0x20] sm:$0xff] %v353
                %v355 = vld [vmem:[%s343 + $0x50] sm:$0xff]
                %356 = vst [vmem:[%s344 + $0x28] sm:$0xff] %v355
                %v357 = vld [vmem:[%s343 + $0x60] sm:$0xff]
                %358 = vst [vmem:[%s344 + $0x30] sm:$0xff] %v357
                %v359 = vld [vmem:[%s343 + $0x70] sm:$0xff]
                %360 = vst [vmem:[%s344 + $0x38] sm:$0xff] %v359
              $region61: #{tpu_custom_call.1} parent=55 // loop_footer
                %s342 = sadd.s32 1, %s338
              $region62: #{tpu_custom_call.1} parent=55 // loop_footer_branch
                %337 = sbr.rel target = $region58
              $region63: #{tpu_custom_call.1} parent=55 // loop_exit
                _
            $region56: #{tpu_custom_call.1} parent=47 // pred_fallthru
              _
          $region48: #{tpu_custom_call.1} parent=43 // pred_fallthru
            _
          %389 = vnop
        $region44: #{tpu_custom_call.1} parent=35 // pred_fallthru
          _
        // Predicated region
        $region79: #{tpu_custom_call.1} parent=35 // pred_check
          %p390 = pneg %p109
        $region80: #{tpu_custom_call.1} parent=35 // pred_check_branch
          %392 = sbr.rel (%p390) target = $region82
        $region81: #{tpu_custom_call.1} parent=35 // pred_region
          %s393 = smul.u32 16, %s16
          %p394 = scmp.lt.s32.totalorder %s393, 31
          %s395 = scalar_select %p394, %s393, 31
          %s396 = smul.addr %s395, 8
          %s397 = scalar_lea.vmem %s3, %s396
          %s398 = smul.u32 16, %s16
        $region82: #{tpu_custom_call.1} parent=35 // pred_fallthru
          _
        // Predicated region
        $region83: #{tpu_custom_call.1} parent=35 // pred_check
          %p399 = pneg %p177
        $region84: #{tpu_custom_call.1} parent=35 // pred_check_branch
          %401 = sbr.rel (%p399) target = $region86
        $region85: #{tpu_custom_call.1} parent=35 // pred_region
          %s402 = smul.u32 16, %s16
          %p403 = scmp.lt.s32.totalorder %s402, 31
          %s404 = scalar_select %p403, %s402, 31
          %s405 = smul.addr %s404, 8
          %s406 = scalar_lea.vmem %s6, %s405
          %s407 = smul.u32 16, %s16
        $region86: #{tpu_custom_call.1} parent=35 // pred_fallthru
          _
        // Predicated region
        $region87: #{tpu_custom_call.1} parent=35 // pred_check
          %p408 = pneg %p203
        $region88: #{tpu_custom_call.1} parent=35 // pred_check_branch
          %410 = sbr.rel (%p408) target = $region90
        $region89: #{tpu_custom_call.1} parent=35 // pred_region
          %s411 = smul.u32 16, %s16
          %p412 = scmp.lt.s32.totalorder %s411, 31
          %s413 = scalar_select %p412, %s411, 31
          %s414 = smul.addr %s413, 8
          %s415 = scalar_lea.vmem %s7, %s414
          %s416 = smul.u32 16, %s16
        $region90: #{tpu_custom_call.1} parent=35 // pred_fallthru
          _
      $region36: #{tpu_custom_call.1} parent=5 // pred_fallthru
        _
      %p417 = scmp.le.s32.totalorder 1, %s16
      %p418 = scmp.lt.s32.totalorder %s16, 3
      %p419 = pnand %p417, %p418
      %p420 = pneg %p419
      // Predicated region
      $region91: #{tpu_custom_call.1} parent=5 // pred_check
        _
      $region92: #{tpu_custom_call.1} parent=5 // pred_check_branch
        %422 = sbr.rel (%p419) target = $region94
      $region93: #{tpu_custom_call.1} parent=5 // pred_region
        %s423 = ssub.s32 %s16, 1
        %s424 = sand.u32 %s55, 1
        %s425 = sand.u32 %s55, 1
        %s426 = smul.addr %s425, 64
        %s427 = scalar_lea.vmem [#allocation3], %s426
        // Predicated region
        $region95: #{tpu_custom_call.1} parent=93 // pred_check
          %p428 = pneg %p68
        $region96: #{tpu_custom_call.1} parent=93 // pred_check_branch
          %430 = sbr.rel (%p428) target = $region98
        $region97: #{tpu_custom_call.1} parent=93 // pred_region
          _
        $region98: #{tpu_custom_call.1} parent=93 // pred_fallthru
          _
        %s431 = smul.u32 4, %s21
        %p432 = scmp.lt.s32.totalorder %s431, 7
        %s433 = scalar_select %p432, %s431, 7
        %s434 = smul.addr %s433, 2
        %s435 = smul.addr %s434, 8
        %s436 = scalar_lea.vmem %s0, %s435
        %p437 = pneg %p42
        %p438 = pneg %p39
        %s439 = sand.u32 %s55, 1
        %s440 = sand.u32 %s55, 1
        %s441 = smul.addr %s440, 64
        %s442 = scalar_lea.vmem [#allocation3], %s441
        %p443 = pneg %p68
        %p444 = pneg %p65
        %p445 = pneg %p89
        %p446 = pneg %p86
        %s447 = smul.u32 16, %s21
        %p448 = scmp.lt.s32.totalorder %s447, 31
        %s449 = scalar_select %p448, %s447, 31
        %s450 = smul.addr %s449, 8
        %s451 = scalar_lea.vmem %s3, %s450
        %p452 = pneg %p115
        %p453 = pneg %p112
        %p454 = pneg %p136
        %p455 = pneg %p133
        %p456 = pneg %p157
        %p457 = pneg %p154
        %s458 = smul.u32 16, %s21
        %p459 = scmp.lt.s32.totalorder %s458, 31
        %s460 = scalar_select %p459, %s458, 31
        %s461 = smul.addr %s460, 8
        %s462 = scalar_lea.vmem %s6, %s461
        %p463 = pneg %p183
        %p464 = pneg %p180
        %s465 = smul.u32 16, %s21
        %p466 = scmp.lt.s32.totalorder %s465, 31
        %s467 = scalar_select %p466, %s465, 31
        %s468 = smul.addr %s467, 8
        %s469 = scalar_lea.vmem %s7, %s468
        %p470 = pneg %p209
        %p471 = pneg %p206
        %p472 = pneg %p230
        %p473 = pneg %p227
        %p474 = pneg %p251
        %p475 = pneg %p248
        %p476 = pneg %p277
        %p477 = pneg %p274
        %s478 = smul.u32 16, %s21
        %p479 = scmp.lt.s32.totalorder %s478, 31
        %s480 = scalar_select %p479, %s478, 31
        %s481 = smul.addr %s480, 8
        %s482 = scalar_lea.vmem %s10, %s481
        %s483 = smul.u32 4, %s21
        %p484 = scmp.lt.s32.totalorder %s483, 7
        %s485 = scalar_select %p484, %s483, 7
        %s486 = smul.addr %s485, 2
        %s487 = smul.addr %s486, 8
        %s488 = scalar_lea.vmem %s0, %s487
        %s489 = smul.u32 4, %s21
        %s490 = smul.u32 16, %s21
        %p491 = scmp.lt.s32.totalorder %s490, 31
        %s492 = scalar_select %p491, %s490, 31
        %s493 = smul.addr %s492, 8
        %s494 = scalar_lea.vmem %s3, %s493
        %s495 = smul.u32 16, %s21
        %s496 = smul.u32 16, %s21
        %p497 = scmp.lt.s32.totalorder %s496, 31
        %s498 = scalar_select %p497, %s496, 31
        %s499 = smul.addr %s498, 8
        %s500 = scalar_lea.vmem %s6, %s499
        %s501 = smul.u32 16, %s21
        %s502 = smul.u32 16, %s21
        %p503 = scmp.lt.s32.totalorder %s502, 31
        %s504 = scalar_select %p503, %s502, 31
        %s505 = smul.addr %s504, 8
        %s506 = scalar_lea.vmem %s7, %s505
        %s507 = smul.u32 16, %s21
        %s508 = smul.u32 16, %s21
        %p509 = scmp.lt.s32.totalorder %s508, 31
        %s510 = scalar_select %p509, %s508, 31
        %s511 = smul.addr %s510, 8
        %s512 = scalar_lea.vmem %s10, %s511
        %s513 = smul.u32 16, %s21
        %v515 = vld [vmem:[%s488] sm:$0xff]
        %v516 = vld [vmem:[%s488 + $0x8] sm:$0xff]
        %v517 = vld [vmem:[%s488 + $0x10] sm:$0xff]
        %v518 = vld [vmem:[%s488 + $0x18] sm:$0xff]
        %v519 = vld [vmem:[%s488 + $0x20] sm:$0xff]
        %v520 = vld [vmem:[%s488 + $0x28] sm:$0xff]
        %v521 = vld [vmem:[%s488 + $0x30] sm:$0xff]
        %v522 = vld [vmem:[%s488 + $0x38] sm:$0xff]
        %v523 = vunpack.c.0.s8 %v515
        %v524 = vunpack.c.0.s8 %v516
        %v525 = vunpack.c.1.s8 %v515
        %v526 = vunpack.c.1.s8 %v516
        %v527 = vunpack.c.2.s8 %v515
        %v528 = vunpack.c.2.s8 %v516
        %v529 = vunpack.c.3.s8 %v515
        %v530 = vunpack.c.3.s8 %v516
        %v531 = vunpack.c.0.s8 %v517
        %v532 = vunpack.c.0.s8 %v518
        %v533 = vunpack.c.1.s8 %v517
        %v534 = vunpack.c.1.s8 %v518
        %v535 = vunpack.c.2.s8 %v517
        %v536 = vunpack.c.2.s8 %v518
        %v537 = vunpack.c.3.s8 %v517
        %v538 = vunpack.c.3.s8 %v518
        %v539 = vunpack.c.0.s8 %v519
        %v540 = vunpack.c.0.s8 %v520
        %v541 = vunpack.c.1.s8 %v519
        %v542 = vunpack.c.1.s8 %v520
        %v543 = vunpack.c.2.s8 %v519
        %v544 = vunpack.c.2.s8 %v520
        %v545 = vunpack.c.3.s8 %v519
        %v546 = vunpack.c.3.s8 %v520
        %v547 = vunpack.c.0.s8 %v521
        %v548 = vunpack.c.0.s8 %v522
        %v549 = vunpack.c.1.s8 %v521
        %v550 = vunpack.c.1.s8 %v522
        %v551 = vunpack.c.2.s8 %v521
        %v552 = vunpack.c.2.s8 %v522
        %v553 = vunpack.c.3.s8 %v521
        %v554 = vunpack.c.3.s8 %v522
        %v555 = vcvt.s32.f32 %v523
        %v556 = vcvt.s32.f32 %v524
        %v557 = vcvt.s32.f32 %v525
        %v558 = vcvt.s32.f32 %v526
        %v559 = vcvt.s32.f32 %v527
        %v560 = vcvt.s32.f32 %v528
        %v561 = vcvt.s32.f32 %v529
        %v562 = vcvt.s32.f32 %v530
        %v563 = vcvt.s32.f32 %v531
        %v564 = vcvt.s32.f32 %v532
        %v565 = vcvt.s32.f32 %v533
        %v566 = vcvt.s32.f32 %v534
        %v567 = vcvt.s32.f32 %v535
        %v568 = vcvt.s32.f32 %v536
        %v569 = vcvt.s32.f32 %v537
        %v570 = vcvt.s32.f32 %v538
        %v571 = vcvt.s32.f32 %v539
        %v572 = vcvt.s32.f32 %v540
        %v573 = vcvt.s32.f32 %v541
        %v574 = vcvt.s32.f32 %v542
        %v575 = vcvt.s32.f32 %v543
        %v576 = vcvt.s32.f32 %v544
        %v577 = vcvt.s32.f32 %v545
        %v578 = vcvt.s32.f32 %v546
        %v579 = vcvt.s32.f32 %v547
        %v580 = vcvt.s32.f32 %v548
        %v581 = vcvt.s32.f32 %v549
        %v582 = vcvt.s32.f32 %v550
        %v583 = vcvt.s32.f32 %v551
        %v584 = vcvt.s32.f32 %v552
        %v585 = vcvt.s32.f32 %v553
        %v586 = vcvt.s32.f32 %v554
        %v587 = vsub.f32 %v555, 1.0
        %v588 = vsub.f32 %v556, 1.0
        %v589 = vsub.f32 %v557, 1.0
        %v590 = vsub.f32 %v558, 1.0
        %v591 = vsub.f32 %v559, 1.0
        %v592 = vsub.f32 %v560, 1.0
        %v593 = vsub.f32 %v561, 1.0
        %v594 = vsub.f32 %v562, 1.0
        %v595 = vsub.f32 %v563, 1.0
        %v596 = vsub.f32 %v564, 1.0
        %v597 = vsub.f32 %v565, 1.0
        %v598 = vsub.f32 %v566, 1.0
        %v599 = vsub.f32 %v567, 1.0
        %v600 = vsub.f32 %v568, 1.0
        %v601 = vsub.f32 %v569, 1.0
        %v602 = vsub.f32 %v570, 1.0
        %v603 = vsub.f32 %v571, 1.0
        %v604 = vsub.f32 %v572, 1.0
        %v605 = vsub.f32 %v573, 1.0
        %v606 = vsub.f32 %v574, 1.0
        %v607 = vsub.f32 %v575, 1.0
        %v608 = vsub.f32 %v576, 1.0
        %v609 = vsub.f32 %v577, 1.0
        %v610 = vsub.f32 %v578, 1.0
        %v611 = vsub.f32 %v579, 1.0
        %v612 = vsub.f32 %v580, 1.0
        %v613 = vsub.f32 %v581, 1.0
        %v614 = vsub.f32 %v582, 1.0
        %v615 = vsub.f32 %v583, 1.0
        %v616 = vsub.f32 %v584, 1.0
        %v617 = vsub.f32 %v585, 1.0
        %v618 = vsub.f32 %v586, 1.0
        %v619 = vmul.f32 %v587, 1e+09
        %v620 = vmul.f32 %v588, 1e+09
        %v621 = vmul.f32 %v589, 1e+09
        %v622 = vmul.f32 %v590, 1e+09
        %v623 = vmul.f32 %v591, 1e+09
        %v624 = vmul.f32 %v592, 1e+09
        %v625 = vmul.f32 %v593, 1e+09
        %v626 = vmul.f32 %v594, 1e+09
        %v627 = vmul.f32 %v595, 1e+09
        %v628 = vmul.f32 %v596, 1e+09
        %v629 = vmul.f32 %v597, 1e+09
        %v630 = vmul.f32 %v598, 1e+09
        %v631 = vmul.f32 %v599, 1e+09
        %v632 = vmul.f32 %v600, 1e+09
        %v633 = vmul.f32 %v601, 1e+09
        %v634 = vmul.f32 %v602, 1e+09
        %v635 = vmul.f32 %v603, 1e+09
        %v636 = vmul.f32 %v604, 1e+09
        %v637 = vmul.f32 %v605, 1e+09
        %v638 = vmul.f32 %v606, 1e+09
        %v639 = vmul.f32 %v607, 1e+09
        %v640 = vmul.f32 %v608, 1e+09
        %v641 = vmul.f32 %v609, 1e+09
        %v642 = vmul.f32 %v610, 1e+09
        %v643 = vmul.f32 %v611, 1e+09
        %v644 = vmul.f32 %v612, 1e+09
        %v645 = vmul.f32 %v613, 1e+09
        %v646 = vmul.f32 %v614, 1e+09
        %v647 = vmul.f32 %v615, 1e+09
        %v648 = vmul.f32 %v616, 1e+09
        %v649 = vmul.f32 %v617, 1e+09
        %v650 = vmul.f32 %v618, 1e+09
        %v651 = vadd.f32 %v555, %v556
        %652 = vadd.xlane.f32.xlu0 %v651
        %v653 = vpop.xlane.xlu0 %652
        %v654 = vadd.f32 %v557, %v558
        %655 = vadd.xlane.f32.xlu0 %v654
        %v656 = vpop.xlane.xlu0 %655
        %v657 = vadd.f32 %v559, %v560
        %658 = vadd.xlane.f32.xlu0 %v657
        %v659 = vpop.xlane.xlu0 %658
        %v660 = vadd.f32 %v561, %v562
        %661 = vadd.xlane.f32.xlu0 %v660
        %v662 = vpop.xlane.xlu0 %661
        %v663 = vadd.f32 %v563, %v564
        %664 = vadd.xlane.f32.xlu0 %v663
        %v665 = vpop.xlane.xlu0 %664
        %v666 = vadd.f32 %v565, %v566
        %667 = vadd.xlane.f32.xlu0 %v666
        %v668 = vpop.xlane.xlu0 %667
        %v669 = vadd.f32 %v567, %v568
        %670 = vadd.xlane.f32.xlu0 %v669
        %v671 = vpop.xlane.xlu0 %670
        %v672 = vadd.f32 %v569, %v570
        %673 = vadd.xlane.f32.xlu0 %v672
        %v674 = vpop.xlane.xlu0 %673
        %v675 = vadd.f32 %v571, %v572
        %676 = vadd.xlane.f32.xlu0 %v675
        %v677 = vpop.xlane.xlu0 %676
        %v678 = vadd.f32 %v573, %v574
        %679 = vadd.xlane.f32.xlu0 %v678
        %v680 = vpop.xlane.xlu0 %679
        %v681 = vadd.f32 %v575, %v576
        %682 = vadd.xlane.f32.xlu0 %v681
        %v683 = vpop.xlane.xlu0 %682
        %v684 = vadd.f32 %v577, %v578
        %685 = vadd.xlane.f32.xlu0 %v684
        %v686 = vpop.xlane.xlu0 %685
        %v687 = vadd.f32 %v579, %v580
        %688 = vadd.xlane.f32.xlu0 %v687
        %v689 = vpop.xlane.xlu0 %688
        %v690 = vadd.f32 %v581, %v582
        %691 = vadd.xlane.f32.xlu0 %v690
        %v692 = vpop.xlane.xlu0 %691
        %v693 = vadd.f32 %v583, %v584
        %694 = vadd.xlane.f32.xlu0 %v693
        %v695 = vpop.xlane.xlu0 %694
        %v696 = vadd.f32 %v585, %v586
        %697 = vadd.xlane.f32.xlu0 %v696
        %v698 = vpop.xlane.xlu0 %697
        %v699 = vmax.f32 %v653, 1.0
        %v700 = vmax.f32 %v656, 1.0
        %v701 = vmax.f32 %v659, 1.0
        %v702 = vmax.f32 %v662, 1.0
        %v703 = vmax.f32 %v665, 1.0
        %v704 = vmax.f32 %v668, 1.0
        %v705 = vmax.f32 %v671, 1.0
        %v706 = vmax.f32 %v674, 1.0
        %v707 = vmax.f32 %v677, 1.0
        %v708 = vmax.f32 %v680, 1.0
        %v709 = vmax.f32 %v683, 1.0
        %v710 = vmax.f32 %v686, 1.0
        %v711 = vmax.f32 %v689, 1.0
        %v712 = vmax.f32 %v692, 1.0
        %v713 = vmax.f32 %v695, 1.0
        %v714 = vmax.f32 %v698, 1.0
        %v715 = vrcp.pop %v699
        %v716 = vmul.f32 1.0, %v715
        %v717 = vrcp.pop %v700
        %v718 = vmul.f32 1.0, %v717
        %v719 = vrcp.pop %v701
        %v720 = vmul.f32 1.0, %v719
        %v721 = vrcp.pop %v702
        %v722 = vmul.f32 1.0, %v721
        %v723 = vrcp.pop %v703
        %v724 = vmul.f32 1.0, %v723
        %v725 = vrcp.pop %v704
        %v726 = vmul.f32 1.0, %v725
        %v727 = vrcp.pop %v705
        %v728 = vmul.f32 1.0, %v727
        %v729 = vrcp.pop %v706
        %v730 = vmul.f32 1.0, %v729
        %v731 = vrcp.pop %v707
        %v732 = vmul.f32 1.0, %v731
        %v733 = vrcp.pop %v708
        %v734 = vmul.f32 1.0, %v733
        %v735 = vrcp.pop %v709
        %v736 = vmul.f32 1.0, %v735
        %v737 = vrcp.pop %v710
        %v738 = vmul.f32 1.0, %v737
        %v739 = vrcp.pop %v711
        %v740 = vmul.f32 1.0, %v739
        %v741 = vrcp.pop %v712
        %v742 = vmul.f32 1.0, %v741
        %v743 = vrcp.pop %v713
        %v744 = vmul.f32 1.0, %v743
        %v745 = vrcp.pop %v714
        %v746 = vmul.f32 1.0, %v745
        %v747 = vld [vmem:[%s427] sm:$0xff]
        %v748 = vld [vmem:[%s427 + $0x8] sm:$0xff]
        %v749 = vld [vmem:[%s427 + $0x10] sm:$0xff]
        %v750 = vld [vmem:[%s427 + $0x18] sm:$0xff]
        %v751 = vld [vmem:[%s427 + $0x20] sm:$0xff]
        %v752 = vld [vmem:[%s427 + $0x28] sm:$0xff]
        %v753 = vld [vmem:[%s427 + $0x30] sm:$0xff]
        %v754 = vld [vmem:[%s427 + $0x38] sm:$0xff]
        %v755 = vunpack.c.0.s8 %v747
        %v756 = vunpack.c.1.s8 %v747
        %v757 = vunpack.c.2.s8 %v747
        %v758 = vunpack.c.3.s8 %v747
        %v759 = vunpack.c.0.s8 %v748
        %v760 = vunpack.c.1.s8 %v748
        %v761 = vunpack.c.2.s8 %v748
        %v762 = vunpack.c.3.s8 %v748
        %v763 = vunpack.c.0.s8 %v749
        %v764 = vunpack.c.1.s8 %v749
        %v765 = vunpack.c.2.s8 %v749
        %v766 = vunpack.c.3.s8 %v749
        %v767 = vunpack.c.0.s8 %v750
        %v768 = vunpack.c.1.s8 %v750
        %v769 = vunpack.c.2.s8 %v750
        %v770 = vunpack.c.3.s8 %v750
        %v771 = vunpack.c.0.s8 %v751
        %v772 = vunpack.c.1.s8 %v751
        %v773 = vunpack.c.2.s8 %v751
        %v774 = vunpack.c.3.s8 %v751
        %v775 = vunpack.c.0.s8 %v752
        %v776 = vunpack.c.1.s8 %v752
        %v777 = vunpack.c.2.s8 %v752
        %v778 = vunpack.c.3.s8 %v752
        %v779 = vunpack.c.0.s8 %v753
        %v780 = vunpack.c.1.s8 %v753
        %v781 = vunpack.c.2.s8 %v753
        %v782 = vunpack.c.3.s8 %v753
        %v783 = vunpack.c.0.s8 %v754
        %v784 = vunpack.c.1.s8 %v754
        %v785 = vunpack.c.2.s8 %v754
        %v786 = vunpack.c.3.s8 %v754
        %v787 = vcvt.s32.f32 %v755
        %v788 = vcvt.s32.f32 %v756
        %v789 = vcvt.s32.f32 %v757
        %v790 = vcvt.s32.f32 %v758
        %v791 = vcvt.s32.f32 %v759
        %v792 = vcvt.s32.f32 %v760
        %v793 = vcvt.s32.f32 %v761
        %v794 = vcvt.s32.f32 %v762
        %v795 = vcvt.s32.f32 %v763
        %v796 = vcvt.s32.f32 %v764
        %v797 = vcvt.s32.f32 %v765
        %v798 = vcvt.s32.f32 %v766
        %v799 = vcvt.s32.f32 %v767
        %v800 = vcvt.s32.f32 %v768
        %v801 = vcvt.s32.f32 %v769
        %v802 = vcvt.s32.f32 %v770
        %v803 = vcvt.s32.f32 %v771
        %v804 = vcvt.s32.f32 %v772
        %v805 = vcvt.s32.f32 %v773
        %v806 = vcvt.s32.f32 %v774
        %v807 = vcvt.s32.f32 %v775
        %v808 = vcvt.s32.f32 %v776
        %v809 = vcvt.s32.f32 %v777
        %v810 = vcvt.s32.f32 %v778
        %v811 = vcvt.s32.f32 %v779
        %v812 = vcvt.s32.f32 %v780
        %v813 = vcvt.s32.f32 %v781
        %v814 = vcvt.s32.f32 %v782
        %v815 = vcvt.s32.f32 %v783
        %v816 = vcvt.s32.f32 %v784
        %v817 = vcvt.s32.f32 %v785
        %v818 = vcvt.s32.f32 %v786
        %v819 = vsub.f32 %v787, 1.0
        %v820 = vsub.f32 %v788, 1.0
        %v821 = vsub.f32 %v789, 1.0
        %v822 = vsub.f32 %v790, 1.0
        %v823 = vsub.f32 %v791, 1.0
        %v824 = vsub.f32 %v792, 1.0
        %v825 = vsub.f32 %v793, 1.0
        %v826 = vsub.f32 %v794, 1.0
        %v827 = vsub.f32 %v795, 1.0
        %v828 = vsub.f32 %v796, 1.0
        %v829 = vsub.f32 %v797, 1.0
        %v830 = vsub.f32 %v798, 1.0
        %v831 = vsub.f32 %v799, 1.0
        %v832 = vsub.f32 %v800, 1.0
        %v833 = vsub.f32 %v801, 1.0
        %v834 = vsub.f32 %v802, 1.0
        %v835 = vsub.f32 %v803, 1.0
        %v836 = vsub.f32 %v804, 1.0
        %v837 = vsub.f32 %v805, 1.0
        %v838 = vsub.f32 %v806, 1.0
        %v839 = vsub.f32 %v807, 1.0
        %v840 = vsub.f32 %v808, 1.0
        %v841 = vsub.f32 %v809, 1.0
        %v842 = vsub.f32 %v810, 1.0
        %v843 = vsub.f32 %v811, 1.0
        %v844 = vsub.f32 %v812, 1.0
        %v845 = vsub.f32 %v813, 1.0
        %v846 = vsub.f32 %v814, 1.0
        %v847 = vsub.f32 %v815, 1.0
        %v848 = vsub.f32 %v816, 1.0
        %v849 = vsub.f32 %v817, 1.0
        %v850 = vsub.f32 %v818, 1.0
        %v851 = vmul.f32 %v819, 1e+30
        %v852 = vmul.f32 %v820, 1e+30
        %v853 = vmul.f32 %v821, 1e+30
        %v854 = vmul.f32 %v822, 1e+30
        %v855 = vmul.f32 %v823, 1e+30
        %v856 = vmul.f32 %v824, 1e+30
        %v857 = vmul.f32 %v825, 1e+30
        %v858 = vmul.f32 %v826, 1e+30
        %v859 = vmul.f32 %v827, 1e+30
        %v860 = vmul.f32 %v828, 1e+30
        %v861 = vmul.f32 %v829, 1e+30
        %v862 = vmul.f32 %v830, 1e+30
        %v863 = vmul.f32 %v831, 1e+30
        %v864 = vmul.f32 %v832, 1e+30
        %v865 = vmul.f32 %v833, 1e+30
        %v866 = vmul.f32 %v834, 1e+30
        %v867 = vmul.f32 %v835, 1e+30
        %v868 = vmul.f32 %v836, 1e+30
        %v869 = vmul.f32 %v837, 1e+30
        %v870 = vmul.f32 %v838, 1e+30
        %v871 = vmul.f32 %v839, 1e+30
        %v872 = vmul.f32 %v840, 1e+30
        %v873 = vmul.f32 %v841, 1e+30
        %v874 = vmul.f32 %v842, 1e+30
        %v875 = vmul.f32 %v843, 1e+30
        %v876 = vmul.f32 %v844, 1e+30
        %v877 = vmul.f32 %v845, 1e+30
        %v878 = vmul.f32 %v846, 1e+30
        %v879 = vmul.f32 %v847, 1e+30
        %v880 = vmul.f32 %v848, 1e+30
        %v881 = vmul.f32 %v849, 1e+30
        %v882 = vmul.f32 %v850, 1e+30
        %883 = vst [vmem:[#allocation2] sm:$0xff] %v851
        %884 = vst [vmem:[#allocation2 + $0x8] sm:$0xff] %v852
        %885 = vst [vmem:[#allocation2 + $0x10] sm:$0xff] %v853
        %886 = vst [vmem:[#allocation2 + $0x18] sm:$0xff] %v854
        %887 = vst [vmem:[#allocation2 + $0x20] sm:$0xff] %v855
        %888 = vst [vmem:[#allocation2 + $0x28] sm:$0xff] %v856
        %889 = vst [vmem:[#allocation2 + $0x30] sm:$0xff] %v857
        %890 = vst [vmem:[#allocation2 + $0x38] sm:$0xff] %v858
        %891 = vst [vmem:[#allocation2 + $0x40] sm:$0xff] %v859
        %892 = vst [vmem:[#allocation2 + $0x48] sm:$0xff] %v860
        %893 = vst [vmem:[#allocation2 + $0x50] sm:$0xff] %v861
        %894 = vst [vmem:[#allocation2 + $0x58] sm:$0xff] %v862
        %895 = vst [vmem:[#allocation2 + $0x60] sm:$0xff] %v863
        %896 = vst [vmem:[#allocation2 + $0x68] sm:$0xff] %v864
        %897 = vst [vmem:[#allocation2 + $0x70] sm:$0xff] %v865
        %898 = vst [vmem:[#allocation2 + $0x78] sm:$0xff] %v866
        %899 = vst [vmem:[#allocation2 + $0x80] sm:$0xff] %v867
        %900 = vst [vmem:[#allocation2 + $0x88] sm:$0xff] %v868
        %901 = vst [vmem:[#allocation2 + $0x90] sm:$0xff] %v869
        %902 = vst [vmem:[#allocation2 + $0x98] sm:$0xff] %v870
        %903 = vst [vmem:[#allocation2 + $0xa0] sm:$0xff] %v871
        %904 = vst [vmem:[#allocation2 + $0xa8] sm:$0xff] %v872
        %905 = vst [vmem:[#allocation2 + $0xb0] sm:$0xff] %v873
        %906 = vst [vmem:[#allocation2 + $0xb8] sm:$0xff] %v874
        %907 = vst [vmem:[#allocation2 + $0xc0] sm:$0xff] %v875
        %908 = vst [vmem:[#allocation2 + $0xc8] sm:$0xff] %v876
        %909 = vst [vmem:[#allocation2 + $0xd0] sm:$0xff] %v877
        %910 = vst [vmem:[#allocation2 + $0xd8] sm:$0xff] %v878
        %911 = vst [vmem:[#allocation2 + $0xe0] sm:$0xff] %v879
        %912 = vst [vmem:[#allocation2 + $0xe8] sm:$0xff] %v880
        %913 = vst [vmem:[#allocation2 + $0xf0] sm:$0xff] %v881
        %914 = vst [vmem:[#allocation2 + $0xf8] sm:$0xff] %v882
        %v915 = vld [vmem:[%s5] sm:$0xf]
        %v916 = vld [vmem:[%s500] sm:$0xff]
        %v917 = vld [vmem:[%s500 + $0x8] sm:$0xff]
        %v918 = vld [vmem:[%s500 + $0x10] sm:$0xff]
        %v919 = vld [vmem:[%s500 + $0x18] sm:$0xff]
        %v920 = vld [vmem:[%s500 + $0x20] sm:$0xff]
        %v921 = vld [vmem:[%s500 + $0x28] sm:$0xff]
        %v922 = vld [vmem:[%s500 + $0x30] sm:$0xff]
        %v923 = vld [vmem:[%s500 + $0x38] sm:$0xff]
        %v924 = vld [vmem:[%s500 + $0x40] sm:$0xff]
        %v925 = vld [vmem:[%s500 + $0x48] sm:$0xff]
        %v926 = vld [vmem:[%s500 + $0x50] sm:$0xff]
        %v927 = vld [vmem:[%s500 + $0x58] sm:$0xff]
        %v928 = vld [vmem:[%s500 + $0x60] sm:$0xff]
        %v929 = vld [vmem:[%s500 + $0x68] sm:$0xff]
        %v930 = vld [vmem:[%s500 + $0x70] sm:$0xff]
        %v931 = vld [vmem:[%s500 + $0x78] sm:$0xff]
        %v932 = vld [vmem:[%s506] sm:$0xff]
        %v933 = vld [vmem:[%s506 + $0x8] sm:$0xff]
        %v934 = vld [vmem:[%s506 + $0x10] sm:$0xff]
        %v935 = vld [vmem:[%s506 + $0x18] sm:$0xff]
        %v936 = vld [vmem:[%s506 + $0x20] sm:$0xff]
        %v937 = vld [vmem:[%s506 + $0x28] sm:$0xff]
        %v938 = vld [vmem:[%s506 + $0x30] sm:$0xff]
        %v939 = vld [vmem:[%s506 + $0x38] sm:$0xff]
        %v940 = vld [vmem:[%s506 + $0x40] sm:$0xff]
        %v941 = vld [vmem:[%s506 + $0x48] sm:$0xff]
        %v942 = vld [vmem:[%s506 + $0x50] sm:$0xff]
        %v943 = vld [vmem:[%s506 + $0x58] sm:$0xff]
        %v944 = vld [vmem:[%s506 + $0x60] sm:$0xff]
        %v945 = vld [vmem:[%s506 + $0x68] sm:$0xff]
        %v946 = vld [vmem:[%s506 + $0x70] sm:$0xff]
        %v947 = vld [vmem:[%s506 + $0x78] sm:$0xff]
        %v948 = vld [vmem:[%s8] sm:$0xf]
        loop: start=0, step=1, limit=32
        $region99: #{tpu_custom_call.1} parent=93 // loop_pre_header
          _
        $region100: #{tpu_custom_call.1} parent=93 // loop_header
          %s950 = sphi 0, %s954
          %p951 = scmp.ge.s32.totalorder %s950, 32
          %v955 = vphi -1e+30, %v1971
          %v956 = vphi -1e+30, %v1972
          %v957 = vphi -1e+30, %v1973
          %v958 = vphi -1e+30, %v1974
          %v959 = vphi -1e+30, %v1975
          %v960 = vphi -1e+30, %v1976
          %v961 = vphi -1e+30, %v1977
          %v962 = vphi -1e+30, %v1978
          %v963 = vphi -1e+30, %v1979
          %v964 = vphi -1e+30, %v1980
          %v965 = vphi -1e+30, %v1981
          %v966 = vphi -1e+30, %v1982
          %v967 = vphi -1e+30, %v1983
          %v968 = vphi -1e+30, %v1984
          %v969 = vphi -1e+30, %v1985
          %v970 = vphi -1e+30, %v1986
        $region101: #{tpu_custom_call.1} parent=93 // loop_header_branch
          %953 = sbr.rel (%p951) target = $region105
        $region102: #{tpu_custom_call.1} parent=93 // loop_body
          %s971 = smul.u32 %s950, 8
          %s972 = scalar_lea.vmem %s4, %s971
          %v973 = vld [vmem:[%s972] sm:$0xff]
          %s974 = scalar_lea.vmem [#allocation2], %s971
          %v975 = vld [vmem:[%s974] sm:$0xff]
          %v977 = vcombine.high %v973, %v973
          %v979 = vunpack.c.l.s4 1966171168
          %v980 = vunpack.c.0.s8 %v979
          %v981 = vlaneseq
          %v982 = vshrl.u32 %v981, 7
          %v983 = vsub.s32 %v980, %v982
          %v984 = vrot.slane %v973, %v983
          %v986 = vunpack.c.l.s4 1966171168
          %v987 = vunpack.c.0.s8 %v986
          %v988 = vlaneseq
          %v989 = vshrl.u32 %v988, 7
          %v990 = vsub.s32 %v987, %v989
          %v991 = vrot.slane %v977, %v990
          %v992 = vcombine.high %v984, %v984
          %v993 = vcombine.high %v991, %v991
          %v995 = vunpack.c.l.s4 1966171168
          %v996 = vunpack.c.0.s8 %v995
          %v997 = vlaneseq
          %v998 = vshrl.u32 %v997, 7
          %v999 = vsub.s32 %v996, %v998
          %v1000 = vrot.slane %v984, %v999
          %v1002 = vunpack.c.l.s4 1966171168
          %v1003 = vunpack.c.0.s8 %v1002
          %v1004 = vlaneseq
          %v1005 = vshrl.u32 %v1004, 7
          %v1006 = vsub.s32 %v1003, %v1005
          %v1007 = vrot.slane %v991, %v1006
          %v1009 = vunpack.c.l.s4 1966171168
          %v1010 = vunpack.c.0.s8 %v1009
          %v1011 = vlaneseq
          %v1012 = vshrl.u32 %v1011, 7
          %v1013 = vsub.s32 %v1010, %v1012
          %v1014 = vrot.slane %v992, %v1013
          %v1016 = vunpack.c.l.s4 1966171168
          %v1017 = vunpack.c.0.s8 %v1016
          %v1018 = vlaneseq
          %v1019 = vshrl.u32 %v1018, 7
          %v1020 = vsub.s32 %v1017, %v1019
          %v1021 = vrot.slane %v993, %v1020
          %v1022 = vcombine.high %v1000, %v1000
          %v1023 = vcombine.high %v1007, %v1007
          %v1024 = vcombine.high %v1014, %v1014
          %v1025 = vcombine.high %v1021, %v1021
          %v1026 = vlaneseq
          %v1027 = vshrl.u32 %v1026, 7
          %v1028 = vsub.s32 0, %v1027
          %v1029 = vrot.slane %v975, %v1028
          %1031 = vbcast.lane.b32.xlu0 %v1029, 256
          %v1032 = vpop.permute.xlu0 %1031
          %s1034 = sor.u32 256, 8
          %1035 = vbcast.lane.b32.xlu0 %v1029, %s1034
          %v1036 = vpop.permute.xlu0 %1035
          %s1038 = sor.u32 256, 16
          %1039 = vbcast.lane.b32.xlu0 %v1029, %s1038
          %v1040 = vpop.permute.xlu0 %1039
          %s1042 = sor.u32 256, 24
          %1043 = vbcast.lane.b32.xlu0 %v1029, %s1042
          %v1044 = vpop.permute.xlu0 %1043
          %s1046 = sor.u32 256, 32
          %1047 = vbcast.lane.b32.xlu0 %v1029, %s1046
          %v1048 = vpop.permute.xlu0 %1047
          %s1050 = sor.u32 256, 40
          %1051 = vbcast.lane.b32.xlu0 %v1029, %s1050
          %v1052 = vpop.permute.xlu0 %1051
          %s1054 = sor.u32 256, 48
          %1055 = vbcast.lane.b32.xlu0 %v1029, %s1054
          %v1056 = vpop.permute.xlu0 %1055
          %s1058 = sor.u32 256, 56
          %1059 = vbcast.lane.b32.xlu0 %v1029, %s1058
          %v1060 = vpop.permute.xlu0 %1059
          %s1062 = sor.u32 256, 64
          %1063 = vbcast.lane.b32.xlu0 %v1029, %s1062
          %v1064 = vpop.permute.xlu0 %1063
          %s1066 = sor.u32 256, 72
          %1067 = vbcast.lane.b32.xlu0 %v1029, %s1066
          %v1068 = vpop.permute.xlu0 %1067
          %s1070 = sor.u32 256, 80
          %1071 = vbcast.lane.b32.xlu0 %v1029, %s1070
          %v1072 = vpop.permute.xlu0 %1071
          %s1074 = sor.u32 256, 88
          %1075 = vbcast.lane.b32.xlu0 %v1029, %s1074
          %v1076 = vpop.permute.xlu0 %1075
          %s1078 = sor.u32 256, 96
          %1079 = vbcast.lane.b32.xlu0 %v1029, %s1078
          %v1080 = vpop.permute.xlu0 %1079
          %s1082 = sor.u32 256, 104
          %1083 = vbcast.lane.b32.xlu0 %v1029, %s1082
          %v1084 = vpop.permute.xlu0 %1083
          %s1086 = sor.u32 256, 112
          %1087 = vbcast.lane.b32.xlu0 %v1029, %s1086
          %v1088 = vpop.permute.xlu0 %1087
          %s1090 = sor.u32 256, 120
          %1091 = vbcast.lane.b32.xlu0 %v1029, %s1090
          %v1092 = vpop.permute.xlu0 %1091
          %v1093 = vlaneseq
          %v1094 = vshrl.u32 %v1093, 7
          %v1095 = vsub.s32 1, %v1094
          %v1096 = vrot.slane %v975, %v1095
          %1098 = vbcast.lane.b32.xlu0 %v1096, 256
          %v1099 = vpop.permute.xlu0 %1098
          %s1101 = sor.u32 256, 8
          %1102 = vbcast.lane.b32.xlu0 %v1096, %s1101
          %v1103 = vpop.permute.xlu0 %1102
          %s1105 = sor.u32 256, 16
          %1106 = vbcast.lane.b32.xlu0 %v1096, %s1105
          %v1107 = vpop.permute.xlu0 %1106
          %s1109 = sor.u32 256, 24
          %1110 = vbcast.lane.b32.xlu0 %v1096, %s1109
          %v1111 = vpop.permute.xlu0 %1110
          %s1113 = sor.u32 256, 32
          %1114 = vbcast.lane.b32.xlu0 %v1096, %s1113
          %v1115 = vpop.permute.xlu0 %1114
          %s1117 = sor.u32 256, 40
          %1118 = vbcast.lane.b32.xlu0 %v1096, %s1117
          %v1119 = vpop.permute.xlu0 %1118
          %s1121 = sor.u32 256, 48
          %1122 = vbcast.lane.b32.xlu0 %v1096, %s1121
          %v1123 = vpop.permute.xlu0 %1122
          %s1125 = sor.u32 256, 56
          %1126 = vbcast.lane.b32.xlu0 %v1096, %s1125
          %v1127 = vpop.permute.xlu0 %1126
          %s1129 = sor.u32 256, 64
          %1130 = vbcast.lane.b32.xlu0 %v1096, %s1129
          %v1131 = vpop.permute.xlu0 %1130
          %s1133 = sor.u32 256, 72
          %1134 = vbcast.lane.b32.xlu0 %v1096, %s1133
          %v1135 = vpop.permute.xlu0 %1134
          %s1137 = sor.u32 256, 80
          %1138 = vbcast.lane.b32.xlu0 %v1096, %s1137
          %v1139 = vpop.permute.xlu0 %1138
          %s1141 = sor.u32 256, 88
          %1142 = vbcast.lane.b32.xlu0 %v1096, %s1141
          %v1143 = vpop.permute.xlu0 %1142
          %s1145 = sor.u32 256, 96
          %1146 = vbcast.lane.b32.xlu0 %v1096, %s1145
          %v1147 = vpop.permute.xlu0 %1146
          %s1149 = sor.u32 256, 104
          %1150 = vbcast.lane.b32.xlu0 %v1096, %s1149
          %v1151 = vpop.permute.xlu0 %1150
          %s1153 = sor.u32 256, 112
          %1154 = vbcast.lane.b32.xlu0 %v1096, %s1153
          %v1155 = vpop.permute.xlu0 %1154
          %s1157 = sor.u32 256, 120
          %1158 = vbcast.lane.b32.xlu0 %v1096, %s1157
          %v1159 = vpop.permute.xlu0 %1158
          %v1160 = vlaneseq
          %v1161 = vshrl.u32 %v1160, 7
          %v1162 = vsub.s32 2, %v1161
          %v1163 = vrot.slane %v975, %v1162
          %1165 = vbcast.lane.b32.xlu0 %v1163, 256
          %v1166 = vpop.permute.xlu0 %1165
          %s1168 = sor.u32 256, 8
          %1169 = vbcast.lane.b32.xlu0 %v1163, %s1168
          %v1170 = vpop.permute.xlu0 %1169
          %s1172 = sor.u32 256, 16
          %1173 = vbcast.lane.b32.xlu0 %v1163, %s1172
          %v1174 = vpop.permute.xlu0 %1173
          %s1176 = sor.u32 256, 24
          %1177 = vbcast.lane.b32.xlu0 %v1163, %s1176
          %v1178 = vpop.permute.xlu0 %1177
          %s1180 = sor.u32 256, 32
          %1181 = vbcast.lane.b32.xlu0 %v1163, %s1180
          %v1182 = vpop.permute.xlu0 %1181
          %s1184 = sor.u32 256, 40
          %1185 = vbcast.lane.b32.xlu0 %v1163, %s1184
          %v1186 = vpop.permute.xlu0 %1185
          %s1188 = sor.u32 256, 48
          %1189 = vbcast.lane.b32.xlu0 %v1163, %s1188
          %v1190 = vpop.permute.xlu0 %1189
          %s1192 = sor.u32 256, 56
          %1193 = vbcast.lane.b32.xlu0 %v1163, %s1192
          %v1194 = vpop.permute.xlu0 %1193
          %s1196 = sor.u32 256, 64
          %1197 = vbcast.lane.b32.xlu0 %v1163, %s1196
          %v1198 = vpop.permute.xlu0 %1197
          %s1200 = sor.u32 256, 72
          %1201 = vbcast.lane.b32.xlu0 %v1163, %s1200
          %v1202 = vpop.permute.xlu0 %1201
          %s1204 = sor.u32 256, 80
          %1205 = vbcast.lane.b32.xlu0 %v1163, %s1204
          %v1206 = vpop.permute.xlu0 %1205
          %s1208 = sor.u32 256, 88
          %1209 = vbcast.lane.b32.xlu0 %v1163, %s1208
          %v1210 = vpop.permute.xlu0 %1209
          %s1212 = sor.u32 256, 96
          %1213 = vbcast.lane.b32.xlu0 %v1163, %s1212
          %v1214 = vpop.permute.xlu0 %1213
          %s1216 = sor.u32 256, 104
          %1217 = vbcast.lane.b32.xlu0 %v1163, %s1216
          %v1218 = vpop.permute.xlu0 %1217
          %s1220 = sor.u32 256, 112
          %1221 = vbcast.lane.b32.xlu0 %v1163, %s1220
          %v1222 = vpop.permute.xlu0 %1221
          %s1224 = sor.u32 256, 120
          %1225 = vbcast.lane.b32.xlu0 %v1163, %s1224
          %v1226 = vpop.permute.xlu0 %1225
          %v1227 = vlaneseq
          %v1228 = vshrl.u32 %v1227, 7
          %v1229 = vsub.s32 3, %v1228
          %v1230 = vrot.slane %v975, %v1229
          %1232 = vbcast.lane.b32.xlu0 %v1230, 256
          %v1233 = vpop.permute.xlu0 %1232
          %s1235 = sor.u32 256, 8
          %1236 = vbcast.lane.b32.xlu0 %v1230, %s1235
          %v1237 = vpop.permute.xlu0 %1236
          %s1239 = sor.u32 256, 16
          %1240 = vbcast.lane.b32.xlu0 %v1230, %s1239
          %v1241 = vpop.permute.xlu0 %1240
          %s1243 = sor.u32 256, 24
          %1244 = vbcast.lane.b32.xlu0 %v1230, %s1243
          %v1245 = vpop.permute.xlu0 %1244
          %s1247 = sor.u32 256, 32
          %1248 = vbcast.lane.b32.xlu0 %v1230, %s1247
          %v1249 = vpop.permute.xlu0 %1248
          %s1251 = sor.u32 256, 40
          %1252 = vbcast.lane.b32.xlu0 %v1230, %s1251
          %v1253 = vpop.permute.xlu0 %1252
          %s1255 = sor.u32 256, 48
          %1256 = vbcast.lane.b32.xlu0 %v1230, %s1255
          %v1257 = vpop.permute.xlu0 %1256
          %s1259 = sor.u32 256, 56
          %1260 = vbcast.lane.b32.xlu0 %v1230, %s1259
          %v1261 = vpop.permute.xlu0 %1260
          %s1263 = sor.u32 256, 64
          %1264 = vbcast.lane.b32.xlu0 %v1230, %s1263
          %v1265 = vpop.permute.xlu0 %1264
          %s1267 = sor.u32 256, 72
          %1268 = vbcast.lane.b32.xlu0 %v1230, %s1267
          %v1269 = vpop.permute.xlu0 %1268
          %s1271 = sor.u32 256, 80
          %1272 = vbcast.lane.b32.xlu0 %v1230, %s1271
          %v1273 = vpop.permute.xlu0 %1272
          %s1275 = sor.u32 256, 88
          %1276 = vbcast.lane.b32.xlu0 %v1230, %s1275
          %v1277 = vpop.permute.xlu0 %1276
          %s1279 = sor.u32 256, 96
          %1280 = vbcast.lane.b32.xlu0 %v1230, %s1279
          %v1281 = vpop.permute.xlu0 %1280
          %s1283 = sor.u32 256, 104
          %1284 = vbcast.lane.b32.xlu0 %v1230, %s1283
          %v1285 = vpop.permute.xlu0 %1284
          %s1287 = sor.u32 256, 112
          %1288 = vbcast.lane.b32.xlu0 %v1230, %s1287
          %v1289 = vpop.permute.xlu0 %1288
          %s1291 = sor.u32 256, 120
          %1292 = vbcast.lane.b32.xlu0 %v1230, %s1291
          %v1293 = vpop.permute.xlu0 %1292
          %v1294 = vlaneseq
          %v1295 = vshrl.u32 %v1294, 7
          %v1296 = vsub.s32 4, %v1295
          %v1297 = vrot.slane %v975, %v1296
          %1299 = vbcast.lane.b32.xlu0 %v1297, 256
          %v1300 = vpop.permute.xlu0 %1299
          %s1302 = sor.u32 256, 8
          %1303 = vbcast.lane.b32.xlu0 %v1297, %s1302
          %v1304 = vpop.permute.xlu0 %1303
          %s1306 = sor.u32 256, 16
          %1307 = vbcast.lane.b32.xlu0 %v1297, %s1306
          %v1308 = vpop.permute.xlu0 %1307
          %s1310 = sor.u32 256, 24
          %1311 = vbcast.lane.b32.xlu0 %v1297, %s1310
          %v1312 = vpop.permute.xlu0 %1311
          %s1314 = sor.u32 256, 32
          %1315 = vbcast.lane.b32.xlu0 %v1297, %s1314
          %v1316 = vpop.permute.xlu0 %1315
          %s1318 = sor.u32 256, 40
          %1319 = vbcast.lane.b32.xlu0 %v1297, %s1318
          %v1320 = vpop.permute.xlu0 %1319
          %s1322 = sor.u32 256, 48
          %1323 = vbcast.lane.b32.xlu0 %v1297, %s1322
          %v1324 = vpop.permute.xlu0 %1323
          %s1326 = sor.u32 256, 56
          %1327 = vbcast.lane.b32.xlu0 %v1297, %s1326
          %v1328 = vpop.permute.xlu0 %1327
          %s1330 = sor.u32 256, 64
          %1331 = vbcast.lane.b32.xlu0 %v1297, %s1330
          %v1332 = vpop.permute.xlu0 %1331
          %s1334 = sor.u32 256, 72
          %1335 = vbcast.lane.b32.xlu0 %v1297, %s1334
          %v1336 = vpop.permute.xlu0 %1335
          %s1338 = sor.u32 256, 80
          %1339 = vbcast.lane.b32.xlu0 %v1297, %s1338
          %v1340 = vpop.permute.xlu0 %1339
          %s1342 = sor.u32 256, 88
          %1343 = vbcast.lane.b32.xlu0 %v1297, %s1342
          %v1344 = vpop.permute.xlu0 %1343
          %s1346 = sor.u32 256, 96
          %1347 = vbcast.lane.b32.xlu0 %v1297, %s1346
          %v1348 = vpop.permute.xlu0 %1347
          %s1350 = sor.u32 256, 104
          %1351 = vbcast.lane.b32.xlu0 %v1297, %s1350
          %v1352 = vpop.permute.xlu0 %1351
          %s1354 = sor.u32 256, 112
          %1355 = vbcast.lane.b32.xlu0 %v1297, %s1354
          %v1356 = vpop.permute.xlu0 %1355
          %s1358 = sor.u32 256, 120
          %1359 = vbcast.lane.b32.xlu0 %v1297, %s1358
          %v1360 = vpop.permute.xlu0 %1359
          %v1361 = vlaneseq
          %v1362 = vshrl.u32 %v1361, 7
          %v1363 = vsub.s32 5, %v1362
          %v1364 = vrot.slane %v975, %v1363
          %1366 = vbcast.lane.b32.xlu0 %v1364, 256
          %v1367 = vpop.permute.xlu0 %1366
          %s1369 = sor.u32 256, 8
          %1370 = vbcast.lane.b32.xlu0 %v1364, %s1369
          %v1371 = vpop.permute.xlu0 %1370
          %s1373 = sor.u32 256, 16
          %1374 = vbcast.lane.b32.xlu0 %v1364, %s1373
          %v1375 = vpop.permute.xlu0 %1374
          %s1377 = sor.u32 256, 24
          %1378 = vbcast.lane.b32.xlu0 %v1364, %s1377
          %v1379 = vpop.permute.xlu0 %1378
          %s1381 = sor.u32 256, 32
          %1382 = vbcast.lane.b32.xlu0 %v1364, %s1381
          %v1383 = vpop.permute.xlu0 %1382
          %s1385 = sor.u32 256, 40
          %1386 = vbcast.lane.b32.xlu0 %v1364, %s1385
          %v1387 = vpop.permute.xlu0 %1386
          %s1389 = sor.u32 256, 48
          %1390 = vbcast.lane.b32.xlu0 %v1364, %s1389
          %v1391 = vpop.permute.xlu0 %1390
          %s1393 = sor.u32 256, 56
          %1394 = vbcast.lane.b32.xlu0 %v1364, %s1393
          %v1395 = vpop.permute.xlu0 %1394
          %s1397 = sor.u32 256, 64
          %1398 = vbcast.lane.b32.xlu0 %v1364, %s1397
          %v1399 = vpop.permute.xlu0 %1398
          %s1401 = sor.u32 256, 72
          %1402 = vbcast.lane.b32.xlu0 %v1364, %s1401
          %v1403 = vpop.permute.xlu0 %1402
          %s1405 = sor.u32 256, 80
          %1406 = vbcast.lane.b32.xlu0 %v1364, %s1405
          %v1407 = vpop.permute.xlu0 %1406
          %s1409 = sor.u32 256, 88
          %1410 = vbcast.lane.b32.xlu0 %v1364, %s1409
          %v1411 = vpop.permute.xlu0 %1410
          %s1413 = sor.u32 256, 96
          %1414 = vbcast.lane.b32.xlu0 %v1364, %s1413
          %v1415 = vpop.permute.xlu0 %1414
          %s1417 = sor.u32 256, 104
          %1418 = vbcast.lane.b32.xlu0 %v1364, %s1417
          %v1419 = vpop.permute.xlu0 %1418
          %s1421 = sor.u32 256, 112
          %1422 = vbcast.lane.b32.xlu0 %v1364, %s1421
          %v1423 = vpop.permute.xlu0 %1422
          %s1425 = sor.u32 256, 120
          %1426 = vbcast.lane.b32.xlu0 %v1364, %s1425
          %v1427 = vpop.permute.xlu0 %1426
          %v1428 = vlaneseq
          %v1429 = vshrl.u32 %v1428, 7
          %v1430 = vsub.s32 6, %v1429
          %v1431 = vrot.slane %v975, %v1430
          %1433 = vbcast.lane.b32.xlu0 %v1431, 256
          %v1434 = vpop.permute.xlu0 %1433
          %s1436 = sor.u32 256, 8
          %1437 = vbcast.lane.b32.xlu0 %v1431, %s1436
          %v1438 = vpop.permute.xlu0 %1437
          %s1440 = sor.u32 256, 16
          %1441 = vbcast.lane.b32.xlu0 %v1431, %s1440
          %v1442 = vpop.permute.xlu0 %1441
          %s1444 = sor.u32 256, 24
          %1445 = vbcast.lane.b32.xlu0 %v1431, %s1444
          %v1446 = vpop.permute.xlu0 %1445
          %s1448 = sor.u32 256, 32
          %1449 = vbcast.lane.b32.xlu0 %v1431, %s1448
          %v1450 = vpop.permute.xlu0 %1449
          %s1452 = sor.u32 256, 40
          %1453 = vbcast.lane.b32.xlu0 %v1431, %s1452
          %v1454 = vpop.permute.xlu0 %1453
          %s1456 = sor.u32 256, 48
          %1457 = vbcast.lane.b32.xlu0 %v1431, %s1456
          %v1458 = vpop.permute.xlu0 %1457
          %s1460 = sor.u32 256, 56
          %1461 = vbcast.lane.b32.xlu0 %v1431, %s1460
          %v1462 = vpop.permute.xlu0 %1461
          %s1464 = sor.u32 256, 64
          %1465 = vbcast.lane.b32.xlu0 %v1431, %s1464
          %v1466 = vpop.permute.xlu0 %1465
          %s1468 = sor.u32 256, 72
          %1469 = vbcast.lane.b32.xlu0 %v1431, %s1468
          %v1470 = vpop.permute.xlu0 %1469
          %s1472 = sor.u32 256, 80
          %1473 = vbcast.lane.b32.xlu0 %v1431, %s1472
          %v1474 = vpop.permute.xlu0 %1473
          %s1476 = sor.u32 256, 88
          %1477 = vbcast.lane.b32.xlu0 %v1431, %s1476
          %v1478 = vpop.permute.xlu0 %1477
          %s1480 = sor.u32 256, 96
          %1481 = vbcast.lane.b32.xlu0 %v1431, %s1480
          %v1482 = vpop.permute.xlu0 %1481
          %s1484 = sor.u32 256, 104
          %1485 = vbcast.lane.b32.xlu0 %v1431, %s1484
          %v1486 = vpop.permute.xlu0 %1485
          %s1488 = sor.u32 256, 112
          %1489 = vbcast.lane.b32.xlu0 %v1431, %s1488
          %v1490 = vpop.permute.xlu0 %1489
          %s1492 = sor.u32 256, 120
          %1493 = vbcast.lane.b32.xlu0 %v1431, %s1492
          %v1494 = vpop.permute.xlu0 %1493
          %v1495 = vlaneseq
          %v1496 = vshrl.u32 %v1495, 7
          %v1497 = vsub.s32 7, %v1496
          %v1498 = vrot.slane %v975, %v1497
          %1500 = vbcast.lane.b32.xlu0 %v1498, 256
          %v1501 = vpop.permute.xlu0 %1500
          %s1503 = sor.u32 256, 8
          %1504 = vbcast.lane.b32.xlu0 %v1498, %s1503
          %v1505 = vpop.permute.xlu0 %1504
          %s1507 = sor.u32 256, 16
          %1508 = vbcast.lane.b32.xlu0 %v1498, %s1507
          %v1509 = vpop.permute.xlu0 %1508
          %s1511 = sor.u32 256, 24
          %1512 = vbcast.lane.b32.xlu0 %v1498, %s1511
          %v1513 = vpop.permute.xlu0 %1512
          %s1515 = sor.u32 256, 32
          %1516 = vbcast.lane.b32.xlu0 %v1498, %s1515
          %v1517 = vpop.permute.xlu0 %1516
          %s1519 = sor.u32 256, 40
          %1520 = vbcast.lane.b32.xlu0 %v1498, %s1519
          %v1521 = vpop.permute.xlu0 %1520
          %s1523 = sor.u32 256, 48
          %1524 = vbcast.lane.b32.xlu0 %v1498, %s1523
          %v1525 = vpop.permute.xlu0 %1524
          %s1527 = sor.u32 256, 56
          %1528 = vbcast.lane.b32.xlu0 %v1498, %s1527
          %v1529 = vpop.permute.xlu0 %1528
          %s1531 = sor.u32 256, 64
          %1532 = vbcast.lane.b32.xlu0 %v1498, %s1531
          %v1533 = vpop.permute.xlu0 %1532
          %s1535 = sor.u32 256, 72
          %1536 = vbcast.lane.b32.xlu0 %v1498, %s1535
          %v1537 = vpop.permute.xlu0 %1536
          %s1539 = sor.u32 256, 80
          %1540 = vbcast.lane.b32.xlu0 %v1498, %s1539
          %v1541 = vpop.permute.xlu0 %1540
          %s1543 = sor.u32 256, 88
          %1544 = vbcast.lane.b32.xlu0 %v1498, %s1543
          %v1545 = vpop.permute.xlu0 %1544
          %s1547 = sor.u32 256, 96
          %1548 = vbcast.lane.b32.xlu0 %v1498, %s1547
          %v1549 = vpop.permute.xlu0 %1548
          %s1551 = sor.u32 256, 104
          %1552 = vbcast.lane.b32.xlu0 %v1498, %s1551
          %v1553 = vpop.permute.xlu0 %1552
          %s1555 = sor.u32 256, 112
          %1556 = vbcast.lane.b32.xlu0 %v1498, %s1555
          %v1557 = vpop.permute.xlu0 %1556
          %s1559 = sor.u32 256, 120
          %1560 = vbcast.lane.b32.xlu0 %v1498, %s1559
          %v1561 = vpop.permute.xlu0 %1560
          %v1562 = vlaneseq
          %v1563 = vshrl.u32 %v1562, 7
          %v1564 = vsub.s32 0, %v1563
          %v1565 = vrot.slane %v1000, %v1564
          %v1566 = vlaneseq
          %v1567 = vshrl.u32 %v1566, 7
          %v1568 = vsub.s32 0, %v1567
          %v1569 = vrot.slane %v1014, %v1568
          %v1570 = vlaneseq
          %v1571 = vshrl.u32 %v1570, 7
          %v1572 = vsub.s32 0, %v1571
          %v1573 = vrot.slane %v1022, %v1572
          %v1574 = vlaneseq
          %v1575 = vshrl.u32 %v1574, 7
          %v1576 = vsub.s32 0, %v1575
          %v1577 = vrot.slane %v1024, %v1576
          %v1578 = vlaneseq
          %v1579 = vshrl.u32 %v1578, 7
          %v1580 = vsub.s32 0, %v1579
          %v1581 = vrot.slane %v1007, %v1580
          %v1582 = vlaneseq
          %v1583 = vshrl.u32 %v1582, 7
          %v1584 = vsub.s32 0, %v1583
          %v1585 = vrot.slane %v1021, %v1584
          %v1586 = vlaneseq
          %v1587 = vshrl.u32 %v1586, 7
          %v1588 = vsub.s32 0, %v1587
          %v1589 = vrot.slane %v1023, %v1588
          %v1590 = vlaneseq
          %v1591 = vshrl.u32 %v1590, 7
          %v1592 = vsub.s32 0, %v1591
          %v1593 = vrot.slane %v1025, %v1592
          %v1602 = vadd.f32 %v1565, %v1032
          %v1603 = vadd.f32 %v1565, %v1036
          %v1604 = vadd.f32 %v1565, %v1040
          %v1605 = vadd.f32 %v1565, %v1044
          %v1606 = vadd.f32 %v1565, %v1048
          %v1607 = vadd.f32 %v1565, %v1052
          %v1608 = vadd.f32 %v1565, %v1056
          %v1609 = vadd.f32 %v1565, %v1060
          %v1610 = vadd.f32 %v1565, %v1064
          %v1611 = vadd.f32 %v1565, %v1068
          %v1612 = vadd.f32 %v1565, %v1072
          %v1613 = vadd.f32 %v1565, %v1076
          %v1614 = vadd.f32 %v1565, %v1080
          %v1615 = vadd.f32 %v1565, %v1084
          %v1616 = vadd.f32 %v1565, %v1088
          %v1617 = vadd.f32 %v1565, %v1092
          %v1618 = vadd.f32 %v1569, %v1099
          %v1619 = vadd.f32 %v1569, %v1103
          %v1620 = vadd.f32 %v1569, %v1107
          %v1621 = vadd.f32 %v1569, %v1111
          %v1622 = vadd.f32 %v1569, %v1115
          %v1623 = vadd.f32 %v1569, %v1119
          %v1624 = vadd.f32 %v1569, %v1123
          %v1625 = vadd.f32 %v1569, %v1127
          %v1626 = vadd.f32 %v1569, %v1131
          %v1627 = vadd.f32 %v1569, %v1135
          %v1628 = vadd.f32 %v1569, %v1139
          %v1629 = vadd.f32 %v1569, %v1143
          %v1630 = vadd.f32 %v1569, %v1147
          %v1631 = vadd.f32 %v1569, %v1151
          %v1632 = vadd.f32 %v1569, %v1155
          %v1633 = vadd.f32 %v1569, %v1159
          %v1634 = vadd.f32 %v1573, %v1166
          %v1635 = vadd.f32 %v1573, %v1170
          %v1636 = vadd.f32 %v1573, %v1174
          %v1637 = vadd.f32 %v1573, %v1178
          %v1638 = vadd.f32 %v1573, %v1182
          %v1639 = vadd.f32 %v1573, %v1186
          %v1640 = vadd.f32 %v1573, %v1190
          %v1641 = vadd.f32 %v1573, %v1194
          %v1642 = vadd.f32 %v1573, %v1198
          %v1643 = vadd.f32 %v1573, %v1202
          %v1644 = vadd.f32 %v1573, %v1206
          %v1645 = vadd.f32 %v1573, %v1210
          %v1646 = vadd.f32 %v1573, %v1214
          %v1647 = vadd.f32 %v1573, %v1218
          %v1648 = vadd.f32 %v1573, %v1222
          %v1649 = vadd.f32 %v1573, %v1226
          %v1650 = vadd.f32 %v1577, %v1233
          %v1651 = vadd.f32 %v1577, %v1237
          %v1652 = vadd.f32 %v1577, %v1241
          %v1653 = vadd.f32 %v1577, %v1245
          %v1654 = vadd.f32 %v1577, %v1249
          %v1655 = vadd.f32 %v1577, %v1253
          %v1656 = vadd.f32 %v1577, %v1257
          %v1657 = vadd.f32 %v1577, %v1261
          %v1658 = vadd.f32 %v1577, %v1265
          %v1659 = vadd.f32 %v1577, %v1269
          %v1660 = vadd.f32 %v1577, %v1273
          %v1661 = vadd.f32 %v1577, %v1277
          %v1662 = vadd.f32 %v1577, %v1281
          %v1663 = vadd.f32 %v1577, %v1285
          %v1664 = vadd.f32 %v1577, %v1289
          %v1665 = vadd.f32 %v1577, %v1293
          %v1666 = vadd.f32 %v1581, %v1300
          %v1667 = vadd.f32 %v1581, %v1304
          %v1668 = vadd.f32 %v1581, %v1308
          %v1669 = vadd.f32 %v1581, %v1312
          %v1670 = vadd.f32 %v1581, %v1316
          %v1671 = vadd.f32 %v1581, %v1320
          %v1672 = vadd.f32 %v1581, %v1324
          %v1673 = vadd.f32 %v1581, %v1328
          %v1674 = vadd.f32 %v1581, %v1332
          %v1675 = vadd.f32 %v1581, %v1336
          %v1676 = vadd.f32 %v1581, %v1340
          %v1677 = vadd.f32 %v1581, %v1344
          %v1678 = vadd.f32 %v1581, %v1348
          %v1679 = vadd.f32 %v1581, %v1352
          %v1680 = vadd.f32 %v1581, %v1356
          %v1681 = vadd.f32 %v1581, %v1360
          %v1682 = vadd.f32 %v1585, %v1367
          %v1683 = vadd.f32 %v1585, %v1371
          %v1684 = vadd.f32 %v1585, %v1375
          %v1685 = vadd.f32 %v1585, %v1379
          %v1686 = vadd.f32 %v1585, %v1383
          %v1687 = vadd.f32 %v1585, %v1387
          %v1688 = vadd.f32 %v1585, %v1391
          %v1689 = vadd.f32 %v1585, %v1395
          %v1690 = vadd.f32 %v1585, %v1399
          %v1691 = vadd.f32 %v1585, %v1403
          %v1692 = vadd.f32 %v1585, %v1407
          %v1693 = vadd.f32 %v1585, %v1411
          %v1694 = vadd.f32 %v1585, %v1415
          %v1695 = vadd.f32 %v1585, %v1419
          %v1696 = vadd.f32 %v1585, %v1423
          %v1697 = vadd.f32 %v1585, %v1427
          %v1698 = vadd.f32 %v1589, %v1434
          %v1699 = vadd.f32 %v1589, %v1438
          %v1700 = vadd.f32 %v1589, %v1442
          %v1701 = vadd.f32 %v1589, %v1446
          %v1702 = vadd.f32 %v1589, %v1450
          %v1703 = vadd.f32 %v1589, %v1454
          %v1704 = vadd.f32 %v1589, %v1458
          %v1705 = vadd.f32 %v1589, %v1462
          %v1706 = vadd.f32 %v1589, %v1466
          %v1707 = vadd.f32 %v1589, %v1470
          %v1708 = vadd.f32 %v1589, %v1474
          %v1709 = vadd.f32 %v1589, %v1478
          %v1710 = vadd.f32 %v1589, %v1482
          %v1711 = vadd.f32 %v1589, %v1486
          %v1712 = vadd.f32 %v1589, %v1490
          %v1713 = vadd.f32 %v1589, %v1494
          %v1714 = vadd.f32 %v1593, %v1501
          %v1715 = vadd.f32 %v1593, %v1505
          %v1716 = vadd.f32 %v1593, %v1509
          %v1717 = vadd.f32 %v1593, %v1513
          %v1718 = vadd.f32 %v1593, %v1517
          %v1719 = vadd.f32 %v1593, %v1521
          %v1720 = vadd.f32 %v1593, %v1525
          %v1721 = vadd.f32 %v1593, %v1529
          %v1722 = vadd.f32 %v1593, %v1533
          %v1723 = vadd.f32 %v1593, %v1537
          %v1724 = vadd.f32 %v1593, %v1541
          %v1725 = vadd.f32 %v1593, %v1545
          %v1726 = vadd.f32 %v1593, %v1549
          %v1727 = vadd.f32 %v1593, %v1553
          %v1728 = vadd.f32 %v1593, %v1557
          %v1729 = vadd.f32 %v1593, %v1561
          %vm1730 = vcmask 523264
          %v1731 = vsel %vm1730, %v1602, -inf
          %v1732 = vsel %vm1730, %v1618, -inf
          %v1733 = vmax.f32 %v1731, %v1732
          %v1734 = vsel %vm1730, %v1634, -inf
          %v1735 = vmax.f32 %v1733, %v1734
          %v1736 = vsel %vm1730, %v1650, -inf
          %v1737 = vmax.f32 %v1735, %v1736
          %v1738 = vsel %vm1730, %v1666, -inf
          %v1739 = vmax.f32 %v1737, %v1738
          %v1740 = vsel %vm1730, %v1682, -inf
          %v1741 = vmax.f32 %v1739, %v1740
          %v1742 = vsel %vm1730, %v1698, -inf
          %v1743 = vmax.f32 %v1741, %v1742
          %v1744 = vsel %vm1730, %v1714, -inf
          %v1745 = vmax.f32 %v1743, %v1744
          %v1746 = vsel %vm1730, %v1603, -inf
          %v1747 = vsel %vm1730, %v1619, -inf
          %v1748 = vmax.f32 %v1746, %v1747
          %v1749 = vsel %vm1730, %v1635, -inf
          %v1750 = vmax.f32 %v1748, %v1749
          %v1751 = vsel %vm1730, %v1651, -inf
          %v1752 = vmax.f32 %v1750, %v1751
          %v1753 = vsel %vm1730, %v1667, -inf
          %v1754 = vmax.f32 %v1752, %v1753
          %v1755 = vsel %vm1730, %v1683, -inf
          %v1756 = vmax.f32 %v1754, %v1755
          %v1757 = vsel %vm1730, %v1699, -inf
          %v1758 = vmax.f32 %v1756, %v1757
          %v1759 = vsel %vm1730, %v1715, -inf
          %v1760 = vmax.f32 %v1758, %v1759
          %v1761 = vsel %vm1730, %v1604, -inf
          %v1762 = vsel %vm1730, %v1620, -inf
          %v1763 = vmax.f32 %v1761, %v1762
          %v1764 = vsel %vm1730, %v1636, -inf
          %v1765 = vmax.f32 %v1763, %v1764
          %v1766 = vsel %vm1730, %v1652, -inf
          %v1767 = vmax.f32 %v1765, %v1766
          %v1768 = vsel %vm1730, %v1668, -inf
          %v1769 = vmax.f32 %v1767, %v1768
          %v1770 = vsel %vm1730, %v1684, -inf
          %v1771 = vmax.f32 %v1769, %v1770
          %v1772 = vsel %vm1730, %v1700, -inf
          %v1773 = vmax.f32 %v1771, %v1772
          %v1774 = vsel %vm1730, %v1716, -inf
          %v1775 = vmax.f32 %v1773, %v1774
          %v1776 = vsel %vm1730, %v1605, -inf
          %v1777 = vsel %vm1730, %v1621, -inf
          %v1778 = vmax.f32 %v1776, %v1777
          %v1779 = vsel %vm1730, %v1637, -inf
          %v1780 = vmax.f32 %v1778, %v1779
          %v1781 = vsel %vm1730, %v1653, -inf
          %v1782 = vmax.f32 %v1780, %v1781
          %v1783 = vsel %vm1730, %v1669, -inf
          %v1784 = vmax.f32 %v1782, %v1783
          %v1785 = vsel %vm1730, %v1685, -inf
          %v1786 = vmax.f32 %v1784, %v1785
          %v1787 = vsel %vm1730, %v1701, -inf
          %v1788 = vmax.f32 %v1786, %v1787
          %v1789 = vsel %vm1730, %v1717, -inf
          %v1790 = vmax.f32 %v1788, %v1789
          %v1791 = vsel %vm1730, %v1606, -inf
          %v1792 = vsel %vm1730, %v1622, -inf
          %v1793 = vmax.f32 %v1791, %v1792
          %v1794 = vsel %vm1730, %v1638, -inf
          %v1795 = vmax.f32 %v1793, %v1794
          %v1796 = vsel %vm1730, %v1654, -inf
          %v1797 = vmax.f32 %v1795, %v1796
          %v1798 = vsel %vm1730, %v1670, -inf
          %v1799 = vmax.f32 %v1797, %v1798
          %v1800 = vsel %vm1730, %v1686, -inf
          %v1801 = vmax.f32 %v1799, %v1800
          %v1802 = vsel %vm1730, %v1702, -inf
          %v1803 = vmax.f32 %v1801, %v1802
          %v1804 = vsel %vm1730, %v1718, -inf
          %v1805 = vmax.f32 %v1803, %v1804
          %v1806 = vsel %vm1730, %v1607, -inf
          %v1807 = vsel %vm1730, %v1623, -inf
          %v1808 = vmax.f32 %v1806, %v1807
          %v1809 = vsel %vm1730, %v1639, -inf
          %v1810 = vmax.f32 %v1808, %v1809
          %v1811 = vsel %vm1730, %v1655, -inf
          %v1812 = vmax.f32 %v1810, %v1811
          %v1813 = vsel %vm1730, %v1671, -inf
          %v1814 = vmax.f32 %v1812, %v1813
          %v1815 = vsel %vm1730, %v1687, -inf
          %v1816 = vmax.f32 %v1814, %v1815
          %v1817 = vsel %vm1730, %v1703, -inf
          %v1818 = vmax.f32 %v1816, %v1817
          %v1819 = vsel %vm1730, %v1719, -inf
          %v1820 = vmax.f32 %v1818, %v1819
          %v1821 = vsel %vm1730, %v1608, -inf
          %v1822 = vsel %vm1730, %v1624, -inf
          %v1823 = vmax.f32 %v1821, %v1822
          %v1824 = vsel %vm1730, %v1640, -inf
          %v1825 = vmax.f32 %v1823, %v1824
          %v1826 = vsel %vm1730, %v1656, -inf
          %v1827 = vmax.f32 %v1825, %v1826
          %v1828 = vsel %vm1730, %v1672, -inf
          %v1829 = vmax.f32 %v1827, %v1828
          %v1830 = vsel %vm1730, %v1688, -inf
          %v1831 = vmax.f32 %v1829, %v1830
          %v1832 = vsel %vm1730, %v1704, -inf
          %v1833 = vmax.f32 %v1831, %v1832
          %v1834 = vsel %vm1730, %v1720, -inf
          %v1835 = vmax.f32 %v1833, %v1834
          %v1836 = vsel %vm1730, %v1609, -inf
          %v1837 = vsel %vm1730, %v1625, -inf
          %v1838 = vmax.f32 %v1836, %v1837
          %v1839 = vsel %vm1730, %v1641, -inf
          %v1840 = vmax.f32 %v1838, %v1839
          %v1841 = vsel %vm1730, %v1657, -inf
          %v1842 = vmax.f32 %v1840, %v1841
          %v1843 = vsel %vm1730, %v1673, -inf
          %v1844 = vmax.f32 %v1842, %v1843
          %v1845 = vsel %vm1730, %v1689, -inf
          %v1846 = vmax.f32 %v1844, %v1845
          %v1847 = vsel %vm1730, %v1705, -inf
          %v1848 = vmax.f32 %v1846, %v1847
          %v1849 = vsel %vm1730, %v1721, -inf
          %v1850 = vmax.f32 %v1848, %v1849
          %v1851 = vsel %vm1730, %v1610, -inf
          %v1852 = vsel %vm1730, %v1626, -inf
          %v1853 = vmax.f32 %v1851, %v1852
          %v1854 = vsel %vm1730, %v1642, -inf
          %v1855 = vmax.f32 %v1853, %v1854
          %v1856 = vsel %vm1730, %v1658, -inf
          %v1857 = vmax.f32 %v1855, %v1856
          %v1858 = vsel %vm1730, %v1674, -inf
          %v1859 = vmax.f32 %v1857, %v1858
          %v1860 = vsel %vm1730, %v1690, -inf
          %v1861 = vmax.f32 %v1859, %v1860
          %v1862 = vsel %vm1730, %v1706, -inf
          %v1863 = vmax.f32 %v1861, %v1862
          %v1864 = vsel %vm1730, %v1722, -inf
          %v1865 = vmax.f32 %v1863, %v1864
          %v1866 = vsel %vm1730, %v1611, -inf
          %v1867 = vsel %vm1730, %v1627, -inf
          %v1868 = vmax.f32 %v1866, %v1867
          %v1869 = vsel %vm1730, %v1643, -inf
          %v1870 = vmax.f32 %v1868, %v1869
          %v1871 = vsel %vm1730, %v1659, -inf
          %v1872 = vmax.f32 %v1870, %v1871
          %v1873 = vsel %vm1730, %v1675, -inf
          %v1874 = vmax.f32 %v1872, %v1873
          %v1875 = vsel %vm1730, %v1691, -inf
          %v1876 = vmax.f32 %v1874, %v1875
          %v1877 = vsel %vm1730, %v1707, -inf
          %v1878 = vmax.f32 %v1876, %v1877
          %v1879 = vsel %vm1730, %v1723, -inf
          %v1880 = vmax.f32 %v1878, %v1879
          %v1881 = vsel %vm1730, %v1612, -inf
          %v1882 = vsel %vm1730, %v1628, -inf
          %v1883 = vmax.f32 %v1881, %v1882
          %v1884 = vsel %vm1730, %v1644, -inf
          %v1885 = vmax.f32 %v1883, %v1884
          %v1886 = vsel %vm1730, %v1660, -inf
          %v1887 = vmax.f32 %v1885, %v1886
          %v1888 = vsel %vm1730, %v1676, -inf
          %v1889 = vmax.f32 %v1887, %v1888
          %v1890 = vsel %vm1730, %v1692, -inf
          %v1891 = vmax.f32 %v1889, %v1890
          %v1892 = vsel %vm1730, %v1708, -inf
          %v1893 = vmax.f32 %v1891, %v1892
          %v1894 = vsel %vm1730, %v1724, -inf
          %v1895 = vmax.f32 %v1893, %v1894
          %v1896 = vsel %vm1730, %v1613, -inf
          %v1897 = vsel %vm1730, %v1629, -inf
          %v1898 = vmax.f32 %v1896, %v1897
          %v1899 = vsel %vm1730, %v1645, -inf
          %v1900 = vmax.f32 %v1898, %v1899
          %v1901 = vsel %vm1730, %v1661, -inf
          %v1902 = vmax.f32 %v1900, %v1901
          %v1903 = vsel %vm1730, %v1677, -inf
          %v1904 = vmax.f32 %v1902, %v1903
          %v1905 = vsel %vm1730, %v1693, -inf
          %v1906 = vmax.f32 %v1904, %v1905
          %v1907 = vsel %vm1730, %v1709, -inf
          %v1908 = vmax.f32 %v1906, %v1907
          %v1909 = vsel %vm1730, %v1725, -inf
          %v1910 = vmax.f32 %v1908, %v1909
          %v1911 = vsel %vm1730, %v1614, -inf
          %v1912 = vsel %vm1730, %v1630, -inf
          %v1913 = vmax.f32 %v1911, %v1912
          %v1914 = vsel %vm1730, %v1646, -inf
          %v1915 = vmax.f32 %v1913, %v1914
          %v1916 = vsel %vm1730, %v1662, -inf
          %v1917 = vmax.f32 %v1915, %v1916
          %v1918 = vsel %vm1730, %v1678, -inf
          %v1919 = vmax.f32 %v1917, %v1918
          %v1920 = vsel %vm1730, %v1694, -inf
          %v1921 = vmax.f32 %v1919, %v1920
          %v1922 = vsel %vm1730, %v1710, -inf
          %v1923 = vmax.f32 %v1921, %v1922
          %v1924 = vsel %vm1730, %v1726, -inf
          %v1925 = vmax.f32 %v1923, %v1924
          %v1926 = vsel %vm1730, %v1615, -inf
          %v1927 = vsel %vm1730, %v1631, -inf
          %v1928 = vmax.f32 %v1926, %v1927
          %v1929 = vsel %vm1730, %v1647, -inf
          %v1930 = vmax.f32 %v1928, %v1929
          %v1931 = vsel %vm1730, %v1663, -inf
          %v1932 = vmax.f32 %v1930, %v1931
          %v1933 = vsel %vm1730, %v1679, -inf
          %v1934 = vmax.f32 %v1932, %v1933
          %v1935 = vsel %vm1730, %v1695, -inf
          %v1936 = vmax.f32 %v1934, %v1935
          %v1937 = vsel %vm1730, %v1711, -inf
          %v1938 = vmax.f32 %v1936, %v1937
          %v1939 = vsel %vm1730, %v1727, -inf
          %v1940 = vmax.f32 %v1938, %v1939
          %v1941 = vsel %vm1730, %v1616, -inf
          %v1942 = vsel %vm1730, %v1632, -inf
          %v1943 = vmax.f32 %v1941, %v1942
          %v1944 = vsel %vm1730, %v1648, -inf
          %v1945 = vmax.f32 %v1943, %v1944
          %v1946 = vsel %vm1730, %v1664, -inf
          %v1947 = vmax.f32 %v1945, %v1946
          %v1948 = vsel %vm1730, %v1680, -inf
          %v1949 = vmax.f32 %v1947, %v1948
          %v1950 = vsel %vm1730, %v1696, -inf
          %v1951 = vmax.f32 %v1949, %v1950
          %v1952 = vsel %vm1730, %v1712, -inf
          %v1953 = vmax.f32 %v1951, %v1952
          %v1954 = vsel %vm1730, %v1728, -inf
          %v1955 = vmax.f32 %v1953, %v1954
          %v1956 = vsel %vm1730, %v1617, -inf
          %v1957 = vsel %vm1730, %v1633, -inf
          %v1958 = vmax.f32 %v1956, %v1957
          %v1959 = vsel %vm1730, %v1649, -inf
          %v1960 = vmax.f32 %v1958, %v1959
          %v1961 = vsel %vm1730, %v1665, -inf
          %v1962 = vmax.f32 %v1960, %v1961
          %v1963 = vsel %vm1730, %v1681, -inf
          %v1964 = vmax.f32 %v1962, %v1963
          %v1965 = vsel %vm1730, %v1697, -inf
          %v1966 = vmax.f32 %v1964, %v1965
          %v1967 = vsel %vm1730, %v1713, -inf
          %v1968 = vmax.f32 %v1966, %v1967
          %v1969 = vsel %vm1730, %v1729, -inf
          %v1970 = vmax.f32 %v1968, %v1969
          %v1971 = vmax.f32 %v955, %v1745
          %v1972 = vmax.f32 %v956, %v1760
          %v1973 = vmax.f32 %v957, %v1775
          %v1974 = vmax.f32 %v958, %v1790
          %v1975 = vmax.f32 %v959, %v1805
          %v1976 = vmax.f32 %v960, %v1820
          %v1977 = vmax.f32 %v961, %v1835
          %v1978 = vmax.f32 %v962, %v1850
          %v1979 = vmax.f32 %v963, %v1865
          %v1980 = vmax.f32 %v964, %v1880
          %v1981 = vmax.f32 %v965, %v1895
          %v1982 = vmax.f32 %v966, %v1910
          %v1983 = vmax.f32 %v967, %v1925
          %v1984 = vmax.f32 %v968, %v1940
          %v1985 = vmax.f32 %v969, %v1955
          %v1986 = vmax.f32 %v970, %v1970
        $region103: #{tpu_custom_call.1} parent=93 // loop_footer
          %s954 = sadd.s32 1, %s950
        $region104: #{tpu_custom_call.1} parent=93 // loop_footer_branch
          %949 = sbr.rel target = $region100
        $region105: #{tpu_custom_call.1} parent=93 // loop_exit
          _
        %v1987 = vld [vmem:[%s9] sm:$0x1]
        %v1989 = vlaneseq
        %v1990 = vshrl.u32 %v1989, 7
        %v1991 = vsub.s32 0, %v1990
        %v1992 = vrot.slane %v1987, %v1991
        %v1994 = vmul.f32 %v955, %v1992
        %v1995 = vmul.f32 %v956, %v1992
        %v1996 = vmul.f32 %v957, %v1992
        %v1997 = vmul.f32 %v958, %v1992
        %v1998 = vmul.f32 %v959, %v1992
        %v1999 = vmul.f32 %v960, %v1992
        %v2000 = vmul.f32 %v961, %v1992
        %v2001 = vmul.f32 %v962, %v1992
        %v2002 = vmul.f32 %v963, %v1992
        %v2003 = vmul.f32 %v964, %v1992
        %v2004 = vmul.f32 %v965, %v1992
        %v2005 = vmul.f32 %v966, %v1992
        %v2006 = vmul.f32 %v967, %v1992
        %v2007 = vmul.f32 %v968, %v1992
        %v2008 = vmul.f32 %v969, %v1992
        %v2009 = vmul.f32 %v970, %v1992
        %vm2010 = vcmask 261120
        %v2011 = vsel %vm2010, %v1994, 0.0
        %2012 = vadd.xlane.f32.xlu0 %v2011
        %v2013 = vpop.xlane.xlu0 %2012
        %v2014 = vsel %vm2010, %v1995, 0.0
        %2015 = vadd.xlane.f32.xlu0 %v2014
        %v2016 = vpop.xlane.xlu0 %2015
        %v2017 = vsel %vm2010, %v1996, 0.0
        %2018 = vadd.xlane.f32.xlu0 %v2017
        %v2019 = vpop.xlane.xlu0 %2018
        %v2020 = vsel %vm2010, %v1997, 0.0
        %2021 = vadd.xlane.f32.xlu0 %v2020
        %v2022 = vpop.xlane.xlu0 %2021
        %v2023 = vsel %vm2010, %v1998, 0.0
        %2024 = vadd.xlane.f32.xlu0 %v2023
        %v2025 = vpop.xlane.xlu0 %2024
        %v2026 = vsel %vm2010, %v1999, 0.0
        %2027 = vadd.xlane.f32.xlu0 %v2026
        %v2028 = vpop.xlane.xlu0 %2027
        %v2029 = vsel %vm2010, %v2000, 0.0
        %2030 = vadd.xlane.f32.xlu0 %v2029
        %v2031 = vpop.xlane.xlu0 %2030
        %v2032 = vsel %vm2010, %v2001, 0.0
        %2033 = vadd.xlane.f32.xlu0 %v2032
        %v2034 = vpop.xlane.xlu0 %2033
        %v2035 = vsel %vm2010, %v2002, 0.0
        %2036 = vadd.xlane.f32.xlu0 %v2035
        %v2037 = vpop.xlane.xlu0 %2036
        %v2038 = vsel %vm2010, %v2003, 0.0
        %2039 = vadd.xlane.f32.xlu0 %v2038
        %v2040 = vpop.xlane.xlu0 %2039
        %v2041 = vsel %vm2010, %v2004, 0.0
        %2042 = vadd.xlane.f32.xlu0 %v2041
        %v2043 = vpop.xlane.xlu0 %2042
        %v2044 = vsel %vm2010, %v2005, 0.0
        %2045 = vadd.xlane.f32.xlu0 %v2044
        %v2046 = vpop.xlane.xlu0 %2045
        %v2047 = vsel %vm2010, %v2006, 0.0
        %2048 = vadd.xlane.f32.xlu0 %v2047
        %v2049 = vpop.xlane.xlu0 %2048
        %v2050 = vsel %vm2010, %v2007, 0.0
        %2051 = vadd.xlane.f32.xlu0 %v2050
        %v2052 = vpop.xlane.xlu0 %2051
        %v2053 = vsel %vm2010, %v2008, 0.0
        %2054 = vadd.xlane.f32.xlu0 %v2053
        %v2055 = vpop.xlane.xlu0 %2054
        %v2056 = vsel %vm2010, %v2009, 0.0
        %2057 = vadd.xlane.f32.xlu0 %v2056
        %v2058 = vpop.xlane.xlu0 %2057
        %v2060 = vlaneseq
        %v2061 = vshrl.u32 %v2060, 7
        %v2062 = vsub.s32 0, %v2061
        %v2063 = vrot.slane %v948, %v2062
        %v2064 = vlaneseq
        %v2065 = vshrl.u32 %v2064, 7
        %v2066 = vsub.s32 2, %v2065
        %v2067 = vrot.slane %v948, %v2066
        %v2070 = vlaneseq
        %v2071 = vshrl.u32 %v2070, 7
        %v2072 = vsub.s32 0, %v2071
        %v2073 = vrot.slane %v2063, %v2072
        %v2074 = vlaneseq
        %v2075 = vshrl.u32 %v2074, 7
        %v2076 = vsub.s32 0, %v2075
        %v2077 = vrot.slane %v2067, %v2076
        %v2078 = vmul.f32 %v555, %v2073
        %v2079 = vmul.f32 %v556, %v2077
        %v2080 = vmul.f32 %v557, %v2073
        %v2081 = vmul.f32 %v558, %v2077
        %v2082 = vmul.f32 %v559, %v2073
        %v2083 = vmul.f32 %v560, %v2077
        %v2084 = vmul.f32 %v561, %v2073
        %v2085 = vmul.f32 %v562, %v2077
        %v2086 = vmul.f32 %v563, %v2073
        %v2087 = vmul.f32 %v564, %v2077
        %v2088 = vmul.f32 %v565, %v2073
        %v2089 = vmul.f32 %v566, %v2077
        %v2090 = vmul.f32 %v567, %v2073
        %v2091 = vmul.f32 %v568, %v2077
        %v2092 = vmul.f32 %v569, %v2073
        %v2093 = vmul.f32 %v570, %v2077
        %v2094 = vmul.f32 %v571, %v2073
        %v2095 = vmul.f32 %v572, %v2077
        %v2096 = vmul.f32 %v573, %v2073
        %v2097 = vmul.f32 %v574, %v2077
        %v2098 = vmul.f32 %v575, %v2073
        %v2099 = vmul.f32 %v576, %v2077
        %v2100 = vmul.f32 %v577, %v2073
        %v2101 = vmul.f32 %v578, %v2077
        %v2102 = vmul.f32 %v579, %v2073
        %v2103 = vmul.f32 %v580, %v2077
        %v2104 = vmul.f32 %v581, %v2073
        %v2105 = vmul.f32 %v582, %v2077
        %v2106 = vmul.f32 %v583, %v2073
        %v2107 = vmul.f32 %v584, %v2077
        %v2108 = vmul.f32 %v585, %v2073
        %v2109 = vmul.f32 %v586, %v2077
        %v2110 = vadd.f32 %v2078, %v2079
        %2111 = vadd.xlane.f32.xlu0 %v2110
        %v2112 = vpop.xlane.xlu0 %2111
        %v2113 = vadd.f32 %v2080, %v2081
        %2114 = vadd.xlane.f32.xlu0 %v2113
        %v2115 = vpop.xlane.xlu0 %2114
        %v2116 = vadd.f32 %v2082, %v2083
        %2117 = vadd.xlane.f32.xlu0 %v2116
        %v2118 = vpop.xlane.xlu0 %2117
        %v2119 = vadd.f32 %v2084, %v2085
        %2120 = vadd.xlane.f32.xlu0 %v2119
        %v2121 = vpop.xlane.xlu0 %2120
        %v2122 = vadd.f32 %v2086, %v2087
        %2123 = vadd.xlane.f32.xlu0 %v2122
        %v2124 = vpop.xlane.xlu0 %2123
        %v2125 = vadd.f32 %v2088, %v2089
        %2126 = vadd.xlane.f32.xlu0 %v2125
        %v2127 = vpop.xlane.xlu0 %2126
        %v2128 = vadd.f32 %v2090, %v2091
        %2129 = vadd.xlane.f32.xlu0 %v2128
        %v2130 = vpop.xlane.xlu0 %2129
        %v2131 = vadd.f32 %v2092, %v2093
        %2132 = vadd.xlane.f32.xlu0 %v2131
        %v2133 = vpop.xlane.xlu0 %2132
        %v2134 = vadd.f32 %v2094, %v2095
        %2135 = vadd.xlane.f32.xlu0 %v2134
        %v2136 = vpop.xlane.xlu0 %2135
        %v2137 = vadd.f32 %v2096, %v2097
        %2138 = vadd.xlane.f32.xlu0 %v2137
        %v2139 = vpop.xlane.xlu0 %2138
        %v2140 = vadd.f32 %v2098, %v2099
        %2141 = vadd.xlane.f32.xlu0 %v2140
        %v2142 = vpop.xlane.xlu0 %2141
        %v2143 = vadd.f32 %v2100, %v2101
        %2144 = vadd.xlane.f32.xlu0 %v2143
        %v2145 = vpop.xlane.xlu0 %2144
        %v2146 = vadd.f32 %v2102, %v2103
        %2147 = vadd.xlane.f32.xlu0 %v2146
        %v2148 = vpop.xlane.xlu0 %2147
        %v2149 = vadd.f32 %v2104, %v2105
        %2150 = vadd.xlane.f32.xlu0 %v2149
        %v2151 = vpop.xlane.xlu0 %2150
        %v2152 = vadd.f32 %v2106, %v2107
        %2153 = vadd.xlane.f32.xlu0 %v2152
        %v2154 = vpop.xlane.xlu0 %2153
        %v2155 = vadd.f32 %v2108, %v2109
        %2156 = vadd.xlane.f32.xlu0 %v2155
        %v2157 = vpop.xlane.xlu0 %2156
        %v2158 = vmul.f32 %v2112, %v716
        %v2159 = vmul.f32 %v2115, %v718
        %v2160 = vmul.f32 %v2118, %v720
        %v2161 = vmul.f32 %v2121, %v722
        %v2162 = vmul.f32 %v2124, %v724
        %v2163 = vmul.f32 %v2127, %v726
        %v2164 = vmul.f32 %v2130, %v728
        %v2165 = vmul.f32 %v2133, %v730
        %v2166 = vmul.f32 %v2136, %v732
        %v2167 = vmul.f32 %v2139, %v734
        %v2168 = vmul.f32 %v2142, %v736
        %v2169 = vmul.f32 %v2145, %v738
        %v2170 = vmul.f32 %v2148, %v740
        %v2171 = vmul.f32 %v2151, %v742
        %v2172 = vmul.f32 %v2154, %v744
        %v2173 = vmul.f32 %v2157, %v746
        %v2174 = vadd.f32 %v932, %v2013
        %v2175 = vadd.f32 %v933, %v2016
        %v2176 = vadd.f32 %v934, %v2019
        %v2177 = vadd.f32 %v935, %v2022
        %v2178 = vadd.f32 %v936, %v2025
        %v2179 = vadd.f32 %v937, %v2028
        %v2180 = vadd.f32 %v938, %v2031
        %v2181 = vadd.f32 %v939, %v2034
        %v2182 = vadd.f32 %v940, %v2037
        %v2183 = vadd.f32 %v941, %v2040
        %v2184 = vadd.f32 %v942, %v2043
        %v2185 = vadd.f32 %v943, %v2046
        %v2186 = vadd.f32 %v944, %v2049
        %v2187 = vadd.f32 %v945, %v2052
        %v2188 = vadd.f32 %v946, %v2055
        %v2189 = vadd.f32 %v947, %v2058
        %v2190 = vadd.f32 %v2174, %v2158
        %v2191 = vadd.f32 %v2175, %v2159
        %v2192 = vadd.f32 %v2176, %v2160
        %v2193 = vadd.f32 %v2177, %v2161
        %v2194 = vadd.f32 %v2178, %v2162
        %v2195 = vadd.f32 %v2179, %v2163
        %v2196 = vadd.f32 %v2180, %v2164
        %v2197 = vadd.f32 %v2181, %v2165
        %v2198 = vadd.f32 %v2182, %v2166
        %v2199 = vadd.f32 %v2183, %v2167
        %v2200 = vadd.f32 %v2184, %v2168
        %v2201 = vadd.f32 %v2185, %v2169
        %v2202 = vadd.f32 %v2186, %v2170
        %v2203 = vadd.f32 %v2187, %v2171
        %v2204 = vadd.f32 %v2188, %v2172
        %v2205 = vadd.f32 %v2189, %v2173
        %2222 = vrot.lane.b32.xlu0 %v1994, 96
        %v2223 = vpop.permute.xlu0 %2222
        %2224 = vrot.lane.b32.xlu0 %v1995, 96
        %v2225 = vpop.permute.xlu0 %2224
        %2226 = vrot.lane.b32.xlu0 %v1996, 96
        %v2227 = vpop.permute.xlu0 %2226
        %2228 = vrot.lane.b32.xlu0 %v1997, 96
        %v2229 = vpop.permute.xlu0 %2228
        %2230 = vrot.lane.b32.xlu0 %v1998, 96
        %v2231 = vpop.permute.xlu0 %2230
        %2232 = vrot.lane.b32.xlu0 %v1999, 96
        %v2233 = vpop.permute.xlu0 %2232
        %2234 = vrot.lane.b32.xlu0 %v2000, 96
        %v2235 = vpop.permute.xlu0 %2234
        %2236 = vrot.lane.b32.xlu0 %v2001, 96
        %v2237 = vpop.permute.xlu0 %2236
        %2238 = vrot.lane.b32.xlu0 %v2002, 96
        %v2239 = vpop.permute.xlu0 %2238
        %2240 = vrot.lane.b32.xlu0 %v2003, 96
        %v2241 = vpop.permute.xlu0 %2240
        %2242 = vrot.lane.b32.xlu0 %v2004, 96
        %v2243 = vpop.permute.xlu0 %2242
        %2244 = vrot.lane.b32.xlu0 %v2005, 96
        %v2245 = vpop.permute.xlu0 %2244
        %2246 = vrot.lane.b32.xlu0 %v2006, 96
        %v2247 = vpop.permute.xlu0 %2246
        %2248 = vrot.lane.b32.xlu0 %v2007, 96
        %v2249 = vpop.permute.xlu0 %2248
        %2250 = vrot.lane.b32.xlu0 %v2008, 96
        %v2251 = vpop.permute.xlu0 %2250
        %2252 = vrot.lane.b32.xlu0 %v2009, 96
        %v2253 = vpop.permute.xlu0 %2252
        %v2270 = vsel %vm2010, %v2223, 0.0
        %2271 = vadd.xlane.f32.xlu0 %v2270
        %v2272 = vpop.xlane.xlu0 %2271
        %v2273 = vsel %vm2010, %v2225, 0.0
        %2274 = vadd.xlane.f32.xlu0 %v2273
        %v2275 = vpop.xlane.xlu0 %2274
        %v2276 = vsel %vm2010, %v2227, 0.0
        %2277 = vadd.xlane.f32.xlu0 %v2276
        %v2278 = vpop.xlane.xlu0 %2277
        %v2279 = vsel %vm2010, %v2229, 0.0
        %2280 = vadd.xlane.f32.xlu0 %v2279
        %v2281 = vpop.xlane.xlu0 %2280
        %v2282 = vsel %vm2010, %v2231, 0.0
        %2283 = vadd.xlane.f32.xlu0 %v2282
        %v2284 = vpop.xlane.xlu0 %2283
        %v2285 = vsel %vm2010, %v2233, 0.0
        %2286 = vadd.xlane.f32.xlu0 %v2285
        %v2287 = vpop.xlane.xlu0 %2286
        %v2288 = vsel %vm2010, %v2235, 0.0
        %2289 = vadd.xlane.f32.xlu0 %v2288
        %v2290 = vpop.xlane.xlu0 %2289
        %v2291 = vsel %vm2010, %v2237, 0.0
        %2292 = vadd.xlane.f32.xlu0 %v2291
        %v2293 = vpop.xlane.xlu0 %2292
        %v2294 = vsel %vm2010, %v2239, 0.0
        %2295 = vadd.xlane.f32.xlu0 %v2294
        %v2296 = vpop.xlane.xlu0 %2295
        %v2297 = vsel %vm2010, %v2241, 0.0
        %2298 = vadd.xlane.f32.xlu0 %v2297
        %v2299 = vpop.xlane.xlu0 %2298
        %v2300 = vsel %vm2010, %v2243, 0.0
        %2301 = vadd.xlane.f32.xlu0 %v2300
        %v2302 = vpop.xlane.xlu0 %2301
        %v2303 = vsel %vm2010, %v2245, 0.0
        %2304 = vadd.xlane.f32.xlu0 %v2303
        %v2305 = vpop.xlane.xlu0 %2304
        %v2306 = vsel %vm2010, %v2247, 0.0
        %2307 = vadd.xlane.f32.xlu0 %v2306
        %v2308 = vpop.xlane.xlu0 %2307
        %v2309 = vsel %vm2010, %v2249, 0.0
        %2310 = vadd.xlane.f32.xlu0 %v2309
        %v2311 = vpop.xlane.xlu0 %2310
        %v2312 = vsel %vm2010, %v2251, 0.0
        %2313 = vadd.xlane.f32.xlu0 %v2312
        %v2314 = vpop.xlane.xlu0 %2313
        %v2315 = vsel %vm2010, %v2253, 0.0
        %2316 = vadd.xlane.f32.xlu0 %v2315
        %v2317 = vpop.xlane.xlu0 %2316
        %v2318 = vlaneseq
        %v2319 = vshrl.u32 %v2318, 7
        %v2320 = vsub.s32 1, %v2319
        %v2321 = vrot.slane %v948, %v2320
        %v2322 = vlaneseq
        %v2323 = vshrl.u32 %v2322, 7
        %v2324 = vsub.s32 3, %v2323
        %v2325 = vrot.slane %v948, %v2324
        %v2328 = vlaneseq
        %v2329 = vshrl.u32 %v2328, 7
        %v2330 = vsub.s32 1, %v2329
        %v2331 = vrot.slane %v2321, %v2330
        %v2332 = vlaneseq
        %v2333 = vshrl.u32 %v2332, 7
        %v2334 = vsub.s32 1, %v2333
        %v2335 = vrot.slane %v2325, %v2334
        %v2336 = vmul.f32 %v555, %v2331
        %v2337 = vmul.f32 %v556, %v2335
        %v2338 = vmul.f32 %v557, %v2331
        %v2339 = vmul.f32 %v558, %v2335
        %v2340 = vmul.f32 %v559, %v2331
        %v2341 = vmul.f32 %v560, %v2335
        %v2342 = vmul.f32 %v561, %v2331
        %v2343 = vmul.f32 %v562, %v2335
        %v2344 = vmul.f32 %v563, %v2331
        %v2345 = vmul.f32 %v564, %v2335
        %v2346 = vmul.f32 %v565, %v2331
        %v2347 = vmul.f32 %v566, %v2335
        %v2348 = vmul.f32 %v567, %v2331
        %v2349 = vmul.f32 %v568, %v2335
        %v2350 = vmul.f32 %v569, %v2331
        %v2351 = vmul.f32 %v570, %v2335
        %v2352 = vmul.f32 %v571, %v2331
        %v2353 = vmul.f32 %v572, %v2335
        %v2354 = vmul.f32 %v573, %v2331
        %v2355 = vmul.f32 %v574, %v2335
        %v2356 = vmul.f32 %v575, %v2331
        %v2357 = vmul.f32 %v576, %v2335
        %v2358 = vmul.f32 %v577, %v2331
        %v2359 = vmul.f32 %v578, %v2335
        %v2360 = vmul.f32 %v579, %v2331
        %v2361 = vmul.f32 %v580, %v2335
        %v2362 = vmul.f32 %v581, %v2331
        %v2363 = vmul.f32 %v582, %v2335
        %v2364 = vmul.f32 %v583, %v2331
        %v2365 = vmul.f32 %v584, %v2335
        %v2366 = vmul.f32 %v585, %v2331
        %v2367 = vmul.f32 %v586, %v2335
        %v2368 = vadd.f32 %v2336, %v2337
        %2369 = vadd.xlane.f32.xlu0 %v2368
        %v2370 = vpop.xlane.xlu0 %2369
        %v2371 = vadd.f32 %v2338, %v2339
        %2372 = vadd.xlane.f32.xlu0 %v2371
        %v2373 = vpop.xlane.xlu0 %2372
        %v2374 = vadd.f32 %v2340, %v2341
        %2375 = vadd.xlane.f32.xlu0 %v2374
        %v2376 = vpop.xlane.xlu0 %2375
        %v2377 = vadd.f32 %v2342, %v2343
        %2378 = vadd.xlane.f32.xlu0 %v2377
        %v2379 = vpop.xlane.xlu0 %2378
        %v2380 = vadd.f32 %v2344, %v2345
        %2381 = vadd.xlane.f32.xlu0 %v2380
        %v2382 = vpop.xlane.xlu0 %2381
        %v2383 = vadd.f32 %v2346, %v2347
        %2384 = vadd.xlane.f32.xlu0 %v2383
        %v2385 = vpop.xlane.xlu0 %2384
        %v2386 = vadd.f32 %v2348, %v2349
        %2387 = vadd.xlane.f32.xlu0 %v2386
        %v2388 = vpop.xlane.xlu0 %2387
        %v2389 = vadd.f32 %v2350, %v2351
        %2390 = vadd.xlane.f32.xlu0 %v2389
        %v2391 = vpop.xlane.xlu0 %2390
        %v2392 = vadd.f32 %v2352, %v2353
        %2393 = vadd.xlane.f32.xlu0 %v2392
        %v2394 = vpop.xlane.xlu0 %2393
        %v2395 = vadd.f32 %v2354, %v2355
        %2396 = vadd.xlane.f32.xlu0 %v2395
        %v2397 = vpop.xlane.xlu0 %2396
        %v2398 = vadd.f32 %v2356, %v2357
        %2399 = vadd.xlane.f32.xlu0 %v2398
        %v2400 = vpop.xlane.xlu0 %2399
        %v2401 = vadd.f32 %v2358, %v2359
        %2402 = vadd.xlane.f32.xlu0 %v2401
        %v2403 = vpop.xlane.xlu0 %2402
        %v2404 = vadd.f32 %v2360, %v2361
        %2405 = vadd.xlane.f32.xlu0 %v2404
        %v2406 = vpop.xlane.xlu0 %2405
        %v2407 = vadd.f32 %v2362, %v2363
        %2408 = vadd.xlane.f32.xlu0 %v2407
        %v2409 = vpop.xlane.xlu0 %2408
        %v2410 = vadd.f32 %v2364, %v2365
        %2411 = vadd.xlane.f32.xlu0 %v2410
        %v2412 = vpop.xlane.xlu0 %2411
        %v2413 = vadd.f32 %v2366, %v2367
        %2414 = vadd.xlane.f32.xlu0 %v2413
        %v2415 = vpop.xlane.xlu0 %2414
        %v2416 = vmul.f32 %v2370, %v716
        %v2417 = vmul.f32 %v2373, %v718
        %v2418 = vmul.f32 %v2376, %v720
        %v2419 = vmul.f32 %v2379, %v722
        %v2420 = vmul.f32 %v2382, %v724
        %v2421 = vmul.f32 %v2385, %v726
        %v2422 = vmul.f32 %v2388, %v728
        %v2423 = vmul.f32 %v2391, %v730
        %v2424 = vmul.f32 %v2394, %v732
        %v2425 = vmul.f32 %v2397, %v734
        %v2426 = vmul.f32 %v2400, %v736
        %v2427 = vmul.f32 %v2403, %v738
        %v2428 = vmul.f32 %v2406, %v740
        %v2429 = vmul.f32 %v2409, %v742
        %v2430 = vmul.f32 %v2412, %v744
        %v2431 = vmul.f32 %v2415, %v746
        %v2432 = vadd.f32 %v932, %v2272
        %v2433 = vadd.f32 %v933, %v2275
        %v2434 = vadd.f32 %v934, %v2278
        %v2435 = vadd.f32 %v935, %v2281
        %v2436 = vadd.f32 %v936, %v2284
        %v2437 = vadd.f32 %v937, %v2287
        %v2438 = vadd.f32 %v938, %v2290
        %v2439 = vadd.f32 %v939, %v2293
        %v2440 = vadd.f32 %v940, %v2296
        %v2441 = vadd.f32 %v941, %v2299
        %v2442 = vadd.f32 %v942, %v2302
        %v2443 = vadd.f32 %v943, %v2305
        %v2444 = vadd.f32 %v944, %v2308
        %v2445 = vadd.f32 %v945, %v2311
        %v2446 = vadd.f32 %v946, %v2314
        %v2447 = vadd.f32 %v947, %v2317
        %v2448 = vadd.f32 %v2432, %v2416
        %v2449 = vadd.f32 %v2433, %v2417
        %v2450 = vadd.f32 %v2434, %v2418
        %v2451 = vadd.f32 %v2435, %v2419
        %v2452 = vadd.f32 %v2436, %v2420
        %v2453 = vadd.f32 %v2437, %v2421
        %v2454 = vadd.f32 %v2438, %v2422
        %v2455 = vadd.f32 %v2439, %v2423
        %v2456 = vadd.f32 %v2440, %v2424
        %v2457 = vadd.f32 %v2441, %v2425
        %v2458 = vadd.f32 %v2442, %v2426
        %v2459 = vadd.f32 %v2443, %v2427
        %v2460 = vadd.f32 %v2444, %v2428
        %v2461 = vadd.f32 %v2445, %v2429
        %v2462 = vadd.f32 %v2446, %v2430
        %v2463 = vadd.f32 %v2447, %v2431
        %vm2464 = vcmask 7168
        %v2465 = vsel %vm2464, %v2190, %v2448
        %v2466 = vsel %vm2464, %v2191, %v2449
        %v2467 = vsel %vm2464, %v2192, %v2450
        %v2468 = vsel %vm2464, %v2193, %v2451
        %v2469 = vsel %vm2464, %v2194, %v2452
        %v2470 = vsel %vm2464, %v2195, %v2453
        %v2471 = vsel %vm2464, %v2196, %v2454
        %v2472 = vsel %vm2464, %v2197, %v2455
        %v2473 = vsel %vm2464, %v2198, %v2456
        %v2474 = vsel %vm2464, %v2199, %v2457
        %v2475 = vsel %vm2464, %v2200, %v2458
        %v2476 = vsel %vm2464, %v2201, %v2459
        %v2477 = vsel %vm2464, %v2202, %v2460
        %v2478 = vsel %vm2464, %v2203, %v2461
        %v2479 = vsel %vm2464, %v2204, %v2462
        %v2480 = vsel %vm2464, %v2205, %v2463
        %v2481 = vxor.u32 %v2465, 2147483648
        %v2482 = vxor.u32 %v2466, 2147483648
        %v2483 = vxor.u32 %v2467, 2147483648
        %v2484 = vxor.u32 %v2468, 2147483648
        %v2485 = vxor.u32 %v2469, 2147483648
        %v2486 = vxor.u32 %v2470, 2147483648
        %v2487 = vxor.u32 %v2471, 2147483648
        %v2488 = vxor.u32 %v2472, 2147483648
        %v2489 = vxor.u32 %v2473, 2147483648
        %v2490 = vxor.u32 %v2474, 2147483648
        %v2491 = vxor.u32 %v2475, 2147483648
        %v2492 = vxor.u32 %v2476, 2147483648
        %v2493 = vxor.u32 %v2477, 2147483648
        %v2494 = vxor.u32 %v2478, 2147483648
        %v2495 = vxor.u32 %v2479, 2147483648
        %v2496 = vxor.u32 %v2480, 2147483648
        %v2497 = vmul.f32 %v2481, 1.442695
        %v2498 = vpow.pop %v2497
        %v2499 = vmul.f32 %v2482, 1.442695
        %v2500 = vpow.pop %v2499
        %v2501 = vmul.f32 %v2483, 1.442695
        %v2502 = vpow.pop %v2501
        %v2503 = vmul.f32 %v2484, 1.442695
        %v2504 = vpow.pop %v2503
        %v2505 = vmul.f32 %v2485, 1.442695
        %v2506 = vpow.pop %v2505
        %v2507 = vmul.f32 %v2486, 1.442695
        %v2508 = vpow.pop %v2507
        %v2509 = vmul.f32 %v2487, 1.442695
        %v2510 = vpow.pop %v2509
        %v2511 = vmul.f32 %v2488, 1.442695
        %v2512 = vpow.pop %v2511
        %v2513 = vmul.f32 %v2489, 1.442695
        %v2514 = vpow.pop %v2513
        %v2515 = vmul.f32 %v2490, 1.442695
        %v2516 = vpow.pop %v2515
        %v2517 = vmul.f32 %v2491, 1.442695
        %v2518 = vpow.pop %v2517
        %v2519 = vmul.f32 %v2492, 1.442695
        %v2520 = vpow.pop %v2519
        %v2521 = vmul.f32 %v2493, 1.442695
        %v2522 = vpow.pop %v2521
        %v2523 = vmul.f32 %v2494, 1.442695
        %v2524 = vpow.pop %v2523
        %v2525 = vmul.f32 %v2495, 1.442695
        %v2526 = vpow.pop %v2525
        %v2527 = vmul.f32 %v2496, 1.442695
        %v2528 = vpow.pop %v2527
        %v2529 = vadd.f32 %v2498, 1.0
        %v2530 = vadd.f32 %v2500, 1.0
        %v2531 = vadd.f32 %v2502, 1.0
        %v2532 = vadd.f32 %v2504, 1.0
        %v2533 = vadd.f32 %v2506, 1.0
        %v2534 = vadd.f32 %v2508, 1.0
        %v2535 = vadd.f32 %v2510, 1.0
        %v2536 = vadd.f32 %v2512, 1.0
        %v2537 = vadd.f32 %v2514, 1.0
        %v2538 = vadd.f32 %v2516, 1.0
        %v2539 = vadd.f32 %v2518, 1.0
        %v2540 = vadd.f32 %v2520, 1.0
        %v2541 = vadd.f32 %v2522, 1.0
        %v2542 = vadd.f32 %v2524, 1.0
        %v2543 = vadd.f32 %v2526, 1.0
        %v2544 = vadd.f32 %v2528, 1.0
        %v2545 = vrcp.pop %v2529
        %v2546 = vmul.f32 1.0, %v2545
        %v2547 = vrcp.pop %v2530
        %v2548 = vmul.f32 1.0, %v2547
        %v2549 = vrcp.pop %v2531
        %v2550 = vmul.f32 1.0, %v2549
        %v2551 = vrcp.pop %v2532
        %v2552 = vmul.f32 1.0, %v2551
        %v2553 = vrcp.pop %v2533
        %v2554 = vmul.f32 1.0, %v2553
        %v2555 = vrcp.pop %v2534
        %v2556 = vmul.f32 1.0, %v2555
        %v2557 = vrcp.pop %v2535
        %v2558 = vmul.f32 1.0, %v2557
        %v2559 = vrcp.pop %v2536
        %v2560 = vmul.f32 1.0, %v2559
        %v2561 = vrcp.pop %v2537
        %v2562 = vmul.f32 1.0, %v2561
        %v2563 = vrcp.pop %v2538
        %v2564 = vmul.f32 1.0, %v2563
        %v2565 = vrcp.pop %v2539
        %v2566 = vmul.f32 1.0, %v2565
        %v2567 = vrcp.pop %v2540
        %v2568 = vmul.f32 1.0, %v2567
        %v2569 = vrcp.pop %v2541
        %v2570 = vmul.f32 1.0, %v2569
        %v2571 = vrcp.pop %v2542
        %v2572 = vmul.f32 1.0, %v2571
        %v2573 = vrcp.pop %v2543
        %v2574 = vmul.f32 1.0, %v2573
        %v2575 = vrcp.pop %v2544
        %v2576 = vmul.f32 1.0, %v2575
        %2578 = vset.pattern.permute.xlu0 0
        %2579 = vperm.xlu0 %2578, %v916
        %v2580 = vpop.permute.xlu0 %2579
        %2583 = vset.pattern.permute.xlu0 0
        %2584 = vperm.xlu0 %2583, %v917
        %v2585 = vpop.permute.xlu0 %2584
        %2588 = vset.pattern.permute.xlu0 0
        %2589 = vperm.xlu0 %2588, %v918
        %v2590 = vpop.permute.xlu0 %2589
        %2593 = vset.pattern.permute.xlu0 0
        %2594 = vperm.xlu0 %2593, %v919
        %v2595 = vpop.permute.xlu0 %2594
        %2598 = vset.pattern.permute.xlu0 0
        %2599 = vperm.xlu0 %2598, %v920
        %v2600 = vpop.permute.xlu0 %2599
        %2603 = vset.pattern.permute.xlu0 0
        %2604 = vperm.xlu0 %2603, %v921
        %v2605 = vpop.permute.xlu0 %2604
        %2608 = vset.pattern.permute.xlu0 0
        %2609 = vperm.xlu0 %2608, %v922
        %v2610 = vpop.permute.xlu0 %2609
        %2613 = vset.pattern.permute.xlu0 0
        %2614 = vperm.xlu0 %2613, %v923
        %v2615 = vpop.permute.xlu0 %2614
        %2618 = vset.pattern.permute.xlu0 0
        %2619 = vperm.xlu0 %2618, %v924
        %v2620 = vpop.permute.xlu0 %2619
        %2623 = vset.pattern.permute.xlu0 0
        %2624 = vperm.xlu0 %2623, %v925
        %v2625 = vpop.permute.xlu0 %2624
        %2628 = vset.pattern.permute.xlu0 0
        %2629 = vperm.xlu0 %2628, %v926
        %v2630 = vpop.permute.xlu0 %2629
        %2633 = vset.pattern.permute.xlu0 0
        %2634 = vperm.xlu0 %2633, %v927
        %v2635 = vpop.permute.xlu0 %2634
        %2638 = vset.pattern.permute.xlu0 0
        %2639 = vperm.xlu0 %2638, %v928
        %v2640 = vpop.permute.xlu0 %2639
        %2643 = vset.pattern.permute.xlu0 0
        %2644 = vperm.xlu0 %2643, %v929
        %v2645 = vpop.permute.xlu0 %2644
        %2648 = vset.pattern.permute.xlu0 0
        %2649 = vperm.xlu0 %2648, %v930
        %v2650 = vpop.permute.xlu0 %2649
        %2653 = vset.pattern.permute.xlu0 0
        %2654 = vperm.xlu0 %2653, %v931
        %v2655 = vpop.permute.xlu0 %2654
        %v2658 = vlaneseq
        %v2659 = vshrl.u32 %v2658, 7
        %v2660 = vsub.s32 0, %v2659
        %v2661 = vrot.slane %v915, %v2660
        %v2662 = vlaneseq
        %v2663 = vshrl.u32 %v2662, 7
        %v2664 = vsub.s32 2, %v2663
        %v2665 = vrot.slane %v915, %v2664
        %v2668 = vlaneseq
        %v2669 = vshrl.u32 %v2668, 7
        %v2670 = vsub.s32 0, %v2669
        %v2671 = vrot.slane %v2661, %v2670
        %v2672 = vlaneseq
        %v2673 = vshrl.u32 %v2672, 7
        %v2674 = vsub.s32 0, %v2673
        %v2675 = vrot.slane %v2665, %v2674
        %v2676 = vadd.f32 %v2580, %v2671
        %v2677 = vadd.f32 %v2580, %v2675
        %v2678 = vadd.f32 %v2585, %v2671
        %v2679 = vadd.f32 %v2585, %v2675
        %v2680 = vadd.f32 %v2590, %v2671
        %v2681 = vadd.f32 %v2590, %v2675
        %v2682 = vadd.f32 %v2595, %v2671
        %v2683 = vadd.f32 %v2595, %v2675
        %v2684 = vadd.f32 %v2600, %v2671
        %v2685 = vadd.f32 %v2600, %v2675
        %v2686 = vadd.f32 %v2605, %v2671
        %v2687 = vadd.f32 %v2605, %v2675
        %v2688 = vadd.f32 %v2610, %v2671
        %v2689 = vadd.f32 %v2610, %v2675
        %v2690 = vadd.f32 %v2615, %v2671
        %v2691 = vadd.f32 %v2615, %v2675
        %v2692 = vadd.f32 %v2620, %v2671
        %v2693 = vadd.f32 %v2620, %v2675
        %v2694 = vadd.f32 %v2625, %v2671
        %v2695 = vadd.f32 %v2625, %v2675
        %v2696 = vadd.f32 %v2630, %v2671
        %v2697 = vadd.f32 %v2630, %v2675
        %v2698 = vadd.f32 %v2635, %v2671
        %v2699 = vadd.f32 %v2635, %v2675
        %v2700 = vadd.f32 %v2640, %v2671
        %v2701 = vadd.f32 %v2640, %v2675
        %v2702 = vadd.f32 %v2645, %v2671
        %v2703 = vadd.f32 %v2645, %v2675
        %v2704 = vadd.f32 %v2650, %v2671
        %v2705 = vadd.f32 %v2650, %v2675
        %v2706 = vadd.f32 %v2655, %v2671
        %v2707 = vadd.f32 %v2655, %v2675
        %vm2708 = vcmp.ge.f32.partialorder %v2676, 0.0
        %vm2709 = vcmp.ge.f32.partialorder %v2677, 0.0
        %vm2710 = vcmp.ge.f32.partialorder %v2678, 0.0
        %vm2711 = vcmp.ge.f32.partialorder %v2679, 0.0
        %vm2712 = vcmp.ge.f32.partialorder %v2680, 0.0
        %vm2713 = vcmp.ge.f32.partialorder %v2681, 0.0
        %vm2714 = vcmp.ge.f32.partialorder %v2682, 0.0
        %vm2715 = vcmp.ge.f32.partialorder %v2683, 0.0
        %vm2716 = vcmp.ge.f32.partialorder %v2684, 0.0
        %vm2717 = vcmp.ge.f32.partialorder %v2685, 0.0
        %vm2718 = vcmp.ge.f32.partialorder %v2686, 0.0
        %vm2719 = vcmp.ge.f32.partialorder %v2687, 0.0
        %vm2720 = vcmp.ge.f32.partialorder %v2688, 0.0
        %vm2721 = vcmp.ge.f32.partialorder %v2689, 0.0
        %vm2722 = vcmp.ge.f32.partialorder %v2690, 0.0
        %vm2723 = vcmp.ge.f32.partialorder %v2691, 0.0
        %vm2724 = vcmp.ge.f32.partialorder %v2692, 0.0
        %vm2725 = vcmp.ge.f32.partialorder %v2693, 0.0
        %vm2726 = vcmp.ge.f32.partialorder %v2694, 0.0
        %vm2727 = vcmp.ge.f32.partialorder %v2695, 0.0
        %vm2728 = vcmp.ge.f32.partialorder %v2696, 0.0
        %vm2729 = vcmp.ge.f32.partialorder %v2697, 0.0
        %vm2730 = vcmp.ge.f32.partialorder %v2698, 0.0
        %vm2731 = vcmp.ge.f32.partialorder %v2699, 0.0
        %vm2732 = vcmp.ge.f32.partialorder %v2700, 0.0
        %vm2733 = vcmp.ge.f32.partialorder %v2701, 0.0
        %vm2734 = vcmp.ge.f32.partialorder %v2702, 0.0
        %vm2735 = vcmp.ge.f32.partialorder %v2703, 0.0
        %vm2736 = vcmp.ge.f32.partialorder %v2704, 0.0
        %vm2737 = vcmp.ge.f32.partialorder %v2705, 0.0
        %vm2738 = vcmp.ge.f32.partialorder %v2706, 0.0
        %vm2739 = vcmp.ge.f32.partialorder %v2707, 0.0
        %v2740 = vmul.f32 %v2676, 0.01
        %v2741 = vmul.f32 %v2677, 0.01
        %v2742 = vmul.f32 %v2678, 0.01
        %v2743 = vmul.f32 %v2679, 0.01
        %v2744 = vmul.f32 %v2680, 0.01
        %v2745 = vmul.f32 %v2681, 0.01
        %v2746 = vmul.f32 %v2682, 0.01
        %v2747 = vmul.f32 %v2683, 0.01
        %v2748 = vmul.f32 %v2684, 0.01
        %v2749 = vmul.f32 %v2685, 0.01
        %v2750 = vmul.f32 %v2686, 0.01
        %v2751 = vmul.f32 %v2687, 0.01
        %v2752 = vmul.f32 %v2688, 0.01
        %v2753 = vmul.f32 %v2689, 0.01
        %v2754 = vmul.f32 %v2690, 0.01
        %v2755 = vmul.f32 %v2691, 0.01
        %v2756 = vmul.f32 %v2692, 0.01
        %v2757 = vmul.f32 %v2693, 0.01
        %v2758 = vmul.f32 %v2694, 0.01
        %v2759 = vmul.f32 %v2695, 0.01
        %v2760 = vmul.f32 %v2696, 0.01
        %v2761 = vmul.f32 %v2697, 0.01
        %v2762 = vmul.f32 %v2698, 0.01
        %v2763 = vmul.f32 %v2699, 0.01
        %v2764 = vmul.f32 %v2700, 0.01
        %v2765 = vmul.f32 %v2701, 0.01
        %v2766 = vmul.f32 %v2702, 0.01
        %v2767 = vmul.f32 %v2703, 0.01
        %v2768 = vmul.f32 %v2704, 0.01
        %v2769 = vmul.f32 %v2705, 0.01
        %v2770 = vmul.f32 %v2706, 0.01
        %v2771 = vmul.f32 %v2707, 0.01
        %v2772 = vsel %vm2708, %v2676, %v2740
        %v2773 = vsel %vm2709, %v2677, %v2741
        %v2774 = vsel %vm2710, %v2678, %v2742
        %v2775 = vsel %vm2711, %v2679, %v2743
        %v2776 = vsel %vm2712, %v2680, %v2744
        %v2777 = vsel %vm2713, %v2681, %v2745
        %v2778 = vsel %vm2714, %v2682, %v2746
        %v2779 = vsel %vm2715, %v2683, %v2747
        %v2780 = vsel %vm2716, %v2684, %v2748
        %v2781 = vsel %vm2717, %v2685, %v2749
        %v2782 = vsel %vm2718, %v2686, %v2750
        %v2783 = vsel %vm2719, %v2687, %v2751
        %v2784 = vsel %vm2720, %v2688, %v2752
        %v2785 = vsel %vm2721, %v2689, %v2753
        %v2786 = vsel %vm2722, %v2690, %v2754
        %v2787 = vsel %vm2723, %v2691, %v2755
        %v2788 = vsel %vm2724, %v2692, %v2756
        %v2789 = vsel %vm2725, %v2693, %v2757
        %v2790 = vsel %vm2726, %v2694, %v2758
        %v2791 = vsel %vm2727, %v2695, %v2759
        %v2792 = vsel %vm2728, %v2696, %v2760
        %v2793 = vsel %vm2729, %v2697, %v2761
        %v2794 = vsel %vm2730, %v2698, %v2762
        %v2795 = vsel %vm2731, %v2699, %v2763
        %v2796 = vsel %vm2732, %v2700, %v2764
        %v2797 = vsel %vm2733, %v2701, %v2765
        %v2798 = vsel %vm2734, %v2702, %v2766
        %v2799 = vsel %vm2735, %v2703, %v2767
        %v2800 = vsel %vm2736, %v2704, %v2768
        %v2801 = vsel %vm2737, %v2705, %v2769
        %v2802 = vsel %vm2738, %v2706, %v2770
        %v2803 = vsel %vm2739, %v2707, %v2771
        %v2804 = vadd.f32 %v2772, %v619
        %v2805 = vadd.f32 %v2773, %v620
        %v2806 = vadd.f32 %v2774, %v621
        %v2807 = vadd.f32 %v2775, %v622
        %v2808 = vadd.f32 %v2776, %v623
        %v2809 = vadd.f32 %v2777, %v624
        %v2810 = vadd.f32 %v2778, %v625
        %v2811 = vadd.f32 %v2779, %v626
        %v2812 = vadd.f32 %v2780, %v627
        %v2813 = vadd.f32 %v2781, %v628
        %v2814 = vadd.f32 %v2782, %v629
        %v2815 = vadd.f32 %v2783, %v630
        %v2816 = vadd.f32 %v2784, %v631
        %v2817 = vadd.f32 %v2785, %v632
        %v2818 = vadd.f32 %v2786, %v633
        %v2819 = vadd.f32 %v2787, %v634
        %v2820 = vadd.f32 %v2788, %v635
        %v2821 = vadd.f32 %v2789, %v636
        %v2822 = vadd.f32 %v2790, %v637
        %v2823 = vadd.f32 %v2791, %v638
        %v2824 = vadd.f32 %v2792, %v639
        %v2825 = vadd.f32 %v2793, %v640
        %v2826 = vadd.f32 %v2794, %v641
        %v2827 = vadd.f32 %v2795, %v642
        %v2828 = vadd.f32 %v2796, %v643
        %v2829 = vadd.f32 %v2797, %v644
        %v2830 = vadd.f32 %v2798, %v645
        %v2831 = vadd.f32 %v2799, %v646
        %v2832 = vadd.f32 %v2800, %v647
        %v2833 = vadd.f32 %v2801, %v648
        %v2834 = vadd.f32 %v2802, %v649
        %v2835 = vadd.f32 %v2803, %v650
        %v2836 = vmax.f32 %v2804, %v2805
        %2837 = vmax.xlane.f32.xlu0 %v2836
        %v2838 = vpop.xlane.xlu0 %2837
        %v2839 = vmax.f32 %v2806, %v2807
        %2840 = vmax.xlane.f32.xlu0 %v2839
        %v2841 = vpop.xlane.xlu0 %2840
        %v2842 = vmax.f32 %v2808, %v2809
        %2843 = vmax.xlane.f32.xlu0 %v2842
        %v2844 = vpop.xlane.xlu0 %2843
        %v2845 = vmax.f32 %v2810, %v2811
        %2846 = vmax.xlane.f32.xlu0 %v2845
        %v2847 = vpop.xlane.xlu0 %2846
        %v2848 = vmax.f32 %v2812, %v2813
        %2849 = vmax.xlane.f32.xlu0 %v2848
        %v2850 = vpop.xlane.xlu0 %2849
        %v2851 = vmax.f32 %v2814, %v2815
        %2852 = vmax.xlane.f32.xlu0 %v2851
        %v2853 = vpop.xlane.xlu0 %2852
        %v2854 = vmax.f32 %v2816, %v2817
        %2855 = vmax.xlane.f32.xlu0 %v2854
        %v2856 = vpop.xlane.xlu0 %2855
        %v2857 = vmax.f32 %v2818, %v2819
        %2858 = vmax.xlane.f32.xlu0 %v2857
        %v2859 = vpop.xlane.xlu0 %2858
        %v2860 = vmax.f32 %v2820, %v2821
        %2861 = vmax.xlane.f32.xlu0 %v2860
        %v2862 = vpop.xlane.xlu0 %2861
        %v2863 = vmax.f32 %v2822, %v2823
        %2864 = vmax.xlane.f32.xlu0 %v2863
        %v2865 = vpop.xlane.xlu0 %2864
        %v2866 = vmax.f32 %v2824, %v2825
        %2867 = vmax.xlane.f32.xlu0 %v2866
        %v2868 = vpop.xlane.xlu0 %2867
        %v2869 = vmax.f32 %v2826, %v2827
        %2870 = vmax.xlane.f32.xlu0 %v2869
        %v2871 = vpop.xlane.xlu0 %2870
        %v2872 = vmax.f32 %v2828, %v2829
        %2873 = vmax.xlane.f32.xlu0 %v2872
        %v2874 = vpop.xlane.xlu0 %2873
        %v2875 = vmax.f32 %v2830, %v2831
        %2876 = vmax.xlane.f32.xlu0 %v2875
        %v2877 = vpop.xlane.xlu0 %2876
        %v2878 = vmax.f32 %v2832, %v2833
        %2879 = vmax.xlane.f32.xlu0 %v2878
        %v2880 = vpop.xlane.xlu0 %2879
        %v2881 = vmax.f32 %v2834, %v2835
        %2882 = vmax.xlane.f32.xlu0 %v2881
        %v2883 = vpop.xlane.xlu0 %2882
        %v2884 = vsub.f32 %v2804, %v2838
        %v2885 = vsub.f32 %v2805, %v2838
        %v2886 = vsub.f32 %v2806, %v2841
        %v2887 = vsub.f32 %v2807, %v2841
        %v2888 = vsub.f32 %v2808, %v2844
        %v2889 = vsub.f32 %v2809, %v2844
        %v2890 = vsub.f32 %v2810, %v2847
        %v2891 = vsub.f32 %v2811, %v2847
        %v2892 = vsub.f32 %v2812, %v2850
        %v2893 = vsub.f32 %v2813, %v2850
        %v2894 = vsub.f32 %v2814, %v2853
        %v2895 = vsub.f32 %v2815, %v2853
        %v2896 = vsub.f32 %v2816, %v2856
        %v2897 = vsub.f32 %v2817, %v2856
        %v2898 = vsub.f32 %v2818, %v2859
        %v2899 = vsub.f32 %v2819, %v2859
        %v2900 = vsub.f32 %v2820, %v2862
        %v2901 = vsub.f32 %v2821, %v2862
        %v2902 = vsub.f32 %v2822, %v2865
        %v2903 = vsub.f32 %v2823, %v2865
        %v2904 = vsub.f32 %v2824, %v2868
        %v2905 = vsub.f32 %v2825, %v2868
        %v2906 = vsub.f32 %v2826, %v2871
        %v2907 = vsub.f32 %v2827, %v2871
        %v2908 = vsub.f32 %v2828, %v2874
        %v2909 = vsub.f32 %v2829, %v2874
        %v2910 = vsub.f32 %v2830, %v2877
        %v2911 = vsub.f32 %v2831, %v2877
        %v2912 = vsub.f32 %v2832, %v2880
        %v2913 = vsub.f32 %v2833, %v2880
        %v2914 = vsub.f32 %v2834, %v2883
        %v2915 = vsub.f32 %v2835, %v2883
        %v2916 = vmul.f32 %v2884, 1.442695
        %v2917 = vpow.pop %v2916
        %v2918 = vmul.f32 %v2885, 1.442695
        %v2919 = vpow.pop %v2918
        %v2920 = vmul.f32 %v2886, 1.442695
        %v2921 = vpow.pop %v2920
        %v2922 = vmul.f32 %v2887, 1.442695
        %v2923 = vpow.pop %v2922
        %v2924 = vmul.f32 %v2888, 1.442695
        %v2925 = vpow.pop %v2924
        %v2926 = vmul.f32 %v2889, 1.442695
        %v2927 = vpow.pop %v2926
        %v2928 = vmul.f32 %v2890, 1.442695
        %v2929 = vpow.pop %v2928
        %v2930 = vmul.f32 %v2891, 1.442695
        %v2931 = vpow.pop %v2930
        %v2932 = vmul.f32 %v2892, 1.442695
        %v2933 = vpow.pop %v2932
        %v2934 = vmul.f32 %v2893, 1.442695
        %v2935 = vpow.pop %v2934
        %v2936 = vmul.f32 %v2894, 1.442695
        %v2937 = vpow.pop %v2936
        %v2938 = vmul.f32 %v2895, 1.442695
        %v2939 = vpow.pop %v2938
        %v2940 = vmul.f32 %v2896, 1.442695
        %v2941 = vpow.pop %v2940
        %v2942 = vmul.f32 %v2897, 1.442695
        %v2943 = vpow.pop %v2942
        %v2944 = vmul.f32 %v2898, 1.442695
        %v2945 = vpow.pop %v2944
        %v2946 = vmul.f32 %v2899, 1.442695
        %v2947 = vpow.pop %v2946
        %v2948 = vmul.f32 %v2900, 1.442695
        %v2949 = vpow.pop %v2948
        %v2950 = vmul.f32 %v2901, 1.442695
        %v2951 = vpow.pop %v2950
        %v2952 = vmul.f32 %v2902, 1.442695
        %v2953 = vpow.pop %v2952
        %v2954 = vmul.f32 %v2903, 1.442695
        %v2955 = vpow.pop %v2954
        %v2956 = vmul.f32 %v2904, 1.442695
        %v2957 = vpow.pop %v2956
        %v2958 = vmul.f32 %v2905, 1.442695
        %v2959 = vpow.pop %v2958
        %v2960 = vmul.f32 %v2906, 1.442695
        %v2961 = vpow.pop %v2960
        %v2962 = vmul.f32 %v2907, 1.442695
        %v2963 = vpow.pop %v2962
        %v2964 = vmul.f32 %v2908, 1.442695
        %v2965 = vpow.pop %v2964
        %v2966 = vmul.f32 %v2909, 1.442695
        %v2967 = vpow.pop %v2966
        %v2968 = vmul.f32 %v2910, 1.442695
        %v2969 = vpow.pop %v2968
        %v2970 = vmul.f32 %v2911, 1.442695
        %v2971 = vpow.pop %v2970
        %v2972 = vmul.f32 %v2912, 1.442695
        %v2973 = vpow.pop %v2972
        %v2974 = vmul.f32 %v2913, 1.442695
        %v2975 = vpow.pop %v2974
        %v2976 = vmul.f32 %v2914, 1.442695
        %v2977 = vpow.pop %v2976
        %v2978 = vmul.f32 %v2915, 1.442695
        %v2979 = vpow.pop %v2978
        %v2980 = vadd.f32 %v2917, %v2919
        %2981 = vadd.xlane.f32.xlu0 %v2980
        %v2982 = vpop.xlane.xlu0 %2981
        %v2983 = vadd.f32 %v2921, %v2923
        %2984 = vadd.xlane.f32.xlu0 %v2983
        %v2985 = vpop.xlane.xlu0 %2984
        %v2986 = vadd.f32 %v2925, %v2927
        %2987 = vadd.xlane.f32.xlu0 %v2986
        %v2988 = vpop.xlane.xlu0 %2987
        %v2989 = vadd.f32 %v2929, %v2931
        %2990 = vadd.xlane.f32.xlu0 %v2989
        %v2991 = vpop.xlane.xlu0 %2990
        %v2992 = vadd.f32 %v2933, %v2935
        %2993 = vadd.xlane.f32.xlu0 %v2992
        %v2994 = vpop.xlane.xlu0 %2993
        %v2995 = vadd.f32 %v2937, %v2939
        %2996 = vadd.xlane.f32.xlu0 %v2995
        %v2997 = vpop.xlane.xlu0 %2996
        %v2998 = vadd.f32 %v2941, %v2943
        %2999 = vadd.xlane.f32.xlu0 %v2998
        %v3000 = vpop.xlane.xlu0 %2999
        %v3001 = vadd.f32 %v2945, %v2947
        %3002 = vadd.xlane.f32.xlu0 %v3001
        %v3003 = vpop.xlane.xlu0 %3002
        %v3004 = vadd.f32 %v2949, %v2951
        %3005 = vadd.xlane.f32.xlu0 %v3004
        %v3006 = vpop.xlane.xlu0 %3005
        %v3007 = vadd.f32 %v2953, %v2955
        %3008 = vadd.xlane.f32.xlu0 %v3007
        %v3009 = vpop.xlane.xlu0 %3008
        %v3010 = vadd.f32 %v2957, %v2959
        %3011 = vadd.xlane.f32.xlu0 %v3010
        %v3012 = vpop.xlane.xlu0 %3011
        %v3013 = vadd.f32 %v2961, %v2963
        %3014 = vadd.xlane.f32.xlu0 %v3013
        %v3015 = vpop.xlane.xlu0 %3014
        %v3016 = vadd.f32 %v2965, %v2967
        %3017 = vadd.xlane.f32.xlu0 %v3016
        %v3018 = vpop.xlane.xlu0 %3017
        %v3019 = vadd.f32 %v2969, %v2971
        %3020 = vadd.xlane.f32.xlu0 %v3019
        %v3021 = vpop.xlane.xlu0 %3020
        %v3022 = vadd.f32 %v2973, %v2975
        %3023 = vadd.xlane.f32.xlu0 %v3022
        %v3024 = vpop.xlane.xlu0 %3023
        %v3025 = vadd.f32 %v2977, %v2979
        %3026 = vadd.xlane.f32.xlu0 %v3025
        %v3027 = vpop.xlane.xlu0 %3026
        %v3028 = vrcp.pop %v2982
        %v3029 = vmul.f32 %v2917, %v3028
        %v3030 = vmul.f32 %v2919, %v3028
        %v3031 = vrcp.pop %v2985
        %v3032 = vmul.f32 %v2921, %v3031
        %v3033 = vmul.f32 %v2923, %v3031
        %v3034 = vrcp.pop %v2988
        %v3035 = vmul.f32 %v2925, %v3034
        %v3036 = vmul.f32 %v2927, %v3034
        %v3037 = vrcp.pop %v2991
        %v3038 = vmul.f32 %v2929, %v3037
        %v3039 = vmul.f32 %v2931, %v3037
        %v3040 = vrcp.pop %v2994
        %v3041 = vmul.f32 %v2933, %v3040
        %v3042 = vmul.f32 %v2935, %v3040
        %v3043 = vrcp.pop %v2997
        %v3044 = vmul.f32 %v2937, %v3043
        %v3045 = vmul.f32 %v2939, %v3043
        %v3046 = vrcp.pop %v3000
        %v3047 = vmul.f32 %v2941, %v3046
        %v3048 = vmul.f32 %v2943, %v3046
        %v3049 = vrcp.pop %v3003
        %v3050 = vmul.f32 %v2945, %v3049
        %v3051 = vmul.f32 %v2947, %v3049
        %v3052 = vrcp.pop %v3006
        %v3053 = vmul.f32 %v2949, %v3052
        %v3054 = vmul.f32 %v2951, %v3052
        %v3055 = vrcp.pop %v3009
        %v3056 = vmul.f32 %v2953, %v3055
        %v3057 = vmul.f32 %v2955, %v3055
        %v3058 = vrcp.pop %v3012
        %v3059 = vmul.f32 %v2957, %v3058
        %v3060 = vmul.f32 %v2959, %v3058
        %v3061 = vrcp.pop %v3015
        %v3062 = vmul.f32 %v2961, %v3061
        %v3063 = vmul.f32 %v2963, %v3061
        %v3064 = vrcp.pop %v3018
        %v3065 = vmul.f32 %v2965, %v3064
        %v3066 = vmul.f32 %v2967, %v3064
        %v3067 = vrcp.pop %v3021
        %v3068 = vmul.f32 %v2969, %v3067
        %v3069 = vmul.f32 %v2971, %v3067
        %v3070 = vrcp.pop %v3024
        %v3071 = vmul.f32 %v2973, %v3070
        %v3072 = vmul.f32 %v2975, %v3070
        %v3073 = vrcp.pop %v3027
        %v3074 = vmul.f32 %v2977, %v3073
        %v3075 = vmul.f32 %v2979, %v3073
        %v3076 = vpack.c.bf16 %v3032, %v3029
        %v3077 = vpack.c.bf16 %v3033, %v3030
        %v3078 = vpack.c.bf16 %v3038, %v3035
        %v3079 = vpack.c.bf16 %v3039, %v3036
        %v3080 = vpack.c.bf16 %v3044, %v3041
        %v3081 = vpack.c.bf16 %v3045, %v3042
        %v3082 = vpack.c.bf16 %v3050, %v3047
        %v3083 = vpack.c.bf16 %v3051, %v3048
        %v3084 = vpack.c.bf16 %v3056, %v3053
        %v3085 = vpack.c.bf16 %v3057, %v3054
        %v3086 = vpack.c.bf16 %v3062, %v3059
        %v3087 = vpack.c.bf16 %v3063, %v3060
        %v3088 = vpack.c.bf16 %v3068, %v3065
        %v3089 = vpack.c.bf16 %v3069, %v3066
        %v3090 = vpack.c.bf16 %v3074, %v3071
        %v3091 = vpack.c.bf16 %v3075, %v3072
        %v3092 = vld [vmem:[%s2] sm:$0xf]
        %v3093 = vld [vmem:[%s2 + $0x4] sm:$0xf]
        %v3094 = vld [vmem:[%s2 + $0x8] sm:$0xf]
        %v3095 = vld [vmem:[%s2 + $0xc] sm:$0xf]
        %v3096 = vld [vmem:[%s2 + $0x10] sm:$0xf]
        %v3097 = vld [vmem:[%s2 + $0x14] sm:$0xf]
        %v3098 = vld [vmem:[%s2 + $0x18] sm:$0xf]
        %v3099 = vld [vmem:[%s2 + $0x1c] sm:$0xf]
        %v3100 = vld [vmem:[%s2 + $0x20] sm:$0xf]
        %v3101 = vld [vmem:[%s2 + $0x24] sm:$0xf]
        %v3102 = vld [vmem:[%s2 + $0x28] sm:$0xf]
        %v3103 = vld [vmem:[%s2 + $0x2c] sm:$0xf]
        %v3104 = vld [vmem:[%s2 + $0x30] sm:$0xf]
        %v3105 = vld [vmem:[%s2 + $0x34] sm:$0xf]
        %v3106 = vld [vmem:[%s2 + $0x38] sm:$0xf]
        %v3107 = vld [vmem:[%s2 + $0x3c] sm:$0xf]
        %v3108 = vld [vmem:[%s2 + $0x40] sm:$0xf]
        %v3109 = vld [vmem:[%s2 + $0x44] sm:$0xf]
        %v3110 = vld [vmem:[%s2 + $0x48] sm:$0xf]
        %v3111 = vld [vmem:[%s2 + $0x4c] sm:$0xf]
        %v3112 = vld [vmem:[%s2 + $0x50] sm:$0xf]
        %v3113 = vld [vmem:[%s2 + $0x54] sm:$0xf]
        %v3114 = vld [vmem:[%s2 + $0x58] sm:$0xf]
        %v3115 = vld [vmem:[%s2 + $0x5c] sm:$0xf]
        %v3116 = vld [vmem:[%s2 + $0x60] sm:$0xf]
        %v3117 = vld [vmem:[%s2 + $0x64] sm:$0xf]
        %v3118 = vld [vmem:[%s2 + $0x68] sm:$0xf]
        %v3119 = vld [vmem:[%s2 + $0x6c] sm:$0xf]
        %v3120 = vld [vmem:[%s2 + $0x70] sm:$0xf]
        %v3121 = vld [vmem:[%s2 + $0x74] sm:$0xf]
        %v3122 = vld [vmem:[%s2 + $0x78] sm:$0xf]
        %v3123 = vld [vmem:[%s2 + $0x7c] sm:$0xf]
        %v3156 = vunpack.c.l.b16 %v3092
        %v3157 = vunpack.c.l.b16 %v3093
        %v3158 = vunpack.c.l.b16 %v3094
        %v3159 = vunpack.c.l.b16 %v3095
        %v3160 = vunpack.c.l.b16 %v3096
        %v3161 = vunpack.c.l.b16 %v3097
        %v3162 = vunpack.c.l.b16 %v3098
        %v3163 = vunpack.c.l.b16 %v3099
        %v3164 = vunpack.c.l.b16 %v3100
        %v3165 = vunpack.c.l.b16 %v3101
        %v3166 = vunpack.c.l.b16 %v3102
        %v3167 = vunpack.c.l.b16 %v3103
        %v3168 = vunpack.c.l.b16 %v3104
        %v3169 = vunpack.c.l.b16 %v3105
        %v3170 = vunpack.c.l.b16 %v3106
        %v3171 = vunpack.c.l.b16 %v3107
        %v3172 = vunpack.c.l.b16 %v3108
        %v3173 = vunpack.c.l.b16 %v3109
        %v3174 = vunpack.c.l.b16 %v3110
        %v3175 = vunpack.c.l.b16 %v3111
        %v3176 = vunpack.c.l.b16 %v3112
        %v3177 = vunpack.c.l.b16 %v3113
        %v3178 = vunpack.c.l.b16 %v3114
        %v3179 = vunpack.c.l.b16 %v3115
        %v3180 = vunpack.c.l.b16 %v3116
        %v3181 = vunpack.c.l.b16 %v3117
        %v3182 = vunpack.c.l.b16 %v3118
        %v3183 = vunpack.c.l.b16 %v3119
        %v3184 = vunpack.c.l.b16 %v3120
        %v3185 = vunpack.c.l.b16 %v3121
        %v3186 = vunpack.c.l.b16 %v3122
        %v3187 = vunpack.c.l.b16 %v3123
        %v3188 = vpack.c.b16 %v3157, %v3156
        %v3189 = vpack.c.b16 %v3159, %v3158
        %v3190 = vpack.c.b16 %v3161, %v3160
        %v3191 = vpack.c.b16 %v3163, %v3162
        %v3192 = vpack.c.b16 %v3165, %v3164
        %v3193 = vpack.c.b16 %v3167, %v3166
        %v3194 = vpack.c.b16 %v3169, %v3168
        %v3195 = vpack.c.b16 %v3171, %v3170
        %v3196 = vpack.c.b16 %v3173, %v3172
        %v3197 = vpack.c.b16 %v3175, %v3174
        %v3198 = vpack.c.b16 %v3177, %v3176
        %v3199 = vpack.c.b16 %v3179, %v3178
        %v3200 = vpack.c.b16 %v3181, %v3180
        %v3201 = vpack.c.b16 %v3183, %v3182
        %v3202 = vpack.c.b16 %v3185, %v3184
        %v3203 = vpack.c.b16 %v3187, %v3186
        %3220 = vmatprep.subr.bf16.mxu0 0
        %3221 = vmatpush1.bf16.msra.mxu0 %v3188
        %3222 = vmatprep.subr.bf16.mxu0 0
        %3223 = vmatpush1.bf16.msra.mxu0 %v3189
        %3224 = vmatprep.subr.bf16.mxu0 0
        %3225 = vmatpush1.bf16.msra.mxu0 %v3190
        %3226 = vmatprep.subr.bf16.mxu0 0
        %3227 = vmatpush1.bf16.msra.mxu0 %v3191
        %3228 = vmatprep.subr.bf16.mxu0 0
        %3229 = vmatpush1.bf16.msra.mxu0 %v3192
        %3230 = vmatprep.subr.bf16.mxu0 0
        %3231 = vmatpush1.bf16.msra.mxu0 %v3193
        %3232 = vmatprep.subr.bf16.mxu0 0
        %3233 = vmatpush1.bf16.msra.mxu0 %v3194
        %3234 = vmatprep.subr.bf16.mxu0 0
        %3235 = vmatpush1.bf16.msra.mxu0 %v3195
        %3236 = vmatprep.subr.bf16.mxu0 0
        %3237 = vmatpush1.bf16.msra.mxu0 %v3196
        %3238 = vmatprep.subr.bf16.mxu0 0
        %3239 = vmatpush1.bf16.msra.mxu0 %v3197
        %3240 = vmatprep.subr.bf16.mxu0 0
        %3241 = vmatpush1.bf16.msra.mxu0 %v3198
        %3242 = vmatprep.subr.bf16.mxu0 0
        %3243 = vmatpush1.bf16.msra.mxu0 %v3199
        %3244 = vmatprep.subr.bf16.mxu0 0
        %3245 = vmatpush1.bf16.msra.mxu0 %v3200
        %3246 = vmatprep.subr.bf16.mxu0 0
        %3247 = vmatpush1.bf16.msra.mxu0 %v3201
        %3248 = vmatprep.subr.bf16.mxu0 0
        %3249 = vmatpush1.bf16.msra.mxu0 %v3202
        %3250 = vmatprep.subr.bf16.mxu0 0
        %3251 = vmatpush1.bf16.msra.mxu0 %v3203
        %3252 = vmatprep.mubr.bf16.mxu0 %v3077
        %3253 = vmatmul.mubr.bf16.gmra.mrb[0].mxu0 %v3076
        %v3254 = vpop.f32.mrb[0].mxu0
        %v3255 = vadd.f32 0.0, %v3254
        %v3256 = vpop.f32.mrb[0].mxu0
        %v3257 = vpop.f32.mrb[0].mxu0
        %v3258 = vadd.f32 0.0, %v3257
        %v3259 = vpop.f32.mrb[0].mxu0
        %3260 = vmatprep.mubr.bf16.mxu0 %v3079
        %3261 = vmatmul.mubr.bf16.gmra.mrb[0].mxu0 %v3078
        %v3262 = vpop.f32.mrb[0].mxu0
        %v3263 = vadd.f32 0.0, %v3262
        %v3264 = vpop.f32.mrb[0].mxu0
        %v3265 = vpop.f32.mrb[0].mxu0
        %v3266 = vadd.f32 0.0, %v3265
        %v3267 = vpop.f32.mrb[0].mxu0
        %3268 = vmatprep.mubr.bf16.mxu0 %v3081
        %3269 = vmatmul.mubr.bf16.gmra.mrb[0].mxu0 %v3080
        %v3270 = vpop.f32.mrb[0].mxu0
        %v3271 = vadd.f32 0.0, %v3270
        %v3272 = vpop.f32.mrb[0].mxu0
        %v3273 = vpop.f32.mrb[0].mxu0
        %v3274 = vadd.f32 0.0, %v3273
        %v3275 = vpop.f32.mrb[0].mxu0
        %3276 = vmatprep.mubr.bf16.mxu0 %v3083
        %3277 = vmatmul.mubr.bf16.gmra.mrb[0].mxu0 %v3082
        %v3278 = vpop.f32.mrb[0].mxu0
        %v3279 = vadd.f32 0.0, %v3278
        %v3280 = vpop.f32.mrb[0].mxu0
        %v3281 = vpop.f32.mrb[0].mxu0
        %v3282 = vadd.f32 0.0, %v3281
        %v3283 = vpop.f32.mrb[0].mxu0
        %3284 = vmatprep.mubr.bf16.mxu0 %v3085
        %3285 = vmatmul.mubr.bf16.gmra.mrb[0].mxu0 %v3084
        %v3286 = vpop.f32.mrb[0].mxu0
        %v3287 = vadd.f32 0.0, %v3286
        %v3288 = vpop.f32.mrb[0].mxu0
        %v3289 = vpop.f32.mrb[0].mxu0
        %v3290 = vadd.f32 0.0, %v3289
        %v3291 = vpop.f32.mrb[0].mxu0
        %3292 = vmatprep.mubr.bf16.mxu0 %v3087
        %3293 = vmatmul.mubr.bf16.gmra.mrb[0].mxu0 %v3086
        %v3294 = vpop.f32.mrb[0].mxu0
        %v3295 = vadd.f32 0.0, %v3294
        %v3296 = vpop.f32.mrb[0].mxu0
        %v3297 = vpop.f32.mrb[0].mxu0
        %v3298 = vadd.f32 0.0, %v3297
        %v3299 = vpop.f32.mrb[0].mxu0
        %3300 = vmatprep.mubr.bf16.mxu0 %v3089
        %3301 = vmatmul.mubr.bf16.gmra.mrb[0].mxu0 %v3088
        %v3302 = vpop.f32.mrb[0].mxu0
        %v3303 = vadd.f32 0.0, %v3302
        %v3304 = vpop.f32.mrb[0].mxu0
        %v3305 = vpop.f32.mrb[0].mxu0
        %v3306 = vadd.f32 0.0, %v3305
        %v3307 = vpop.f32.mrb[0].mxu0
        %3308 = vmatprep.mubr.bf16.mxu0 %v3091
        %3309 = vmatmul.mubr.bf16.gmra.mrb[0].mxu0 %v3090
        %v3310 = vpop.f32.mrb[0].mxu0
        %v3311 = vadd.f32 0.0, %v3310
        %v3312 = vpop.f32.mrb[0].mxu0
        %v3313 = vpop.f32.mrb[0].mxu0
        %v3314 = vadd.f32 0.0, %v3313
        %v3315 = vpop.f32.mrb[0].mxu0
        %3316 = vdwg.mxu0
        %3318 = vset.pattern.permute.xlu0 0
        %3319 = vperm.xlu0 %3318, %v2546
        %v3320 = vpop.permute.xlu0 %3319
        %3323 = vset.pattern.permute.xlu0 0
        %3324 = vperm.xlu0 %3323, %v2548
        %v3325 = vpop.permute.xlu0 %3324
        %3328 = vset.pattern.permute.xlu0 0
        %3329 = vperm.xlu0 %3328, %v2550
        %v3330 = vpop.permute.xlu0 %3329
        %3333 = vset.pattern.permute.xlu0 0
        %3334 = vperm.xlu0 %3333, %v2552
        %v3335 = vpop.permute.xlu0 %3334
        %3338 = vset.pattern.permute.xlu0 0
        %3339 = vperm.xlu0 %3338, %v2554
        %v3340 = vpop.permute.xlu0 %3339
        %3343 = vset.pattern.permute.xlu0 0
        %3344 = vperm.xlu0 %3343, %v2556
        %v3345 = vpop.permute.xlu0 %3344
        %3348 = vset.pattern.permute.xlu0 0
        %3349 = vperm.xlu0 %3348, %v2558
        %v3350 = vpop.permute.xlu0 %3349
        %3353 = vset.pattern.permute.xlu0 0
        %3354 = vperm.xlu0 %3353, %v2560
        %v3355 = vpop.permute.xlu0 %3354
        %3358 = vset.pattern.permute.xlu0 0
        %3359 = vperm.xlu0 %3358, %v2562
        %v3360 = vpop.permute.xlu0 %3359
        %3363 = vset.pattern.permute.xlu0 0
        %3364 = vperm.xlu0 %3363, %v2564
        %v3365 = vpop.permute.xlu0 %3364
        %3368 = vset.pattern.permute.xlu0 0
        %3369 = vperm.xlu0 %3368, %v2566
        %v3370 = vpop.permute.xlu0 %3369
        %3373 = vset.pattern.permute.xlu0 0
        %3374 = vperm.xlu0 %3373, %v2568
        %v3375 = vpop.permute.xlu0 %3374
        %3378 = vset.pattern.permute.xlu0 0
        %3379 = vperm.xlu0 %3378, %v2570
        %v3380 = vpop.permute.xlu0 %3379
        %3383 = vset.pattern.permute.xlu0 0
        %3384 = vperm.xlu0 %3383, %v2572
        %v3385 = vpop.permute.xlu0 %3384
        %3388 = vset.pattern.permute.xlu0 0
        %3389 = vperm.xlu0 %3388, %v2574
        %v3390 = vpop.permute.xlu0 %3389
        %3393 = vset.pattern.permute.xlu0 0
        %3394 = vperm.xlu0 %3393, %v2576
        %v3395 = vpop.permute.xlu0 %3394
        %v3397 = vmul.f32 %v3320, %v3255
        %v3398 = vmul.f32 %v3325, %v3258
        %v3399 = vmul.f32 %v3330, %v3263
        %v3400 = vmul.f32 %v3335, %v3266
        %v3401 = vmul.f32 %v3340, %v3271
        %v3402 = vmul.f32 %v3345, %v3274
        %v3403 = vmul.f32 %v3350, %v3279
        %v3404 = vmul.f32 %v3355, %v3282
        %v3405 = vmul.f32 %v3360, %v3287
        %v3406 = vmul.f32 %v3365, %v3290
        %v3407 = vmul.f32 %v3370, %v3295
        %v3408 = vmul.f32 %v3375, %v3298
        %v3409 = vmul.f32 %v3380, %v3303
        %v3410 = vmul.f32 %v3385, %v3306
        %v3411 = vmul.f32 %v3390, %v3311
        %v3412 = vmul.f32 %v3395, %v3314
        %3413 = vset.pattern.permute.xlu0 1
        %3414 = vperm.xlu0 %3413, %v916
        %v3415 = vpop.permute.xlu0 %3414
        %3417 = vset.pattern.permute.xlu0 1
        %3418 = vperm.xlu0 %3417, %v917
        %v3419 = vpop.permute.xlu0 %3418
        %3421 = vset.pattern.permute.xlu0 1
        %3422 = vperm.xlu0 %3421, %v918
        %v3423 = vpop.permute.xlu0 %3422
        %3425 = vset.pattern.permute.xlu0 1
        %3426 = vperm.xlu0 %3425, %v919
        %v3427 = vpop.permute.xlu0 %3426
        %3429 = vset.pattern.permute.xlu0 1
        %3430 = vperm.xlu0 %3429, %v920
        %v3431 = vpop.permute.xlu0 %3430
        %3433 = vset.pattern.permute.xlu0 1
        %3434 = vperm.xlu0 %3433, %v921
        %v3435 = vpop.permute.xlu0 %3434
        %3437 = vset.pattern.permute.xlu0 1
        %3438 = vperm.xlu0 %3437, %v922
        %v3439 = vpop.permute.xlu0 %3438
        %3441 = vset.pattern.permute.xlu0 1
        %3442 = vperm.xlu0 %3441, %v923
        %v3443 = vpop.permute.xlu0 %3442
        %3445 = vset.pattern.permute.xlu0 1
        %3446 = vperm.xlu0 %3445, %v924
        %v3447 = vpop.permute.xlu0 %3446
        %3449 = vset.pattern.permute.xlu0 1
        %3450 = vperm.xlu0 %3449, %v925
        %v3451 = vpop.permute.xlu0 %3450
        %3453 = vset.pattern.permute.xlu0 1
        %3454 = vperm.xlu0 %3453, %v926
        %v3455 = vpop.permute.xlu0 %3454
        %3457 = vset.pattern.permute.xlu0 1
        %3458 = vperm.xlu0 %3457, %v927
        %v3459 = vpop.permute.xlu0 %3458
        %3461 = vset.pattern.permute.xlu0 1
        %3462 = vperm.xlu0 %3461, %v928
        %v3463 = vpop.permute.xlu0 %3462
        %3465 = vset.pattern.permute.xlu0 1
        %3466 = vperm.xlu0 %3465, %v929
        %v3467 = vpop.permute.xlu0 %3466
        %3469 = vset.pattern.permute.xlu0 1
        %3470 = vperm.xlu0 %3469, %v930
        %v3471 = vpop.permute.xlu0 %3470
        %3473 = vset.pattern.permute.xlu0 1
        %3474 = vperm.xlu0 %3473, %v931
        %v3475 = vpop.permute.xlu0 %3474
        %v3477 = vlaneseq
        %v3478 = vshrl.u32 %v3477, 7
        %v3479 = vsub.s32 1, %v3478
        %v3480 = vrot.slane %v915, %v3479
        %v3481 = vlaneseq
        %v3482 = vshrl.u32 %v3481, 7
        %v3483 = vsub.s32 3, %v3482
        %v3484 = vrot.slane %v915, %v3483
        %v3487 = vlaneseq
        %v3488 = vshrl.u32 %v3487, 7
        %v3489 = vsub.s32 1, %v3488
        %v3490 = vrot.slane %v3480, %v3489
        %v3491 = vlaneseq
        %v3492 = vshrl.u32 %v3491, 7
        %v3493 = vsub.s32 1, %v3492
        %v3494 = vrot.slane %v3484, %v3493
        %v3495 = vadd.f32 %v3415, %v3490
        %v3496 = vadd.f32 %v3415, %v3494
        %v3497 = vadd.f32 %v3419, %v3490
        %v3498 = vadd.f32 %v3419, %v3494
        %v3499 = vadd.f32 %v3423, %v3490
        %v3500 = vadd.f32 %v3423, %v3494
        %v3501 = vadd.f32 %v3427, %v3490
        %v3502 = vadd.f32 %v3427, %v3494
        %v3503 = vadd.f32 %v3431, %v3490
        %v3504 = vadd.f32 %v3431, %v3494
        %v3505 = vadd.f32 %v3435, %v3490
        %v3506 = vadd.f32 %v3435, %v3494
        %v3507 = vadd.f32 %v3439, %v3490
        %v3508 = vadd.f32 %v3439, %v3494
        %v3509 = vadd.f32 %v3443, %v3490
        %v3510 = vadd.f32 %v3443, %v3494
        %v3511 = vadd.f32 %v3447, %v3490
        %v3512 = vadd.f32 %v3447, %v3494
        %v3513 = vadd.f32 %v3451, %v3490
        %v3514 = vadd.f32 %v3451, %v3494
        %v3515 = vadd.f32 %v3455, %v3490
        %v3516 = vadd.f32 %v3455, %v3494
        %v3517 = vadd.f32 %v3459, %v3490
        %v3518 = vadd.f32 %v3459, %v3494
        %v3519 = vadd.f32 %v3463, %v3490
        %v3520 = vadd.f32 %v3463, %v3494
        %v3521 = vadd.f32 %v3467, %v3490
        %v3522 = vadd.f32 %v3467, %v3494
        %v3523 = vadd.f32 %v3471, %v3490
        %v3524 = vadd.f32 %v3471, %v3494
        %v3525 = vadd.f32 %v3475, %v3490
        %v3526 = vadd.f32 %v3475, %v3494
        %vm3527 = vcmp.ge.f32.partialorder %v3495, 0.0
        %vm3528 = vcmp.ge.f32.partialorder %v3496, 0.0
        %vm3529 = vcmp.ge.f32.partialorder %v3497, 0.0
        %vm3530 = vcmp.ge.f32.partialorder %v3498, 0.0
        %vm3531 = vcmp.ge.f32.partialorder %v3499, 0.0
        %vm3532 = vcmp.ge.f32.partialorder %v3500, 0.0
        %vm3533 = vcmp.ge.f32.partialorder %v3501, 0.0
        %vm3534 = vcmp.ge.f32.partialorder %v3502, 0.0
        %vm3535 = vcmp.ge.f32.partialorder %v3503, 0.0
        %vm3536 = vcmp.ge.f32.partialorder %v3504, 0.0
        %vm3537 = vcmp.ge.f32.partialorder %v3505, 0.0
        %vm3538 = vcmp.ge.f32.partialorder %v3506, 0.0
        %vm3539 = vcmp.ge.f32.partialorder %v3507, 0.0
        %vm3540 = vcmp.ge.f32.partialorder %v3508, 0.0
        %vm3541 = vcmp.ge.f32.partialorder %v3509, 0.0
        %vm3542 = vcmp.ge.f32.partialorder %v3510, 0.0
        %vm3543 = vcmp.ge.f32.partialorder %v3511, 0.0
        %vm3544 = vcmp.ge.f32.partialorder %v3512, 0.0
        %vm3545 = vcmp.ge.f32.partialorder %v3513, 0.0
        %vm3546 = vcmp.ge.f32.partialorder %v3514, 0.0
        %vm3547 = vcmp.ge.f32.partialorder %v3515, 0.0
        %vm3548 = vcmp.ge.f32.partialorder %v3516, 0.0
        %vm3549 = vcmp.ge.f32.partialorder %v3517, 0.0
        %vm3550 = vcmp.ge.f32.partialorder %v3518, 0.0
        %vm3551 = vcmp.ge.f32.partialorder %v3519, 0.0
        %vm3552 = vcmp.ge.f32.partialorder %v3520, 0.0
        %vm3553 = vcmp.ge.f32.partialorder %v3521, 0.0
        %vm3554 = vcmp.ge.f32.partialorder %v3522, 0.0
        %vm3555 = vcmp.ge.f32.partialorder %v3523, 0.0
        %vm3556 = vcmp.ge.f32.partialorder %v3524, 0.0
        %vm3557 = vcmp.ge.f32.partialorder %v3525, 0.0
        %vm3558 = vcmp.ge.f32.partialorder %v3526, 0.0
        %v3559 = vmul.f32 %v3495, 0.01
        %v3560 = vmul.f32 %v3496, 0.01
        %v3561 = vmul.f32 %v3497, 0.01
        %v3562 = vmul.f32 %v3498, 0.01
        %v3563 = vmul.f32 %v3499, 0.01
        %v3564 = vmul.f32 %v3500, 0.01
        %v3565 = vmul.f32 %v3501, 0.01
        %v3566 = vmul.f32 %v3502, 0.01
        %v3567 = vmul.f32 %v3503, 0.01
        %v3568 = vmul.f32 %v3504, 0.01
        %v3569 = vmul.f32 %v3505, 0.01
        %v3570 = vmul.f32 %v3506, 0.01
        %v3571 = vmul.f32 %v3507, 0.01
        %v3572 = vmul.f32 %v3508, 0.01
        %v3573 = vmul.f32 %v3509, 0.01
        %v3574 = vmul.f32 %v3510, 0.01
        %v3575 = vmul.f32 %v3511, 0.01
        %v3576 = vmul.f32 %v3512, 0.01
        %v3577 = vmul.f32 %v3513, 0.01
        %v3578 = vmul.f32 %v3514, 0.01
        %v3579 = vmul.f32 %v3515, 0.01
        %v3580 = vmul.f32 %v3516, 0.01
        %v3581 = vmul.f32 %v3517, 0.01
        %v3582 = vmul.f32 %v3518, 0.01
        %v3583 = vmul.f32 %v3519, 0.01
        %v3584 = vmul.f32 %v3520, 0.01
        %v3585 = vmul.f32 %v3521, 0.01
        %v3586 = vmul.f32 %v3522, 0.01
        %v3587 = vmul.f32 %v3523, 0.01
        %v3588 = vmul.f32 %v3524, 0.01
        %v3589 = vmul.f32 %v3525, 0.01
        %v3590 = vmul.f32 %v3526, 0.01
        %v3591 = vsel %vm3527, %v3495, %v3559
        %v3592 = vsel %vm3528, %v3496, %v3560
        %v3593 = vsel %vm3529, %v3497, %v3561
        %v3594 = vsel %vm3530, %v3498, %v3562
        %v3595 = vsel %vm3531, %v3499, %v3563
        %v3596 = vsel %vm3532, %v3500, %v3564
        %v3597 = vsel %vm3533, %v3501, %v3565
        %v3598 = vsel %vm3534, %v3502, %v3566
        %v3599 = vsel %vm3535, %v3503, %v3567
        %v3600 = vsel %vm3536, %v3504, %v3568
        %v3601 = vsel %vm3537, %v3505, %v3569
        %v3602 = vsel %vm3538, %v3506, %v3570
        %v3603 = vsel %vm3539, %v3507, %v3571
        %v3604 = vsel %vm3540, %v3508, %v3572
        %v3605 = vsel %vm3541, %v3509, %v3573
        %v3606 = vsel %vm3542, %v3510, %v3574
        %v3607 = vsel %vm3543, %v3511, %v3575
        %v3608 = vsel %vm3544, %v3512, %v3576
        %v3609 = vsel %vm3545, %v3513, %v3577
        %v3610 = vsel %vm3546, %v3514, %v3578
        %v3611 = vsel %vm3547, %v3515, %v3579
        %v3612 = vsel %vm3548, %v3516, %v3580
        %v3613 = vsel %vm3549, %v3517, %v3581
        %v3614 = vsel %vm3550, %v3518, %v3582
        %v3615 = vsel %vm3551, %v3519, %v3583
        %v3616 = vsel %vm3552, %v3520, %v3584
        %v3617 = vsel %vm3553, %v3521, %v3585
        %v3618 = vsel %vm3554, %v3522, %v3586
        %v3619 = vsel %vm3555, %v3523, %v3587
        %v3620 = vsel %vm3556, %v3524, %v3588
        %v3621 = vsel %vm3557, %v3525, %v3589
        %v3622 = vsel %vm3558, %v3526, %v3590
        %v3623 = vadd.f32 %v3591, %v619
        %v3624 = vadd.f32 %v3592, %v620
        %v3625 = vadd.f32 %v3593, %v621
        %v3626 = vadd.f32 %v3594, %v622
        %v3627 = vadd.f32 %v3595, %v623
        %v3628 = vadd.f32 %v3596, %v624
        %v3629 = vadd.f32 %v3597, %v625
        %v3630 = vadd.f32 %v3598, %v626
        %v3631 = vadd.f32 %v3599, %v627
        %v3632 = vadd.f32 %v3600, %v628
        %v3633 = vadd.f32 %v3601, %v629
        %v3634 = vadd.f32 %v3602, %v630
        %v3635 = vadd.f32 %v3603, %v631
        %v3636 = vadd.f32 %v3604, %v632
        %v3637 = vadd.f32 %v3605, %v633
        %v3638 = vadd.f32 %v3606, %v634
        %v3639 = vadd.f32 %v3607, %v635
        %v3640 = vadd.f32 %v3608, %v636
        %v3641 = vadd.f32 %v3609, %v637
        %v3642 = vadd.f32 %v3610, %v638
        %v3643 = vadd.f32 %v3611, %v639
        %v3644 = vadd.f32 %v3612, %v640
        %v3645 = vadd.f32 %v3613, %v641
        %v3646 = vadd.f32 %v3614, %v642
        %v3647 = vadd.f32 %v3615, %v643
        %v3648 = vadd.f32 %v3616, %v644
        %v3649 = vadd.f32 %v3617, %v645
        %v3650 = vadd.f32 %v3618, %v646
        %v3651 = vadd.f32 %v3619, %v647
        %v3652 = vadd.f32 %v3620, %v648
        %v3653 = vadd.f32 %v3621, %v649
        %v3654 = vadd.f32 %v3622, %v650
        %v3655 = vmax.f32 %v3623, %v3624
        %3656 = vmax.xlane.f32.xlu0 %v3655
        %v3657 = vpop.xlane.xlu0 %3656
        %v3658 = vmax.f32 %v3625, %v3626
        %3659 = vmax.xlane.f32.xlu0 %v3658
        %v3660 = vpop.xlane.xlu0 %3659
        %v3661 = vmax.f32 %v3627, %v3628
        %3662 = vmax.xlane.f32.xlu0 %v3661
        %v3663 = vpop.xlane.xlu0 %3662
        %v3664 = vmax.f32 %v3629, %v3630
        %3665 = vmax.xlane.f32.xlu0 %v3664
        %v3666 = vpop.xlane.xlu0 %3665
        %v3667 = vmax.f32 %v3631, %v3632
        %3668 = vmax.xlane.f32.xlu0 %v3667
        %v3669 = vpop.xlane.xlu0 %3668
        %v3670 = vmax.f32 %v3633, %v3634
        %3671 = vmax.xlane.f32.xlu0 %v3670
        %v3672 = vpop.xlane.xlu0 %3671
        %v3673 = vmax.f32 %v3635, %v3636
        %3674 = vmax.xlane.f32.xlu0 %v3673
        %v3675 = vpop.xlane.xlu0 %3674
        %v3676 = vmax.f32 %v3637, %v3638
        %3677 = vmax.xlane.f32.xlu0 %v3676
        %v3678 = vpop.xlane.xlu0 %3677
        %v3679 = vmax.f32 %v3639, %v3640
        %3680 = vmax.xlane.f32.xlu0 %v3679
        %v3681 = vpop.xlane.xlu0 %3680
        %v3682 = vmax.f32 %v3641, %v3642
        %3683 = vmax.xlane.f32.xlu0 %v3682
        %v3684 = vpop.xlane.xlu0 %3683
        %v3685 = vmax.f32 %v3643, %v3644
        %3686 = vmax.xlane.f32.xlu0 %v3685
        %v3687 = vpop.xlane.xlu0 %3686
        %v3688 = vmax.f32 %v3645, %v3646
        %3689 = vmax.xlane.f32.xlu0 %v3688
        %v3690 = vpop.xlane.xlu0 %3689
        %v3691 = vmax.f32 %v3647, %v3648
        %3692 = vmax.xlane.f32.xlu0 %v3691
        %v3693 = vpop.xlane.xlu0 %3692
        %v3694 = vmax.f32 %v3649, %v3650
        %3695 = vmax.xlane.f32.xlu0 %v3694
        %v3696 = vpop.xlane.xlu0 %3695
        %v3697 = vmax.f32 %v3651, %v3652
        %3698 = vmax.xlane.f32.xlu0 %v3697
        %v3699 = vpop.xlane.xlu0 %3698
        %v3700 = vmax.f32 %v3653, %v3654
        %3701 = vmax.xlane.f32.xlu0 %v3700
        %v3702 = vpop.xlane.xlu0 %3701
        %v3703 = vsub.f32 %v3623, %v3657
        %v3704 = vsub.f32 %v3624, %v3657
        %v3705 = vsub.f32 %v3625, %v3660
        %v3706 = vsub.f32 %v3626, %v3660
        %v3707 = vsub.f32 %v3627, %v3663
        %v3708 = vsub.f32 %v3628, %v3663
        %v3709 = vsub.f32 %v3629, %v3666
        %v3710 = vsub.f32 %v3630, %v3666
        %v3711 = vsub.f32 %v3631, %v3669
        %v3712 = vsub.f32 %v3632, %v3669
        %v3713 = vsub.f32 %v3633, %v3672
        %v3714 = vsub.f32 %v3634, %v3672
        %v3715 = vsub.f32 %v3635, %v3675
        %v3716 = vsub.f32 %v3636, %v3675
        %v3717 = vsub.f32 %v3637, %v3678
        %v3718 = vsub.f32 %v3638, %v3678
        %v3719 = vsub.f32 %v3639, %v3681
        %v3720 = vsub.f32 %v3640, %v3681
        %v3721 = vsub.f32 %v3641, %v3684
        %v3722 = vsub.f32 %v3642, %v3684
        %v3723 = vsub.f32 %v3643, %v3687
        %v3724 = vsub.f32 %v3644, %v3687
        %v3725 = vsub.f32 %v3645, %v3690
        %v3726 = vsub.f32 %v3646, %v3690
        %v3727 = vsub.f32 %v3647, %v3693
        %v3728 = vsub.f32 %v3648, %v3693
        %v3729 = vsub.f32 %v3649, %v3696
        %v3730 = vsub.f32 %v3650, %v3696
        %v3731 = vsub.f32 %v3651, %v3699
        %v3732 = vsub.f32 %v3652, %v3699
        %v3733 = vsub.f32 %v3653, %v3702
        %v3734 = vsub.f32 %v3654, %v3702
        %v3735 = vmul.f32 %v3703, 1.442695
        %v3736 = vpow.pop %v3735
        %v3737 = vmul.f32 %v3704, 1.442695
        %v3738 = vpow.pop %v3737
        %v3739 = vmul.f32 %v3705, 1.442695
        %v3740 = vpow.pop %v3739
        %v3741 = vmul.f32 %v3706, 1.442695
        %v3742 = vpow.pop %v3741
        %v3743 = vmul.f32 %v3707, 1.442695
        %v3744 = vpow.pop %v3743
        %v3745 = vmul.f32 %v3708, 1.442695
        %v3746 = vpow.pop %v3745
        %v3747 = vmul.f32 %v3709, 1.442695
        %v3748 = vpow.pop %v3747
        %v3749 = vmul.f32 %v3710, 1.442695
        %v3750 = vpow.pop %v3749
        %v3751 = vmul.f32 %v3711, 1.442695
        %v3752 = vpow.pop %v3751
        %v3753 = vmul.f32 %v3712, 1.442695
        %v3754 = vpow.pop %v3753
        %v3755 = vmul.f32 %v3713, 1.442695
        %v3756 = vpow.pop %v3755
        %v3757 = vmul.f32 %v3714, 1.442695
        %v3758 = vpow.pop %v3757
        %v3759 = vmul.f32 %v3715, 1.442695
        %v3760 = vpow.pop %v3759
        %v3761 = vmul.f32 %v3716, 1.442695
        %v3762 = vpow.pop %v3761
        %v3763 = vmul.f32 %v3717, 1.442695
        %v3764 = vpow.pop %v3763
        %v3765 = vmul.f32 %v3718, 1.442695
        %v3766 = vpow.pop %v3765
        %v3767 = vmul.f32 %v3719, 1.442695
        %v3768 = vpow.pop %v3767
        %v3769 = vmul.f32 %v3720, 1.442695
        %v3770 = vpow.pop %v3769
        %v3771 = vmul.f32 %v3721, 1.442695
        %v3772 = vpow.pop %v3771
        %v3773 = vmul.f32 %v3722, 1.442695
        %v3774 = vpow.pop %v3773
        %v3775 = vmul.f32 %v3723, 1.442695
        %v3776 = vpow.pop %v3775
        %v3777 = vmul.f32 %v3724, 1.442695
        %v3778 = vpow.pop %v3777
        %v3779 = vmul.f32 %v3725, 1.442695
        %v3780 = vpow.pop %v3779
        %v3781 = vmul.f32 %v3726, 1.442695
        %v3782 = vpow.pop %v3781
        %v3783 = vmul.f32 %v3727, 1.442695
        %v3784 = vpow.pop %v3783
        %v3785 = vmul.f32 %v3728, 1.442695
        %v3786 = vpow.pop %v3785
        %v3787 = vmul.f32 %v3729, 1.442695
        %v3788 = vpow.pop %v3787
        %v3789 = vmul.f32 %v3730, 1.442695
        %v3790 = vpow.pop %v3789
        %v3791 = vmul.f32 %v3731, 1.442695
        %v3792 = vpow.pop %v3791
        %v3793 = vmul.f32 %v3732, 1.442695
        %v3794 = vpow.pop %v3793
        %v3795 = vmul.f32 %v3733, 1.442695
        %v3796 = vpow.pop %v3795
        %v3797 = vmul.f32 %v3734, 1.442695
        %v3798 = vpow.pop %v3797
        %v3799 = vadd.f32 %v3736, %v3738
        %3800 = vadd.xlane.f32.xlu0 %v3799
        %v3801 = vpop.xlane.xlu0 %3800
        %v3802 = vadd.f32 %v3740, %v3742
        %3803 = vadd.xlane.f32.xlu0 %v3802
        %v3804 = vpop.xlane.xlu0 %3803
        %v3805 = vadd.f32 %v3744, %v3746
        %3806 = vadd.xlane.f32.xlu0 %v3805
        %v3807 = vpop.xlane.xlu0 %3806
        %v3808 = vadd.f32 %v3748, %v3750
        %3809 = vadd.xlane.f32.xlu0 %v3808
        %v3810 = vpop.xlane.xlu0 %3809
        %v3811 = vadd.f32 %v3752, %v3754
        %3812 = vadd.xlane.f32.xlu0 %v3811
        %v3813 = vpop.xlane.xlu0 %3812
        %v3814 = vadd.f32 %v3756, %v3758
        %3815 = vadd.xlane.f32.xlu0 %v3814
        %v3816 = vpop.xlane.xlu0 %3815
        %v3817 = vadd.f32 %v3760, %v3762
        %3818 = vadd.xlane.f32.xlu0 %v3817
        %v3819 = vpop.xlane.xlu0 %3818
        %v3820 = vadd.f32 %v3764, %v3766
        %3821 = vadd.xlane.f32.xlu0 %v3820
        %v3822 = vpop.xlane.xlu0 %3821
        %v3823 = vadd.f32 %v3768, %v3770
        %3824 = vadd.xlane.f32.xlu0 %v3823
        %v3825 = vpop.xlane.xlu0 %3824
        %v3826 = vadd.f32 %v3772, %v3774
        %3827 = vadd.xlane.f32.xlu0 %v3826
        %v3828 = vpop.xlane.xlu0 %3827
        %v3829 = vadd.f32 %v3776, %v3778
        %3830 = vadd.xlane.f32.xlu0 %v3829
        %v3831 = vpop.xlane.xlu0 %3830
        %v3832 = vadd.f32 %v3780, %v3782
        %3833 = vadd.xlane.f32.xlu0 %v3832
        %v3834 = vpop.xlane.xlu0 %3833
        %v3835 = vadd.f32 %v3784, %v3786
        %3836 = vadd.xlane.f32.xlu0 %v3835
        %v3837 = vpop.xlane.xlu0 %3836
        %v3838 = vadd.f32 %v3788, %v3790
        %3839 = vadd.xlane.f32.xlu0 %v3838
        %v3840 = vpop.xlane.xlu0 %3839
        %v3841 = vadd.f32 %v3792, %v3794
        %3842 = vadd.xlane.f32.xlu0 %v3841
        %v3843 = vpop.xlane.xlu0 %3842
        %v3844 = vadd.f32 %v3796, %v3798
        %3845 = vadd.xlane.f32.xlu0 %v3844
        %v3846 = vpop.xlane.xlu0 %3845
        %v3847 = vrcp.pop %v3801
        %v3848 = vmul.f32 %v3736, %v3847
        %v3849 = vmul.f32 %v3738, %v3847
        %v3850 = vrcp.pop %v3804
        %v3851 = vmul.f32 %v3740, %v3850
        %v3852 = vmul.f32 %v3742, %v3850
        %v3853 = vrcp.pop %v3807
        %v3854 = vmul.f32 %v3744, %v3853
        %v3855 = vmul.f32 %v3746, %v3853
        %v3856 = vrcp.pop %v3810
        %v3857 = vmul.f32 %v3748, %v3856
        %v3858 = vmul.f32 %v3750, %v3856
        %v3859 = vrcp.pop %v3813
        %v3860 = vmul.f32 %v3752, %v3859
        %v3861 = vmul.f32 %v3754, %v3859
        %v3862 = vrcp.pop %v3816
        %v3863 = vmul.f32 %v3756, %v3862
        %v3864 = vmul.f32 %v3758, %v3862
        %v3865 = vrcp.pop %v3819
        %v3866 = vmul.f32 %v3760, %v3865
        %v3867 = vmul.f32 %v3762, %v3865
        %v3868 = vrcp.pop %v3822
        %v3869 = vmul.f32 %v3764, %v3868
        %v3870 = vmul.f32 %v3766, %v3868
        %v3871 = vrcp.pop %v3825
        %v3872 = vmul.f32 %v3768, %v3871
        %v3873 = vmul.f32 %v3770, %v3871
        %v3874 = vrcp.pop %v3828
        %v3875 = vmul.f32 %v3772, %v3874
        %v3876 = vmul.f32 %v3774, %v3874
        %v3877 = vrcp.pop %v3831
        %v3878 = vmul.f32 %v3776, %v3877
        %v3879 = vmul.f32 %v3778, %v3877
        %v3880 = vrcp.pop %v3834
        %v3881 = vmul.f32 %v3780, %v3880
        %v3882 = vmul.f32 %v3782, %v3880
        %v3883 = vrcp.pop %v3837
        %v3884 = vmul.f32 %v3784, %v3883
        %v3885 = vmul.f32 %v3786, %v3883
        %v3886 = vrcp.pop %v3840
        %v3887 = vmul.f32 %v3788, %v3886
        %v3888 = vmul.f32 %v3790, %v3886
        %v3889 = vrcp.pop %v3843
        %v3890 = vmul.f32 %v3792, %v3889
        %v3891 = vmul.f32 %v3794, %v3889
        %v3892 = vrcp.pop %v3846
        %v3893 = vmul.f32 %v3796, %v3892
        %v3894 = vmul.f32 %v3798, %v3892
        %v3895 = vpack.c.bf16 %v3851, %v3848
        %v3896 = vpack.c.bf16 %v3852, %v3849
        %v3897 = vpack.c.bf16 %v3857, %v3854
        %v3898 = vpack.c.bf16 %v3858, %v3855
        %v3899 = vpack.c.bf16 %v3863, %v3860
        %v3900 = vpack.c.bf16 %v3864, %v3861
        %v3901 = vpack.c.bf16 %v3869, %v3866
        %v3902 = vpack.c.bf16 %v3870, %v3867
        %v3903 = vpack.c.bf16 %v3875, %v3872
        %v3904 = vpack.c.bf16 %v3876, %v3873
        %v3905 = vpack.c.bf16 %v3881, %v3878
        %v3906 = vpack.c.bf16 %v3882, %v3879
        %v3907 = vpack.c.bf16 %v3887, %v3884
        %v3908 = vpack.c.bf16 %v3888, %v3885
        %v3909 = vpack.c.bf16 %v3893, %v3890
        %v3910 = vpack.c.bf16 %v3894, %v3891
        %s3911 = scalar_lea.vmem %s2, 128
        %v3912 = vld [vmem:[%s3911] sm:$0xf]
        %v3913 = vld [vmem:[%s3911 + $0x4] sm:$0xf]
        %v3914 = vld [vmem:[%s3911 + $0x8] sm:$0xf]
        %v3915 = vld [vmem:[%s3911 + $0xc] sm:$0xf]
        %v3916 = vld [vmem:[%s3911 + $0x10] sm:$0xf]
        %v3917 = vld [vmem:[%s3911 + $0x14] sm:$0xf]
        %v3918 = vld [vmem:[%s3911 + $0x18] sm:$0xf]
        %v3919 = vld [vmem:[%s3911 + $0x1c] sm:$0xf]
        %v3920 = vld [vmem:[%s3911 + $0x20] sm:$0xf]
        %v3921 = vld [vmem:[%s3911 + $0x24] sm:$0xf]
        %v3922 = vld [vmem:[%s3911 + $0x28] sm:$0xf]
        %v3923 = vld [vmem:[%s3911 + $0x2c] sm:$0xf]
        %v3924 = vld [vmem:[%s3911 + $0x30] sm:$0xf]
        %v3925 = vld [vmem:[%s3911 + $0x34] sm:$0xf]
        %v3926 = vld [vmem:[%s3911 + $0x38] sm:$0xf]
        %v3927 = vld [vmem:[%s3911 + $0x3c] sm:$0xf]
        %v3928 = vld [vmem:[%s3911 + $0x40] sm:$0xf]
        %v3929 = vld [vmem:[%s3911 + $0x44] sm:$0xf]
        %v3930 = vld [vmem:[%s3911 + $0x48] sm:$0xf]
        %v3931 = vld [vmem:[%s3911 + $0x4c] sm:$0xf]
        %v3932 = vld [vmem:[%s3911 + $0x50] sm:$0xf]
        %v3933 = vld [vmem:[%s3911 + $0x54] sm:$0xf]
        %v3934 = vld [vmem:[%s3911 + $0x58] sm:$0xf]
        %v3935 = vld [vmem:[%s3911 + $0x5c] sm:$0xf]
        %v3936 = vld [vmem:[%s3911 + $0x60] sm:$0xf]
        %v3937 = vld [vmem:[%s3911 + $0x64] sm:$0xf]
        %v3938 = vld [vmem:[%s3911 + $0x68] sm:$0xf]
        %v3939 = vld [vmem:[%s3911 + $0x6c] sm:$0xf]
        %v3940 = vld [vmem:[%s3911 + $0x70] sm:$0xf]
        %v3941 = vld [vmem:[%s3911 + $0x74] sm:$0xf]
        %v3942 = vld [vmem:[%s3911 + $0x78] sm:$0xf]
        %v3943 = vld [vmem:[%s3911 + $0x7c] sm:$0xf]
        %v3976 = vunpack.c.l.b16 %v3912
        %v3977 = vunpack.c.l.b16 %v3913
        %v3978 = vunpack.c.l.b16 %v3914
        %v3979 = vunpack.c.l.b16 %v3915
        %v3980 = vunpack.c.l.b16 %v3916
        %v3981 = vunpack.c.l.b16 %v3917
        %v3982 = vunpack.c.l.b16 %v3918
        %v3983 = vunpack.c.l.b16 %v3919
        %v3984 = vunpack.c.l.b16 %v3920
        %v3985 = vunpack.c.l.b16 %v3921
        %v3986 = vunpack.c.l.b16 %v3922
        %v3987 = vunpack.c.l.b16 %v3923
        %v3988 = vunpack.c.l.b16 %v3924
        %v3989 = vunpack.c.l.b16 %v3925
        %v3990 = vunpack.c.l.b16 %v3926
        %v3991 = vunpack.c.l.b16 %v3927
        %v3992 = vunpack.c.l.b16 %v3928
        %v3993 = vunpack.c.l.b16 %v3929
        %v3994 = vunpack.c.l.b16 %v3930
        %v3995 = vunpack.c.l.b16 %v3931
        %v3996 = vunpack.c.l.b16 %v3932
        %v3997 = vunpack.c.l.b16 %v3933
        %v3998 = vunpack.c.l.b16 %v3934
        %v3999 = vunpack.c.l.b16 %v3935
        %v4000 = vunpack.c.l.b16 %v3936
        %v4001 = vunpack.c.l.b16 %v3937
        %v4002 = vunpack.c.l.b16 %v3938
        %v4003 = vunpack.c.l.b16 %v3939
        %v4004 = vunpack.c.l.b16 %v3940
        %v4005 = vunpack.c.l.b16 %v3941
        %v4006 = vunpack.c.l.b16 %v3942
        %v4007 = vunpack.c.l.b16 %v3943
        %v4008 = vpack.c.b16 %v3977, %v3976
        %v4009 = vpack.c.b16 %v3979, %v3978
        %v4010 = vpack.c.b16 %v3981, %v3980
        %v4011 = vpack.c.b16 %v3983, %v3982
        %v4012 = vpack.c.b16 %v3985, %v3984
        %v4013 = vpack.c.b16 %v3987, %v3986
        %v4014 = vpack.c.b16 %v3989, %v3988
        %v4015 = vpack.c.b16 %v3991, %v3990
        %v4016 = vpack.c.b16 %v3993, %v3992
        %v4017 = vpack.c.b16 %v3995, %v3994
        %v4018 = vpack.c.b16 %v3997, %v3996
        %v4019 = vpack.c.b16 %v3999, %v3998
        %v4020 = vpack.c.b16 %v4001, %v4000
        %v4021 = vpack.c.b16 %v4003, %v4002
        %v4022 = vpack.c.b16 %v4005, %v4004
        %v4023 = vpack.c.b16 %v4007, %v4006
        %4040 = vmatprep.subr.bf16.mxu0 0
        %4041 = vmatpush1.bf16.msra.mxu0 %v4008
        %4042 = vmatprep.subr.bf16.mxu0 0
        %4043 = vmatpush1.bf16.msra.mxu0 %v4009
        %4044 = vmatprep.subr.bf16.mxu0 0
        %4045 = vmatpush1.bf16.msra.mxu0 %v4010
        %4046 = vmatprep.subr.bf16.mxu0 0
        %4047 = vmatpush1.bf16.msra.mxu0 %v4011
        %4048 = vmatprep.subr.bf16.mxu0 0
        %4049 = vmatpush1.bf16.msra.mxu0 %v4012
        %4050 = vmatprep.subr.bf16.mxu0 0
        %4051 = vmatpush1.bf16.msra.mxu0 %v4013
        %4052 = vmatprep.subr.bf16.mxu0 0
        %4053 = vmatpush1.bf16.msra.mxu0 %v4014
        %4054 = vmatprep.subr.bf16.mxu0 0
        %4055 = vmatpush1.bf16.msra.mxu0 %v4015
        %4056 = vmatprep.subr.bf16.mxu0 0
        %4057 = vmatpush1.bf16.msra.mxu0 %v4016
        %4058 = vmatprep.subr.bf16.mxu0 0
        %4059 = vmatpush1.bf16.msra.mxu0 %v4017
        %4060 = vmatprep.subr.bf16.mxu0 0
        %4061 = vmatpush1.bf16.msra.mxu0 %v4018
        %4062 = vmatprep.subr.bf16.mxu0 0
        %4063 = vmatpush1.bf16.msra.mxu0 %v4019
        %4064 = vmatprep.subr.bf16.mxu0 0
        %4065 = vmatpush1.bf16.msra.mxu0 %v4020
        %4066 = vmatprep.subr.bf16.mxu0 0
        %4067 = vmatpush1.bf16.msra.mxu0 %v4021
        %4068 = vmatprep.subr.bf16.mxu0 0
        %4069 = vmatpush1.bf16.msra.mxu0 %v4022
        %4070 = vmatprep.subr.bf16.mxu0 0
        %4071 = vmatpush1.bf16.msra.mxu0 %v4023
        %4072 = vmatprep.mubr.bf16.mxu0 %v3896
        %4073 = vmatmul.mubr.bf16.gmra.mrb[0].mxu0 %v3895
        %v4074 = vpop.f32.mrb[0].mxu0
        %v4075 = vadd.f32 0.0, %v4074
        %v4076 = vpop.f32.mrb[0].mxu0
        %v4077 = vpop.f32.mrb[0].mxu0
        %v4078 = vadd.f32 0.0, %v4077
        %v4079 = vpop.f32.mrb[0].mxu0
        %4080 = vmatprep.mubr.bf16.mxu0 %v3898
        %4081 = vmatmul.mubr.bf16.gmra.mrb[0].mxu0 %v3897
        %v4082 = vpop.f32.mrb[0].mxu0
        %v4083 = vadd.f32 0.0, %v4082
        %v4084 = vpop.f32.mrb[0].mxu0
        %v4085 = vpop.f32.mrb[0].mxu0
        %v4086 = vadd.f32 0.0, %v4085
        %v4087 = vpop.f32.mrb[0].mxu0
        %4088 = vmatprep.mubr.bf16.mxu0 %v3900
        %4089 = vmatmul.mubr.bf16.gmra.mrb[0].mxu0 %v3899
        %v4090 = vpop.f32.mrb[0].mxu0
        %v4091 = vadd.f32 0.0, %v4090
        %v4092 = vpop.f32.mrb[0].mxu0
        %v4093 = vpop.f32.mrb[0].mxu0
        %v4094 = vadd.f32 0.0, %v4093
        %v4095 = vpop.f32.mrb[0].mxu0
        %4096 = vmatprep.mubr.bf16.mxu0 %v3902
        %4097 = vmatmul.mubr.bf16.gmra.mrb[0].mxu0 %v3901
        %v4098 = vpop.f32.mrb[0].mxu0
        %v4099 = vadd.f32 0.0, %v4098
        %v4100 = vpop.f32.mrb[0].mxu0
        %v4101 = vpop.f32.mrb[0].mxu0
        %v4102 = vadd.f32 0.0, %v4101
        %v4103 = vpop.f32.mrb[0].mxu0
        %4104 = vmatprep.mubr.bf16.mxu0 %v3904
        %4105 = vmatmul.mubr.bf16.gmra.mrb[0].mxu0 %v3903
        %v4106 = vpop.f32.mrb[0].mxu0
        %v4107 = vadd.f32 0.0, %v4106
        %v4108 = vpop.f32.mrb[0].mxu0
        %v4109 = vpop.f32.mrb[0].mxu0
        %v4110 = vadd.f32 0.0, %v4109
        %v4111 = vpop.f32.mrb[0].mxu0
        %4112 = vmatprep.mubr.bf16.mxu0 %v3906
        %4113 = vmatmul.mubr.bf16.gmra.mrb[0].mxu0 %v3905
        %v4114 = vpop.f32.mrb[0].mxu0
        %v4115 = vadd.f32 0.0, %v4114
        %v4116 = vpop.f32.mrb[0].mxu0
        %v4117 = vpop.f32.mrb[0].mxu0
        %v4118 = vadd.f32 0.0, %v4117
        %v4119 = vpop.f32.mrb[0].mxu0
        %4120 = vmatprep.mubr.bf16.mxu0 %v3908
        %4121 = vmatmul.mubr.bf16.gmra.mrb[0].mxu0 %v3907
        %v4122 = vpop.f32.mrb[0].mxu0
        %v4123 = vadd.f32 0.0, %v4122
        %v4124 = vpop.f32.mrb[0].mxu0
        %v4125 = vpop.f32.mrb[0].mxu0
        %v4126 = vadd.f32 0.0, %v4125
        %v4127 = vpop.f32.mrb[0].mxu0
        %4128 = vmatprep.mubr.bf16.mxu0 %v3910
        %4129 = vmatmul.mubr.bf16.gmra.mrb[0].mxu0 %v3909
        %v4130 = vpop.f32.mrb[0].mxu0
        %v4131 = vadd.f32 0.0, %v4130
        %v4132 = vpop.f32.mrb[0].mxu0
        %v4133 = vpop.f32.mrb[0].mxu0
        %v4134 = vadd.f32 0.0, %v4133
        %v4135 = vpop.f32.mrb[0].mxu0
        %4136 = vdwg.mxu0
        %4137 = vset.pattern.permute.xlu0 1
        %4138 = vperm.xlu0 %4137, %v2546
        %v4139 = vpop.permute.xlu0 %4138
        %4141 = vset.pattern.permute.xlu0 1
        %4142 = vperm.xlu0 %4141, %v2548
        %v4143 = vpop.permute.xlu0 %4142
        %4145 = vset.pattern.permute.xlu0 1
        %4146 = vperm.xlu0 %4145, %v2550
        %v4147 = vpop.permute.xlu0 %4146
        %4149 = vset.pattern.permute.xlu0 1
        %4150 = vperm.xlu0 %4149, %v2552
        %v4151 = vpop.permute.xlu0 %4150
        %4153 = vset.pattern.permute.xlu0 1
        %4154 = vperm.xlu0 %4153, %v2554
        %v4155 = vpop.permute.xlu0 %4154
        %4157 = vset.pattern.permute.xlu0 1
        %4158 = vperm.xlu0 %4157, %v2556
        %v4159 = vpop.permute.xlu0 %4158
        %4161 = vset.pattern.permute.xlu0 1
        %4162 = vperm.xlu0 %4161, %v2558
        %v4163 = vpop.permute.xlu0 %4162
        %4165 = vset.pattern.permute.xlu0 1
        %4166 = vperm.xlu0 %4165, %v2560
        %v4167 = vpop.permute.xlu0 %4166
        %4169 = vset.pattern.permute.xlu0 1
        %4170 = vperm.xlu0 %4169, %v2562
        %v4171 = vpop.permute.xlu0 %4170
        %4173 = vset.pattern.permute.xlu0 1
        %4174 = vperm.xlu0 %4173, %v2564
        %v4175 = vpop.permute.xlu0 %4174
        %4177 = vset.pattern.permute.xlu0 1
        %4178 = vperm.xlu0 %4177, %v2566
        %v4179 = vpop.permute.xlu0 %4178
        %4181 = vset.pattern.permute.xlu0 1
        %4182 = vperm.xlu0 %4181, %v2568
        %v4183 = vpop.permute.xlu0 %4182
        %4185 = vset.pattern.permute.xlu0 1
        %4186 = vperm.xlu0 %4185, %v2570
        %v4187 = vpop.permute.xlu0 %4186
        %4189 = vset.pattern.permute.xlu0 1
        %4190 = vperm.xlu0 %4189, %v2572
        %v4191 = vpop.permute.xlu0 %4190
        %4193 = vset.pattern.permute.xlu0 1
        %4194 = vperm.xlu0 %4193, %v2574
        %v4195 = vpop.permute.xlu0 %4194
        %4197 = vset.pattern.permute.xlu0 1
        %4198 = vperm.xlu0 %4197, %v2576
        %v4199 = vpop.permute.xlu0 %4198
        %v4201 = vmul.f32 %v4139, %v4075
        %v4202 = vmul.f32 %v4143, %v4078
        %v4203 = vmul.f32 %v4147, %v4083
        %v4204 = vmul.f32 %v4151, %v4086
        %v4205 = vmul.f32 %v4155, %v4091
        %v4206 = vmul.f32 %v4159, %v4094
        %v4207 = vmul.f32 %v4163, %v4099
        %v4208 = vmul.f32 %v4167, %v4102
        %v4209 = vmul.f32 %v4171, %v4107
        %v4210 = vmul.f32 %v4175, %v4110
        %v4211 = vmul.f32 %v4179, %v4115
        %v4212 = vmul.f32 %v4183, %v4118
        %v4213 = vmul.f32 %v4187, %v4123
        %v4214 = vmul.f32 %v4191, %v4126
        %v4215 = vmul.f32 %v4195, %v4131
        %v4216 = vmul.f32 %v4199, %v4134
        %v4217 = vld [vmem:[%s494] sm:$0xff]
        %v4218 = vld [vmem:[%s494 + $0x8] sm:$0xff]
        %v4219 = vld [vmem:[%s494 + $0x10] sm:$0xff]
        %v4220 = vld [vmem:[%s494 + $0x18] sm:$0xff]
        %v4221 = vld [vmem:[%s494 + $0x20] sm:$0xff]
        %v4222 = vld [vmem:[%s494 + $0x28] sm:$0xff]
        %v4223 = vld [vmem:[%s494 + $0x30] sm:$0xff]
        %v4224 = vld [vmem:[%s494 + $0x38] sm:$0xff]
        %v4225 = vld [vmem:[%s494 + $0x40] sm:$0xff]
        %v4226 = vld [vmem:[%s494 + $0x48] sm:$0xff]
        %v4227 = vld [vmem:[%s494 + $0x50] sm:$0xff]
        %v4228 = vld [vmem:[%s494 + $0x58] sm:$0xff]
        %v4229 = vld [vmem:[%s494 + $0x60] sm:$0xff]
        %v4230 = vld [vmem:[%s494 + $0x68] sm:$0xff]
        %v4231 = vld [vmem:[%s494 + $0x70] sm:$0xff]
        %v4232 = vld [vmem:[%s494 + $0x78] sm:$0xff]
        %4249 = vrot.lane.b32.xlu0 %v4201, 32
        %v4250 = vpop.permute.xlu0 %4249
        %4251 = vrot.lane.b32.xlu0 %v4202, 32
        %v4252 = vpop.permute.xlu0 %4251
        %4253 = vrot.lane.b32.xlu0 %v4203, 32
        %v4254 = vpop.permute.xlu0 %4253
        %4255 = vrot.lane.b32.xlu0 %v4204, 32
        %v4256 = vpop.permute.xlu0 %4255
        %4257 = vrot.lane.b32.xlu0 %v4205, 32
        %v4258 = vpop.permute.xlu0 %4257
        %4259 = vrot.lane.b32.xlu0 %v4206, 32
        %v4260 = vpop.permute.xlu0 %4259
        %4261 = vrot.lane.b32.xlu0 %v4207, 32
        %v4262 = vpop.permute.xlu0 %4261
        %4263 = vrot.lane.b32.xlu0 %v4208, 32
        %v4264 = vpop.permute.xlu0 %4263
        %4265 = vrot.lane.b32.xlu0 %v4209, 32
        %v4266 = vpop.permute.xlu0 %4265
        %4267 = vrot.lane.b32.xlu0 %v4210, 32
        %v4268 = vpop.permute.xlu0 %4267
        %4269 = vrot.lane.b32.xlu0 %v4211, 32
        %v4270 = vpop.permute.xlu0 %4269
        %4271 = vrot.lane.b32.xlu0 %v4212, 32
        %v4272 = vpop.permute.xlu0 %4271
        %4273 = vrot.lane.b32.xlu0 %v4213, 32
        %v4274 = vpop.permute.xlu0 %4273
        %4275 = vrot.lane.b32.xlu0 %v4214, 32
        %v4276 = vpop.permute.xlu0 %4275
        %4277 = vrot.lane.b32.xlu0 %v4215, 32
        %v4278 = vpop.permute.xlu0 %4277
        %4279 = vrot.lane.b32.xlu0 %v4216, 32
        %v4280 = vpop.permute.xlu0 %4279
        %v4297 = vsel %vm2010, %v3397, %v4250
        %v4298 = vsel %vm2010, %v3398, %v4252
        %v4299 = vsel %vm2010, %v3399, %v4254
        %v4300 = vsel %vm2010, %v3400, %v4256
        %v4301 = vsel %vm2010, %v3401, %v4258
        %v4302 = vsel %vm2010, %v3402, %v4260
        %v4303 = vsel %vm2010, %v3403, %v4262
        %v4304 = vsel %vm2010, %v3404, %v4264
        %v4305 = vsel %vm2010, %v3405, %v4266
        %v4306 = vsel %vm2010, %v3406, %v4268
        %v4307 = vsel %vm2010, %v3407, %v4270
        %v4308 = vsel %vm2010, %v3408, %v4272
        %v4309 = vsel %vm2010, %v3409, %v4274
        %v4310 = vsel %vm2010, %v3410, %v4276
        %v4311 = vsel %vm2010, %v3411, %v4278
        %v4312 = vsel %vm2010, %v3412, %v4280
        %v4313 = vadd.f32 %v4217, %v4297
        %v4314 = vadd.f32 %v4218, %v4298
        %v4315 = vadd.f32 %v4219, %v4299
        %v4316 = vadd.f32 %v4220, %v4300
        %v4317 = vadd.f32 %v4221, %v4301
        %v4318 = vadd.f32 %v4222, %v4302
        %v4319 = vadd.f32 %v4223, %v4303
        %v4320 = vadd.f32 %v4224, %v4304
        %v4321 = vadd.f32 %v4225, %v4305
        %v4322 = vadd.f32 %v4226, %v4306
        %v4323 = vadd.f32 %v4227, %v4307
        %v4324 = vadd.f32 %v4228, %v4308
        %v4325 = vadd.f32 %v4229, %v4309
        %v4326 = vadd.f32 %v4230, %v4310
        %v4327 = vadd.f32 %v4231, %v4311
        %v4328 = vadd.f32 %v4232, %v4312
        %vm4329 = vcmask 523264
        %4330 = vst.msk [vmem:[%s512] sm:$0xff] %vm4329, %v4313
        %4331 = vst.msk [vmem:[%s512 + $0x8] sm:$0xff] %vm4329, %v4314
        %4332 = vst.msk [vmem:[%s512 + $0x10] sm:$0xff] %vm4329, %v4315
        %4333 = vst.msk [vmem:[%s512 + $0x18] sm:$0xff] %vm4329, %v4316
        %4334 = vst.msk [vmem:[%s512 + $0x20] sm:$0xff] %vm4329, %v4317
        %4335 = vst.msk [vmem:[%s512 + $0x28] sm:$0xff] %vm4329, %v4318
        %4336 = vst.msk [vmem:[%s512 + $0x30] sm:$0xff] %vm4329, %v4319
        %4337 = vst.msk [vmem:[%s512 + $0x38] sm:$0xff] %vm4329, %v4320
        %4338 = vst.msk [vmem:[%s512 + $0x40] sm:$0xff] %vm4329, %v4321
        %4339 = vst.msk [vmem:[%s512 + $0x48] sm:$0xff] %vm4329, %v4322
        %4340 = vst.msk [vmem:[%s512 + $0x50] sm:$0xff] %vm4329, %v4323
        %4341 = vst.msk [vmem:[%s512 + $0x58] sm:$0xff] %vm4329, %v4324
        %4342 = vst.msk [vmem:[%s512 + $0x60] sm:$0xff] %vm4329, %v4325
        %4343 = vst.msk [vmem:[%s512 + $0x68] sm:$0xff] %vm4329, %v4326
        %4344 = vst.msk [vmem:[%s512 + $0x70] sm:$0xff] %vm4329, %v4327
        %4345 = vst.msk [vmem:[%s512 + $0x78] sm:$0xff] %vm4329, %v4328
        %s4346 = smul.u32 16, %s21
        %p4347 = scmp.lt.s32.totalorder %s4346, 31
        %s4348 = scalar_select %p4347, %s4346, 31
        %s4349 = smul.addr %s4348, 8
        %s4350 = scalar_lea.vmem %s10, %s4349
        // Predicated region
        $region106: #{tpu_custom_call.1} parent=93 // pred_check
          %p4351 = pneg %p274
        $region107: #{tpu_custom_call.1} parent=93 // pred_check_branch
          %4353 = sbr.rel (%p4351) target = $region109
        $region108: #{tpu_custom_call.1} parent=93 // pred_region
          %s4354 = smul.u32 16, %s21
        $region109: #{tpu_custom_call.1} parent=93 // pred_fallthru
          _
      $region94: #{tpu_custom_call.1} parent=5 // pred_fallthru
        _
      %p4355 = scmp.le.s32.totalorder 2, %s16
      // Predicated region
      $region110: #{tpu_custom_call.1} parent=5 // pred_check
        %p4356 = pneg %p4355
      $region111: #{tpu_custom_call.1} parent=5 // pred_check_branch
        %4358 = sbr.rel (%p4356) target = $region113
      $region112: #{tpu_custom_call.1} parent=5 // pred_region
        %s4359 = ssub.s32 %s16, 2
        // Predicated region
        $region114: #{tpu_custom_call.1} parent=112 // pred_check
          %p4360 = pneg %p280
        $region115: #{tpu_custom_call.1} parent=112 // pred_check_branch
          %4362 = sbr.rel (%p4360) target = $region117
        $region116: #{tpu_custom_call.1} parent=112 // pred_region
          %s4363 = smul.u32 16, %s22
          %p4364 = scmp.lt.s32.totalorder %s4363, 31
          %s4365 = scalar_select %p4364, %s4363, 31
          %s4366 = smul.addr %s4365, 8
          %s4367 = scalar_lea.vmem %s10, %s4366
        $region117: #{tpu_custom_call.1} parent=112 // pred_fallthru
          _
      $region113: #{tpu_custom_call.1} parent=5 // pred_fallthru
        _
    $region6: #{tpu_custom_call.1} parent=1 // loop_footer
      %s20 = sadd.s32 1, %s16
    $region7: #{tpu_custom_call.1} parent=1 // loop_footer_branch
      %15 = sbr.rel target = $region3
    $region8: #{tpu_custom_call.1} parent=1 // loop_exit
      _

</llo_original>
